<compile_context>
chip_gen: v6e
topology: v6e:2x2x1
jax: 0.10.0
libtpu: 0.0.40
codegen_flags: <defaults>
</compile_context>

<pallas_src>
import math
import jax
import jax.numpy as jnp
from jax import lax
from jax.experimental import pallas as pl
from jax.experimental.pallas import tpu as pltpu

# ---------------- config (stand-in for `args`) ----------------
SAMPLE_RATE = 16000
N_MFCC = 20          # args.nmfcc  -> initial in_planes
N_MELS = 40          # args.nmels
N_FFT = 2048
WIN_LENGTH = 512
HOP_LENGTH = 256
NUM_BLOCKS = [3, 3, 2, 2]
K_WIDTH = 1
PLANES = [int(24 * K_WIDTH), int(32 * K_WIDTH), int(48 * K_WIDTH), int(60 * K_WIDTH)]
LAYER_STRIDES = [1, 2, 2, 2]
BN_EPS = 1e-5
TOP_DB = 80.0
N_FREQS = N_FFT // 2 + 1          # 1025
F_PAD = 1152                      # next multiple of 128 >= 1025


def _build_block_config():
    cfg = []
    in_planes = N_MFCC
    for planes, nb, first_stride in zip(PLANES, NUM_BLOCKS, LAYER_STRIDES):
        for s in [first_stride] + [1] * (nb - 1):
            cfg.append(dict(stride=s, c_in=in_planes, c_out=planes))
            in_planes = planes
    return cfg


BLOCK_CONFIG = _build_block_config()     # 10 blocks, static python ints only


# ======================================================================
# Packed weight slab layout (static, shape-independent of the input)
# ======================================================================
SLAB_COLS = 128


def _slab_layout():
    layout, row = {}, 0

    def add(name, rows, cols):
        nonlocal row
        layout[name] = (row, rows, cols)
        row += -(-rows // 8) * 8           # 8-aligned row offsets -> aligned loads

    add("mel_fb", F_PAD, N_MELS)
    add("dct", N_MELS, N_MFCC)
    for i, cfg in enumerate(BLOCK_CONFIG):
        ci, co = cfg["c_in"], cfg["c_out"]
        add(f"b{i}_w1", 3 * ci, co)        # tap-major, BN1-folded
        add(f"b{i}_b1", 1, co)
        add(f"b{i}_w2", 3 * co, co)        # tap-major, BN2-folded
        add(f"b{i}_b2", 1, co)
    feat = PLANES[-1]
    add("head_w1", feat, feat)
    add("head_b1", 1, feat)
    add("head_w2", feat, 2)
    add("head_b2", 1, 2)
    return layout, row


SLAB_LAYOUT, SLAB_ROWS = _slab_layout()


# ======================================================================
# MFCC front-end (plain JAX glue: framing + window + rfft -> power spec)
# ======================================================================
def _hann_window(win_length):
    n = jnp.arange(win_length, dtype=jnp.float32)
    return 0.5 - 0.5 * jnp.cos(2.0 * math.pi * n / win_length)   # periodic Hann


def stft_power(x):
    # x: (N, L_wave) -> (N, T, F) power spectrogram (torch.stft semantics,
    # center=True, reflect pad, window zero-padded to n_fft, power=2.0).
    pad = N_FFT // 2
    xp = jnp.pad(x, ((0, 0), (pad, pad)), mode="reflect")
    n_frames = 1 + (xp.shape[1] - N_FFT) // HOP_LENGTH
    idx = jnp.arange(n_frames)[:, None] * HOP_LENGTH + jnp.arange(N_FFT)[None, :]
    frames = xp[:, idx]                                           # (N, T, N_FFT)
    win = _hann_window(WIN_LENGTH)
    lpad = (N_FFT - WIN_LENGTH) // 2
    win = jnp.pad(win, (lpad, N_FFT - WIN_LENGTH - lpad))
    frames = frames * win[None, None, :]
    # TODO(synk): FFT stays in plain JAX (no Pallas FFT primitive).
    spec = jnp.fft.rfft(frames, n=N_FFT, axis=-1)
    power = (spec.real ** 2 + spec.imag ** 2).astype(jnp.float32)  # (N, T, F)
    return power


def mel_filterbank_fm(n_freqs, n_mels, sample_rate):
    # torchaudio melscale_fbanks (HTK mel scale, norm=None), shape (F, n_mels)
    f_min, f_max = 0.0, sample_rate / 2.0
    all_freqs = jnp.linspace(0.0, sample_rate / 2.0, n_freqs)

    def hz_to_mel(f):
        return 2595.0 * jnp.log10(1.0 + f / 700.0)

    def mel_to_hz(m):
        return 700.0 * (10.0 ** (m / 2595.0) - 1.0)

    m_pts = jnp.linspace(hz_to_mel(jnp.float32(f_min)), hz_to_mel(jnp.float32(f_max)),
                         n_mels + 2)
    f_pts = mel_to_hz(m_pts)
    f_diff = f_pts[1:] - f_pts[:-1]
    slopes = f_pts[None, :] - all_freqs[:, None]          # (F, n_mels+2)
    down = -slopes[:, :-2] / f_diff[:-1]
    up = slopes[:, 2:] / f_diff[1:]
    fb = jnp.maximum(0.0, jnp.minimum(down, up))          # (F, n_mels)
    return fb.astype(jnp.float32)


def dct_matrix_mk(n_mfcc, n_mels):
    # DCT-II, ortho norm (torchaudio create_dct), shape (n_mels, n_mfcc)
    n = jnp.arange(n_mels, dtype=jnp.float32)[:, None]
    k = jnp.arange(n_mfcc, dtype=jnp.float32)[None, :]
    dct = jnp.cos(math.pi / n_mels * (n + 0.5) * k) * math.sqrt(2.0 / n_mels)
    dct = dct.at[:, 0].multiply(1.0 / math.sqrt(2.0))
    return dct.astype(jnp.float32)


# ======================================================================
# The single fused kernel: MFCC back-end -> 10 residual blocks -> head
# ======================================================================
def _make_fused_kernel(metas):
    def rd(slab_ref, name):
        r0, rows, cols = SLAB_LAYOUT[name]
        return slab_ref[r0:r0 + rows, 0:cols]

    def tap_cat(xp_ref, x):
        # xcat[t, k*C + c] = x_padded[t + k, c] for taps k = 0, 1, 2, where x_padded
        # has one zero row above and below x.  The time shifts are produced with a
        # small VMEM staging buffer (layout/memory ops only, no selection matmuls);
        # the three taps are then fused into one matmul by lane-concatenation.
        L, C = x.shape
        zrow = jnp.zeros((1, C), jnp.float32)
        xp_ref[0:1, 0:C] = zrow
        xp_ref[1:L + 1, 0:C] = x
        xp_ref[L + 1:L + 2, 0:C] = zrow
        v0 = xp_ref[0:L, 0:C]          # x[t-1]
        v2 = xp_ref[2:L + 2, 0:C]      # x[t+1]
        return jnp.concatenate([v0, x, v2], axis=1)     # (L, 3*C)

    def subsample_sel(l_out, l_in, stride):
        # S[j, i] = 1 iff i == stride*j  (built once per down-sampling block: 3 total)
        r = lax.broadcasted_iota(jnp.int32, (l_out, l_in), 0)
        c = lax.broadcasted_iota(jnp.int32, (l_out, l_in), 1)
        return jnp.where(c == stride * r, 1.0, 0.0).astype(jnp.float32)

    def kernel(pspec_ref, slab_ref, out_ref, xp_ref):
        # ---- MFCC back-end: mel projection, power->dB (top_db clamp), DCT ----
        pspec = pspec_ref[0]                                        # (T, F_PAD)
        mel = jnp.dot(pspec, rd(slab_ref, "mel_fb"),
                      preferred_element_type=jnp.float32)           # (T, n_mels)
        mel_db = 10.0 * jnp.log10(jnp.maximum(mel, 1e-10))          # AmplitudeToDB(power)
        mx = jnp.max(jnp.max(mel_db, axis=1, keepdims=True), axis=0, keepdims=True)
        mel_db = jnp.maximum(mel_db, mx - TOP_DB)                   # top_db=80 clamp
        y = jnp.dot(mel_db, rd(slab_ref, "dct"),
                    preferred_element_type=jnp.float32)             # (T, n_mfcc)

        # ---- layer1..layer4 (fully unrolled; activations never leave VMEM) ----
        for i, meta in enumerate(metas):
            stride, c_in, c_out = meta["stride"], meta["c_in"], meta["c_out"]
            l_in, l_out = meta["l_in"], meta["l_out"]
            nm = f"b{i}"

            xcat = tap_cat(xp_ref, y)                               # (l_in, 3*c_in)
            if stride != 1:
                sel = subsample_sel(l_out, l_in, stride)
                xcat = jnp.dot(sel, xcat, preferred_element_type=jnp.float32)

            # option-A shortcut: time subsample (reuses xcat's middle band) + zero-pad C
            if stride == 1 and c_in == c_out:
                sc = y
            else:
                sc = y if stride == 1 else xcat[:, c_in:2 * c_in]
                if c_in != c_out:
                    lo = (c_out - c_in) // 2
                    hi = c_out - c_in - lo
                    sc = jnp.concatenate(
                        [jnp.zeros((l_out, lo), jnp.float32), sc,
                         jnp.zeros((l_out, hi), jnp.float32)], axis=1)

            # conv1 (k=3, stride s, BN1 folded) + ReLU -- ONE matmul
            h = jnp.dot(xcat, rd(slab_ref, nm + "_w1"),
                        preferred_element_type=jnp.float32) + rd(slab_ref, nm + "_b1")
            h = jnp.maximum(h, 0.0)
            # conv2 (k=3, stride 1, BN2 folded) -- ONE matmul, then residual + ReLU
            h2 = jnp.dot(tap_cat(xp_ref, h), rd(slab_ref, nm + "_w2"),
                         preferred_element_type=jnp.float32) + rd(slab_ref, nm + "_b2")
            y = jnp.maximum(h2 + sc, 0.0)

        # ---- avgpool(1) + flatten + Linear/ReLU/Linear/Softmax ----
        feat = jnp.mean(y, axis=0, keepdims=True)                   # (1, C_last)
        h = jnp.maximum(jnp.dot(feat, rd(slab_ref, "head_w1"),
                                preferred_element_type=jnp.float32)
                        + rd(slab_ref, "head_b1"), 0.0)
        logits = jnp.dot(h, rd(slab_ref, "head_w2"),
                         preferred_element_type=jnp.float32) + rd(slab_ref, "head_b2")
        m = jnp.max(logits, axis=1, keepdims=True)
        e = jnp.exp(logits - m)
        out_ref[0] = e / jnp.sum(e, axis=1, keepdims=True)          # softmax(dim=1)

    return kernel


# ======================================================================
# Parameter initialization (deterministic, in-script); BN folded, slab-packed
# ======================================================================
def _bn_affine(key, c):
    k1, k2, k3, k4 = jax.random.split(key, 4)
    gamma = 1.0 + 0.1 * jax.random.normal(k1, (c,), jnp.float32)
    beta = 0.1 * jax.random.normal(k2, (c,), jnp.float32)
    rmean = 0.05 * jax.random.normal(k3, (c,), jnp.float32)
    rvar = 1.0 + 0.1 * jnp.abs(jax.random.normal(k4, (c,), jnp.float32))
    scale = gamma / jnp.sqrt(rvar + BN_EPS)
    shift = beta - rmean * scale
    return scale.reshape(1, c), shift.reshape(1, c)


def init_params(key):
    keys = iter(jax.random.split(key, 128))
    slab = jnp.zeros((SLAB_ROWS, SLAB_COLS), jnp.float32)

    def place(slab, name, arr):
        r0, rows, cols = SLAB_LAYOUT[name]
        assert arr.shape == (rows, cols), (name, arr.shape, (rows, cols))
        return slab.at[r0:r0 + rows, 0:cols].set(arr.astype(jnp.float32))

    mel_fb = mel_filterbank_fm(N_FREQS, N_MELS, SAMPLE_RATE)        # (1025, n_mels)
    mel_fb = jnp.pad(mel_fb, ((0, F_PAD - N_FREQS), (0, 0)))        # zero rows -> exact
    slab = place(slab, "mel_fb", mel_fb)
    slab = place(slab, "dct", dct_matrix_mk(N_MFCC, N_MELS))

    for i, cfg in enumerate(BLOCK_CONFIG):
        ci, co = cfg["c_in"], cfg["c_out"]
        w1 = jax.random.normal(next(keys), (co, ci, 3), jnp.float32) / math.sqrt(3.0 * ci)
        w2 = jax.random.normal(next(keys), (co, co, 3), jnp.float32) / math.sqrt(3.0 * co)
        s1, b1 = _bn_affine(next(keys), co)
        s2, b2 = _bn_affine(next(keys), co)
        # tap-major (3*c_in, c_out), BN scale folded into the weight, BN shift = bias
        wf1 = jnp.transpose(w1, (2, 1, 0)).reshape(3 * ci, co) * s1
        wf2 = jnp.transpose(w2, (2, 1, 0)).reshape(3 * co, co) * s2
        slab = place(slab, f"b{i}_w1", wf1)
        slab = place(slab, f"b{i}_b1", b1)
        slab = place(slab, f"b{i}_w2", wf2)
        slab = place(slab, f"b{i}_b2", b2)

    feat = PLANES[-1]
    hw1 = jax.random.normal(next(keys), (feat, feat), jnp.float32) / math.sqrt(feat)
    hb1 = 0.1 * jax.random.normal(next(keys), (feat,), jnp.float32)
    hw2 = jax.random.normal(next(keys), (2, feat), jnp.float32) / math.sqrt(feat)
    hb2 = 0.1 * jax.random.normal(next(keys), (2,), jnp.float32)
    slab = place(slab, "head_w1", hw1.T)
    slab = place(slab, "head_b1", hb1.reshape(1, feat))
    slab = place(slab, "head_w2", hw2.T)
    slab = place(slab, "head_b2", hb2.reshape(1, 2))
    return {"slab": slab}


# ======================================================================
# Forward
# ======================================================================
def forward(x_wave, params):
    pspec = stft_power(x_wave)                                      # (N, T, F)  JAX glue
    N, T, F = pspec.shape
    pspec = jnp.pad(pspec, ((0, 0), (0, 0), (0, F_PAD - F)))        # lane-pad F -> 1152

    # static per-block time lengths
    metas, L = [], T
    for cfg in BLOCK_CONFIG:
        l_out = (L - 1) // cfg["stride"] + 1
        metas.append(dict(cfg, l_in=L, l_out=l_out))
        L = l_out
    scratch_rows = -(-(max(m["l_in"] for m in metas) + 2) // 8) * 8

    # ---- advisory cost estimate (keeps XLA from over-serializing the call) ----
    flops = 2 * T * F_PAD * N_MELS + 2 * T * N_MELS * N_MFCC
    for m in metas:
        li, lo, ci, co = m["l_in"], m["l_out"], m["c_in"], m["c_out"]
        if m["stride"] != 1:
            flops += 2 * lo * li * 3 * ci                           # subsample matmul
        flops += 2 * lo * (3 * ci) * co + 2 * lo * (3 * co) * co    # fused conv1/conv2
    feat = PLANES[-1]
    flops += 2 * feat * feat + 2 * feat * 2
    flops *= N
    bytes_accessed = int(pspec.size * 4 + params["slab"].size * 4 + N * 2 * 4)
    cost = pl.CostEstimate(flops=int(flops),
                           transcendentals=int(N * (T * N_MELS + 8)),
                           bytes_accessed=bytes_accessed)

    out = pl.pallas_call(
        _make_fused_kernel(metas),
        out_shape=jax.ShapeDtypeStruct((N, 1, 2), jnp.float32),
        grid_spec=pltpu.PrefetchScalarGridSpec(
            num_scalar_prefetch=0,
            grid=(N,),
            in_specs=[
                # per-sample power spectrogram tile
                pl.BlockSpec((1, T, F_PAD), lambda b: (b, 0, 0)),
                # single packed weight slab; block index constant across the grid,
                # so it is DMA'd once and stays resident in VMEM (~1.9 MiB).
                pl.BlockSpec((SLAB_ROWS, SLAB_COLS), lambda b: (0, 0)),
            ],
            out_specs=pl.BlockSpec((1, 1, 2), lambda b: (b, 0, 0)),
            scratch_shapes=[pltpu.VMEM((scratch_rows, 128), jnp.float32)]),
        compiler_params=pltpu.CompilerParams(dimension_semantics=("parallel",)),
        cost_estimate=cost,
    )(pspec, params["slab"])
    return out.reshape(N, 2)


if __name__ == "__main__":
    key = jax.random.PRNGKey(0)
    kx, kp = jax.random.split(key)
    N, L_WAVE = 2, 4096
    x = jax.random.normal(kx, (N, L_WAVE), jnp.float32)             # waveform input
    params = init_params(kp)

    fwd = jax.jit(forward)
    out = fwd(x, params)
    out = jax.block_until_ready(out)

    assert out.shape == (N, 2), out.shape
    assert bool(jnp.all(jnp.isfinite(out)))
    assert bool(jnp.allclose(jnp.sum(out, axis=1), 1.0, atol=1e-5))  # softmax rows
    print("KERNEL_OK")
</pallas_src>

<mosaic_0001>
module attributes {stable_mosaic.version = 11 : i64} {
  func.func @kernel(%arg0: i32, %arg1: memref<1x17x1152xf32, #tpu.memory_space<vmem>>, %arg2: memref<3696x128xf32, #tpu.memory_space<vmem>>, %arg3: memref<1x1x2xf32, #tpu.memory_space<vmem>>, %arg4: memref<24x128xf32, #tpu.memory_space<vmem>>) attributes {dimension_semantics = [#tpu.dimension_semantics<parallel>], iteration_bounds = array<i64: 2>, scalar_prefetch = 0 : i64, scratch_operands = 1 : i64, tpu.core_type = #tpu.core_type<tc>, window_params = [{transform_indices = @transform_0, window_bounds = array<i64: 1, 17, 1152>}, {pipeline_mode = #tpu.pipeline_mode<synchronous>, transform_indices = @transform_1, window_bounds = array<i64: 3696, 128>}, {transform_indices = @transform_2, window_bounds = array<i64: 1, 1, 2>}]} {
    %c0 = arith.constant 0 : index
    %c0_0 = arith.constant 0 : index
    %c0_1 = arith.constant 0 : index
    %0 = vector.load %arg1[%c0, %c0_0, %c0_1] : memref<1x17x1152xf32, #tpu.memory_space<vmem>>, vector<1x17x1152xf32>
    %1 = vector.shape_cast %0 : vector<1x17x1152xf32> to vector<17x1152xf32>
    %c0_2 = arith.constant 0 : index
    %c0_3 = arith.constant 0 : index
    %2 = vector.load %arg2[%c0_2, %c0_3] : memref<3696x128xf32, #tpu.memory_space<vmem>>, vector<1152x40xf32>
    %cst = arith.constant dense<0.000000e+00> : vector<17x40xf32>
    %3 = tpu.matmul %1, %2, %cst {dimension_numbers = #tpu.dot_dimension_numbers<[1], [0], [0], [1], [0, 0, 1, 1], [], []>} : vector<17x1152xf32>, vector<1152x40xf32>, vector<17x40xf32> -> vector<17x40xf32>
    %cst_4 = arith.constant 1.000000e-10 : f32
    %4 = vector.broadcast %cst_4 : f32 to vector<17x40xf32>
    %5 = arith.maximumf %3, %4 : vector<17x40xf32>
    %6 = math.log %5 : vector<17x40xf32>
    %cst_5 = arith.constant 0.434294492 : f32
    %7 = vector.broadcast %cst_5 : f32 to vector<17x40xf32>
    %8 = arith.mulf %6, %7 : vector<17x40xf32>
    %cst_6 = arith.constant 1.000000e+01 : f32
    %9 = vector.broadcast %cst_6 : f32 to vector<17x40xf32>
    %10 = arith.mulf %9, %8 : vector<17x40xf32>
    %cst_7 = arith.constant dense<0xFF800000> : vector<17xf32>
    %11 = vector.multi_reduction <maximumf>, %10, %cst_7 [1] : vector<17x40xf32> to vector<17xf32>
    %12 = vector.shape_cast %11 : vector<17xf32> to vector<17x1xf32>
    %cst_8 = arith.constant dense<0xFF800000> : vector<1xf32>
    %13 = vector.multi_reduction <maximumf>, %12, %cst_8 [0] : vector<17x1xf32> to vector<1xf32>
    %14 = vector.shape_cast %13 : vector<1xf32> to vector<1x1xf32>
    %cst_9 = arith.constant 8.000000e+01 : f32
    %15 = vector.broadcast %cst_9 : f32 to vector<1x1xf32>
    %16 = arith.subf %14, %15 : vector<1x1xf32>
    %17 = vector.broadcast %16 : vector<1x1xf32> to vector<17x40xf32>
    %18 = arith.maximumf %10, %17 : vector<17x40xf32>
    %c1152 = arith.constant 1152 : index
    %c0_10 = arith.constant 0 : index
    %19 = vector.load %arg2[%c1152, %c0_10] : memref<3696x128xf32, #tpu.memory_space<vmem>>, vector<40x20xf32>
    %cst_11 = arith.constant dense<0.000000e+00> : vector<17x20xf32>
    %20 = tpu.matmul %18, %19, %cst_11 {dimension_numbers = #tpu.dot_dimension_numbers<[1], [0], [0], [1], [0, 0, 1, 1], [], []>} : vector<17x40xf32>, vector<40x20xf32>, vector<17x20xf32> -> vector<17x20xf32>
    %cst_12 = arith.constant 0.000000e+00 : f32
    %21 = vector.broadcast %cst_12 : f32 to vector<1x20xf32>
    %c0_13 = arith.constant 0 : index
    %c0_14 = arith.constant 0 : index
    %22 = vector.load %arg4[%c0_13, %c0_14] : memref<24x128xf32, #tpu.memory_space<vmem>>, vector<1x20xf32>
    tpu.vector_store %arg4[%c0_13, %c0_14], %21 {strides = array<i32>} : memref<24x128xf32, #tpu.memory_space<vmem>>, vector<1x20xf32>,
    %c1 = arith.constant 1 : index
    %c0_15 = arith.constant 0 : index
    %23 = vector.load %arg4[%c1, %c0_15] : memref<24x128xf32, #tpu.memory_space<vmem>>, vector<17x20xf32>
    tpu.vector_store %arg4[%c1, %c0_15], %20 {strides = array<i32>} : memref<24x128xf32, #tpu.memory_space<vmem>>, vector<17x20xf32>,
    %c18 = arith.constant 18 : index
    %c0_16 = arith.constant 0 : index
    %24 = vector.load %arg4[%c18, %c0_16] : memref<24x128xf32, #tpu.memory_space<vmem>>, vector<1x20xf32>
    tpu.vector_store %arg4[%c18, %c0_16], %21 {strides = array<i32>} : memref<24x128xf32, #tpu.memory_space<vmem>>, vector<1x20xf32>,
    %c0_17 = arith.constant 0 : index
    %c0_18 = arith.constant 0 : index
    %25 = vector.load %arg4[%c0_17, %c0_18] : memref<24x128xf32, #tpu.memory_space<vmem>>, vector<17x20xf32>
    %c2 = arith.constant 2 : index
    %c0_19 = arith.constant 0 : index
    %26 = vector.load %arg4[%c2, %c0_19] : memref<24x128xf32, #tpu.memory_space<vmem>>, vector<17x20xf32>
    %27 = tpu.concatenate %25, %20, %26 in 1 : vector<17x20xf32>, vector<17x20xf32>, vector<17x20xf32> -> vector<17x60xf32>
    %cst_20 = arith.constant 0.000000e+00 : f32
    %28 = vector.broadcast %cst_20 : f32 to vector<17x2xf32>
    %cst_21 = arith.constant 0.000000e+00 : f32
    %29 = vector.broadcast %cst_21 : f32 to vector<17x2xf32>
    %30 = tpu.concatenate %28, %20, %29 in 1 : vector<17x2xf32>, vector<17x20xf32>, vector<17x2xf32> -> vector<17x24xf32>
    %c1192 = arith.constant 1192 : index
    %c0_22 = arith.constant 0 : index
    %31 = vector.load %arg2[%c1192, %c0_22] : memref<3696x128xf32, #tpu.memory_space<vmem>>, vector<60x24xf32>
    %cst_23 = arith.constant dense<0.000000e+00> : vector<17x24xf32>
    %32 = tpu.matmul %27, %31, %cst_23 {dimension_numbers = #tpu.dot_dimension_numbers<[1], [0], [0], [1], [0, 0, 1, 1], [], []>} : vector<17x60xf32>, vector<60x24xf32>, vector<17x24xf32> -> vector<17x24xf32>
    %c1256 = arith.constant 1256 : index
    %c0_24 = arith.constant 0 : index
    %33 = vector.load %arg2[%c1256, %c0_24] : memref<3696x128xf32, #tpu.memory_space<vmem>>, vector<1x24xf32>
    %34 = vector.broadcast %33 : vector<1x24xf32> to vector<17x24xf32>
    %35 = arith.addf %32, %34 : vector<17x24xf32>
    %cst_25 = arith.constant 0.000000e+00 : f32
    %36 = vector.broadcast %cst_25 : f32 to vector<17x24xf32>
    %37 = arith.maximumf %35, %36 : vector<17x24xf32>
    %cst_26 = arith.constant 0.000000e+00 : f32
    %38 = vector.broadcast %cst_26 : f32 to vector<1x24xf32>
    %c0_27 = arith.constant 0 : index
    %c0_28 = arith.constant 0 : index
    %39 = vector.load %arg4[%c0_27, %c0_28] : memref<24x128xf32, #tpu.memory_space<vmem>>, vector<1x24xf32>
    tpu.vector_store %arg4[%c0_27, %c0_28], %38 {strides = array<i32>} : memref<24x128xf32, #tpu.memory_space<vmem>>, vector<1x24xf32>,
    %c1_29 = arith.constant 1 : index
    %c0_30 = arith.constant 0 : index
    %40 = vector.load %arg4[%c1_29, %c0_30] : memref<24x128xf32, #tpu.memory_space<vmem>>, vector<17x24xf32>
    tpu.vector_store %arg4[%c1_29, %c0_30], %37 {strides = array<i32>} : memref<24x128xf32, #tpu.memory_space<vmem>>, vector<17x24xf32>,
    %c18_31 = arith.constant 18 : index
    %c0_32 = arith.constant 0 : index
    %41 = vector.load %arg4[%c18_31, %c0_32] : memref<24x128xf32, #tpu.memory_space<vmem>>, vector<1x24xf32>
    tpu.vector_store %arg4[%c18_31, %c0_32], %38 {strides = array<i32>} : memref<24x128xf32, #tpu.memory_space<vmem>>, vector<1x24xf32>,
    %c0_33 = arith.constant 0 : index
    %c0_34 = arith.constant 0 : index
    %42 = vector.load %arg4[%c0_33, %c0_34] : memref<24x128xf32, #tpu.memory_space<vmem>>, vector<17x24xf32>
    %c2_35 = arith.constant 2 : index
    %c0_36 = arith.constant 0 : index
    %43 = vector.load %arg4[%c2_35, %c0_36] : memref<24x128xf32, #tpu.memory_space<vmem>>, vector<17x24xf32>
    %44 = tpu.concatenate %42, %37, %43 in 1 : vector<17x24xf32>, vector<17x24xf32>, vector<17x24xf32> -> vector<17x72xf32>
    %c1264 = arith.constant 1264 : index
    %c0_37 = arith.constant 0 : index
    %45 = vector.load %arg2[%c1264, %c0_37] : memref<3696x128xf32, #tpu.memory_space<vmem>>, vector<72x24xf32>
    %cst_38 = arith.constant dense<0.000000e+00> : vector<17x24xf32>
    %46 = tpu.matmul %44, %45, %cst_38 {dimension_numbers = #tpu.dot_dimension_numbers<[1], [0], [0], [1], [0, 0, 1, 1], [], []>} : vector<17x72xf32>, vector<72x24xf32>, vector<17x24xf32> -> vector<17x24xf32>
    %c1336 = arith.constant 1336 : index
    %c0_39 = arith.constant 0 : index
    %47 = vector.load %arg2[%c1336, %c0_39] : memref<3696x128xf32, #tpu.memory_space<vmem>>, vector<1x24xf32>
    %48 = vector.broadcast %47 : vector<1x24xf32> to vector<17x24xf32>
    %49 = arith.addf %46, %48 : vector<17x24xf32>
    %50 = arith.addf %49, %30 : vector<17x24xf32>
    %cst_40 = arith.constant 0.000000e+00 : f32
    %51 = vector.broadcast %cst_40 : f32 to vector<17x24xf32>
    %52 = arith.maximumf %50, %51 : vector<17x24xf32>
    %cst_41 = arith.constant 0.000000e+00 : f32
    %53 = vector.broadcast %cst_41 : f32 to vector<1x24xf32>
    %c0_42 = arith.constant 0 : index
    %c0_43 = arith.constant 0 : index
    %54 = vector.load %arg4[%c0_42, %c0_43] : memref<24x128xf32, #tpu.memory_space<vmem>>, vector<1x24xf32>
    tpu.vector_store %arg4[%c0_42, %c0_43], %53 {strides = array<i32>} : memref<24x128xf32, #tpu.memory_space<vmem>>, vector<1x24xf32>,
    %c1_44 = arith.constant 1 : index
    %c0_45 = arith.constant 0 : index
    %55 = vector.load %arg4[%c1_44, %c0_45] : memref<24x128xf32, #tpu.memory_space<vmem>>, vector<17x24xf32>
    tpu.vector_store %arg4[%c1_44, %c0_45], %52 {strides = array<i32>} : memref<24x128xf32, #tpu.memory_space<vmem>>, vector<17x24xf32>,
    %c18_46 = arith.constant 18 : index
    %c0_47 = arith.constant 0 : index
    %56 = vector.load %arg4[%c18_46, %c0_47] : memref<24x128xf32, #tpu.memory_space<vmem>>, vector<1x24xf32>
    tpu.vector_store %arg4[%c18_46, %c0_47], %53 {strides = array<i32>} : memref<24x128xf32, #tpu.memory_space<vmem>>, vector<1x24xf32>,
    %c0_48 = arith.constant 0 : index
    %c0_49 = arith.constant 0 : index
    %57 = vector.load %arg4[%c0_48, %c0_49] : memref<24x128xf32, #tpu.memory_space<vmem>>, vector<17x24xf32>
    %c2_50 = arith.constant 2 : index
    %c0_51 = arith.constant 0 : index
    %58 = vector.load %arg4[%c2_50, %c0_51] : memref<24x128xf32, #tpu.memory_space<vmem>>, vector<17x24xf32>
    %59 = tpu.concatenate %57, %52, %58 in 1 : vector<17x24xf32>, vector<17x24xf32>, vector<17x24xf32> -> vector<17x72xf32>
    %c1344 = arith.constant 1344 : index
    %c0_52 = arith.constant 0 : index
    %60 = vector.load %arg2[%c1344, %c0_52] : memref<3696x128xf32, #tpu.memory_space<vmem>>, vector<72x24xf32>
    %cst_53 = arith.constant dense<0.000000e+00> : vector<17x24xf32>
    %61 = tpu.matmul %59, %60, %cst_53 {dimension_numbers = #tpu.dot_dimension_numbers<[1], [0], [0], [1], [0, 0, 1, 1], [], []>} : vector<17x72xf32>, vector<72x24xf32>, vector<17x24xf32> -> vector<17x24xf32>
    %c1416 = arith.constant 1416 : index
    %c0_54 = arith.constant 0 : index
    %62 = vector.load %arg2[%c1416, %c0_54] : memref<3696x128xf32, #tpu.memory_space<vmem>>, vector<1x24xf32>
    %63 = vector.broadcast %62 : vector<1x24xf32> to vector<17x24xf32>
    %64 = arith.addf %61, %63 : vector<17x24xf32>
    %cst_55 = arith.constant 0.000000e+00 : f32
    %65 = vector.broadcast %cst_55 : f32 to vector<17x24xf32>
    %66 = arith.maximumf %64, %65 : vector<17x24xf32>
    %cst_56 = arith.constant 0.000000e+00 : f32
    %67 = vector.broadcast %cst_56 : f32 to vector<1x24xf32>
    %c0_57 = arith.constant 0 : index
    %c0_58 = arith.constant 0 : index
    %68 = vector.load %arg4[%c0_57, %c0_58] : memref<24x128xf32, #tpu.memory_space<vmem>>, vector<1x24xf32>
    tpu.vector_store %arg4[%c0_57, %c0_58], %67 {strides = array<i32>} : memref<24x128xf32, #tpu.memory_space<vmem>>, vector<1x24xf32>,
    %c1_59 = arith.constant 1 : index
    %c0_60 = arith.constant 0 : index
    %69 = vector.load %arg4[%c1_59, %c0_60] : memref<24x128xf32, #tpu.memory_space<vmem>>, vector<17x24xf32>
    tpu.vector_store %arg4[%c1_59, %c0_60], %66 {strides = array<i32>} : memref<24x128xf32, #tpu.memory_space<vmem>>, vector<17x24xf32>,
    %c18_61 = arith.constant 18 : index
    %c0_62 = arith.constant 0 : index
    %70 = vector.load %arg4[%c18_61, %c0_62] : memref<24x128xf32, #tpu.memory_space<vmem>>, vector<1x24xf32>
    tpu.vector_store %arg4[%c18_61, %c0_62], %67 {strides = array<i32>} : memref<24x128xf32, #tpu.memory_space<vmem>>, vector<1x24xf32>,
    %c0_63 = arith.constant 0 : index
    %c0_64 = arith.constant 0 : index
    %71 = vector.load %arg4[%c0_63, %c0_64] : memref<24x128xf32, #tpu.memory_space<vmem>>, vector<17x24xf32>
    %c2_65 = arith.constant 2 : index
    %c0_66 = arith.constant 0 : index
    %72 = vector.load %arg4[%c2_65, %c0_66] : memref<24x128xf32, #tpu.memory_space<vmem>>, vector<17x24xf32>
    %73 = tpu.concatenate %71, %66, %72 in 1 : vector<17x24xf32>, vector<17x24xf32>, vector<17x24xf32> -> vector<17x72xf32>
    %c1424 = arith.constant 1424 : index
    %c0_67 = arith.constant 0 : index
    %74 = vector.load %arg2[%c1424, %c0_67] : memref<3696x128xf32, #tpu.memory_space<vmem>>, vector<72x24xf32>
    %cst_68 = arith.constant dense<0.000000e+00> : vector<17x24xf32>
    %75 = tpu.matmul %73, %74, %cst_68 {dimension_numbers = #tpu.dot_dimension_numbers<[1], [0], [0], [1], [0, 0, 1, 1], [], []>} : vector<17x72xf32>, vector<72x24xf32>, vector<17x24xf32> -> vector<17x24xf32>
    %c1496 = arith.constant 1496 : index
    %c0_69 = arith.constant 0 : index
    %76 = vector.load %arg2[%c1496, %c0_69] : memref<3696x128xf32, #tpu.memory_space<vmem>>, vector<1x24xf32>
    %77 = vector.broadcast %76 : vector<1x24xf32> to vector<17x24xf32>
    %78 = arith.addf %75, %77 : vector<17x24xf32>
    %79 = arith.addf %78, %52 : vector<17x24xf32>
    %cst_70 = arith.constant 0.000000e+00 : f32
    %80 = vector.broadcast %cst_70 : f32 to vector<17x24xf32>
    %81 = arith.maximumf %79, %80 : vector<17x24xf32>
    %cst_71 = arith.constant 0.000000e+00 : f32
    %82 = vector.broadcast %cst_71 : f32 to vector<1x24xf32>
    %c0_72 = arith.constant 0 : index
    %c0_73 = arith.constant 0 : index
    %83 = vector.load %arg4[%c0_72, %c0_73] : memref<24x128xf32, #tpu.memory_space<vmem>>, vector<1x24xf32>
    tpu.vector_store %arg4[%c0_72, %c0_73], %82 {strides = array<i32>} : memref<24x128xf32, #tpu.memory_space<vmem>>, vector<1x24xf32>,
    %c1_74 = arith.constant 1 : index
    %c0_75 = arith.constant 0 : index
    %84 = vector.load %arg4[%c1_74, %c0_75] : memref<24x128xf32, #tpu.memory_space<vmem>>, vector<17x24xf32>
    tpu.vector_store %arg4[%c1_74, %c0_75], %81 {strides = array<i32>} : memref<24x128xf32, #tpu.memory_space<vmem>>, vector<17x24xf32>,
    %c18_76 = arith.constant 18 : index
    %c0_77 = arith.constant 0 : index
    %85 = vector.load %arg4[%c18_76, %c0_77] : memref<24x128xf32, #tpu.memory_space<vmem>>, vector<1x24xf32>
    tpu.vector_store %arg4[%c18_76, %c0_77], %82 {strides = array<i32>} : memref<24x128xf32, #tpu.memory_space<vmem>>, vector<1x24xf32>,
    %c0_78 = arith.constant 0 : index
    %c0_79 = arith.constant 0 : index
    %86 = vector.load %arg4[%c0_78, %c0_79] : memref<24x128xf32, #tpu.memory_space<vmem>>, vector<17x24xf32>
    %c2_80 = arith.constant 2 : index
    %c0_81 = arith.constant 0 : index
    %87 = vector.load %arg4[%c2_80, %c0_81] : memref<24x128xf32, #tpu.memory_space<vmem>>, vector<17x24xf32>
    %88 = tpu.concatenate %86, %81, %87 in 1 : vector<17x24xf32>, vector<17x24xf32>, vector<17x24xf32> -> vector<17x72xf32>
    %c1504 = arith.constant 1504 : index
    %c0_82 = arith.constant 0 : index
    %89 = vector.load %arg2[%c1504, %c0_82] : memref<3696x128xf32, #tpu.memory_space<vmem>>, vector<72x24xf32>
    %cst_83 = arith.constant dense<0.000000e+00> : vector<17x24xf32>
    %90 = tpu.matmul %88, %89, %cst_83 {dimension_numbers = #tpu.dot_dimension_numbers<[1], [0], [0], [1], [0, 0, 1, 1], [], []>} : vector<17x72xf32>, vector<72x24xf32>, vector<17x24xf32> -> vector<17x24xf32>
    %c1576 = arith.constant 1576 : index
    %c0_84 = arith.constant 0 : index
    %91 = vector.load %arg2[%c1576, %c0_84] : memref<3696x128xf32, #tpu.memory_space<vmem>>, vector<1x24xf32>
    %92 = vector.broadcast %91 : vector<1x24xf32> to vector<17x24xf32>
    %93 = arith.addf %90, %92 : vector<17x24xf32>
    %cst_85 = arith.constant 0.000000e+00 : f32
    %94 = vector.broadcast %cst_85 : f32 to vector<17x24xf32>
    %95 = arith.maximumf %93, %94 : vector<17x24xf32>
    %cst_86 = arith.constant 0.000000e+00 : f32
    %96 = vector.broadcast %cst_86 : f32 to vector<1x24xf32>
    %c0_87 = arith.constant 0 : index
    %c0_88 = arith.constant 0 : index
    %97 = vector.load %arg4[%c0_87, %c0_88] : memref<24x128xf32, #tpu.memory_space<vmem>>, vector<1x24xf32>
    tpu.vector_store %arg4[%c0_87, %c0_88], %96 {strides = array<i32>} : memref<24x128xf32, #tpu.memory_space<vmem>>, vector<1x24xf32>,
    %c1_89 = arith.constant 1 : index
    %c0_90 = arith.constant 0 : index
    %98 = vector.load %arg4[%c1_89, %c0_90] : memref<24x128xf32, #tpu.memory_space<vmem>>, vector<17x24xf32>
    tpu.vector_store %arg4[%c1_89, %c0_90], %95 {strides = array<i32>} : memref<24x128xf32, #tpu.memory_space<vmem>>, vector<17x24xf32>,
    %c18_91 = arith.constant 18 : index
    %c0_92 = arith.constant 0 : index
    %99 = vector.load %arg4[%c18_91, %c0_92] : memref<24x128xf32, #tpu.memory_space<vmem>>, vector<1x24xf32>
    tpu.vector_store %arg4[%c18_91, %c0_92], %96 {strides = array<i32>} : memref<24x128xf32, #tpu.memory_space<vmem>>, vector<1x24xf32>,
    %c0_93 = arith.constant 0 : index
    %c0_94 = arith.constant 0 : index
    %100 = vector.load %arg4[%c0_93, %c0_94] : memref<24x128xf32, #tpu.memory_space<vmem>>, vector<17x24xf32>
    %c2_95 = arith.constant 2 : index
    %c0_96 = arith.constant 0 : index
    %101 = vector.load %arg4[%c2_95, %c0_96] : memref<24x128xf32, #tpu.memory_space<vmem>>, vector<17x24xf32>
    %102 = tpu.concatenate %100, %95, %101 in 1 : vector<17x24xf32>, vector<17x24xf32>, vector<17x24xf32> -> vector<17x72xf32>
    %c1584 = arith.constant 1584 : index
    %c0_97 = arith.constant 0 : index
    %103 = vector.load %arg2[%c1584, %c0_97] : memref<3696x128xf32, #tpu.memory_space<vmem>>, vector<72x24xf32>
    %cst_98 = arith.constant dense<0.000000e+00> : vector<17x24xf32>
    %104 = tpu.matmul %102, %103, %cst_98 {dimension_numbers = #tpu.dot_dimension_numbers<[1], [0], [0], [1], [0, 0, 1, 1], [], []>} : vector<17x72xf32>, vector<72x24xf32>, vector<17x24xf32> -> vector<17x24xf32>
    %c1656 = arith.constant 1656 : index
    %c0_99 = arith.constant 0 : index
    %105 = vector.load %arg2[%c1656, %c0_99] : memref<3696x128xf32, #tpu.memory_space<vmem>>, vector<1x24xf32>
    %106 = vector.broadcast %105 : vector<1x24xf32> to vector<17x24xf32>
    %107 = arith.addf %104, %106 : vector<17x24xf32>
    %108 = arith.addf %107, %81 : vector<17x24xf32>
    %cst_100 = arith.constant 0.000000e+00 : f32
    %109 = vector.broadcast %cst_100 : f32 to vector<17x24xf32>
    %110 = arith.maximumf %108, %109 : vector<17x24xf32>
    %cst_101 = arith.constant 0.000000e+00 : f32
    %111 = vector.broadcast %cst_101 : f32 to vector<1x24xf32>
    %c0_102 = arith.constant 0 : index
    %c0_103 = arith.constant 0 : index
    %112 = vector.load %arg4[%c0_102, %c0_103] : memref<24x128xf32, #tpu.memory_space<vmem>>, vector<1x24xf32>
    tpu.vector_store %arg4[%c0_102, %c0_103], %111 {strides = array<i32>} : memref<24x128xf32, #tpu.memory_space<vmem>>, vector<1x24xf32>,
    %c1_104 = arith.constant 1 : index
    %c0_105 = arith.constant 0 : index
    %113 = vector.load %arg4[%c1_104, %c0_105] : memref<24x128xf32, #tpu.memory_space<vmem>>, vector<17x24xf32>
    tpu.vector_store %arg4[%c1_104, %c0_105], %110 {strides = array<i32>} : memref<24x128xf32, #tpu.memory_space<vmem>>, vector<17x24xf32>,
    %c18_106 = arith.constant 18 : index
    %c0_107 = arith.constant 0 : index
    %114 = vector.load %arg4[%c18_106, %c0_107] : memref<24x128xf32, #tpu.memory_space<vmem>>, vector<1x24xf32>
    tpu.vector_store %arg4[%c18_106, %c0_107], %111 {strides = array<i32>} : memref<24x128xf32, #tpu.memory_space<vmem>>, vector<1x24xf32>,
    %c0_108 = arith.constant 0 : index
    %c0_109 = arith.constant 0 : index
    %115 = vector.load %arg4[%c0_108, %c0_109] : memref<24x128xf32, #tpu.memory_space<vmem>>, vector<17x24xf32>
    %c2_110 = arith.constant 2 : index
    %c0_111 = arith.constant 0 : index
    %116 = vector.load %arg4[%c2_110, %c0_111] : memref<24x128xf32, #tpu.memory_space<vmem>>, vector<17x24xf32>
    %117 = tpu.concatenate %115, %110, %116 in 1 : vector<17x24xf32>, vector<17x24xf32>, vector<17x24xf32> -> vector<17x72xf32>
    %118 = tpu.iota {dimensions = array<i32: 0>} : vector<9x17xi32>
    %119 = tpu.iota {dimensions = array<i32: 1>} : vector<9x17xi32>
    %c2_i32 = arith.constant 2 : i32
    %120 = vector.broadcast %c2_i32 : i32 to vector<9x17xi32>
    %121 = arith.muli %120, %118 : vector<9x17xi32>
    %122 = arith.cmpi eq, %119, %121 : vector<9x17xi32>
    %cst_112 = arith.constant 1.000000e+00 : f32
    %cst_113 = arith.constant 0.000000e+00 : f32
    %123 = vector.broadcast %cst_112 : f32 to vector<9x17xf32>
    %124 = vector.broadcast %cst_113 : f32 to vector<9x17xf32>
    %125 = arith.select %122, %123, %124 : vector<9x17xi1>, vector<9x17xf32>
    %cst_114 = arith.constant dense<0.000000e+00> : vector<9x72xf32>
    %126 = tpu.matmul %125, %117, %cst_114 {dimension_numbers = #tpu.dot_dimension_numbers<[1], [0], [0], [1], [0, 0, 1, 1], [], []>} : vector<9x17xf32>, vector<17x72xf32>, vector<9x72xf32> -> vector<9x72xf32>
    %127 = vector.extract_strided_slice %126 {offsets = [0, 24], sizes = [9, 24], strides = [1, 1]} : vector<9x72xf32> to vector<9x24xf32>
    %cst_115 = arith.constant 0.000000e+00 : f32
    %128 = vector.broadcast %cst_115 : f32 to vector<9x4xf32>
    %cst_116 = arith.constant 0.000000e+00 : f32
    %129 = vector.broadcast %cst_116 : f32 to vector<9x4xf32>
    %130 = tpu.concatenate %128, %127, %129 in 1 : vector<9x4xf32>, vector<9x24xf32>, vector<9x4xf32> -> vector<9x32xf32>
    %c1664 = arith.constant 1664 : index
    %c0_117 = arith.constant 0 : index
    %131 = vector.load %arg2[%c1664, %c0_117] : memref<3696x128xf32, #tpu.memory_space<vmem>>, vector<72x32xf32>
    %cst_118 = arith.constant dense<0.000000e+00> : vector<9x32xf32>
    %132 = tpu.matmul %126, %131, %cst_118 {dimension_numbers = #tpu.dot_dimension_numbers<[1], [0], [0], [1], [0, 0, 1, 1], [], []>} : vector<9x72xf32>, vector<72x32xf32>, vector<9x32xf32> -> vector<9x32xf32>
    %c1736 = arith.constant 1736 : index
    %c0_119 = arith.constant 0 : index
    %133 = vector.load %arg2[%c1736, %c0_119] : memref<3696x128xf32, #tpu.memory_space<vmem>>, vector<1x32xf32>
    %134 = vector.broadcast %133 : vector<1x32xf32> to vector<9x32xf32>
    %135 = arith.addf %132, %134 : vector<9x32xf32>
    %cst_120 = arith.constant 0.000000e+00 : f32
    %136 = vector.broadcast %cst_120 : f32 to vector<9x32xf32>
    %137 = arith.maximumf %135, %136 : vector<9x32xf32>
    %cst_121 = arith.constant 0.000000e+00 : f32
    %138 = vector.broadcast %cst_121 : f32 to vector<1x32xf32>
    %c0_122 = arith.constant 0 : index
    %c0_123 = arith.constant 0 : index
    %139 = vector.load %arg4[%c0_122, %c0_123] : memref<24x128xf32, #tpu.memory_space<vmem>>, vector<1x32xf32>
    tpu.vector_store %arg4[%c0_122, %c0_123], %138 {strides = array<i32>} : memref<24x128xf32, #tpu.memory_space<vmem>>, vector<1x32xf32>,
    %c1_124 = arith.constant 1 : index
    %c0_125 = arith.constant 0 : index
    %140 = vector.load %arg4[%c1_124, %c0_125] : memref<24x128xf32, #tpu.memory_space<vmem>>, vector<9x32xf32>
    tpu.vector_store %arg4[%c1_124, %c0_125], %137 {strides = array<i32>} : memref<24x128xf32, #tpu.memory_space<vmem>>, vector<9x32xf32>,
    %c10 = arith.constant 10 : index
    %c0_126 = arith.constant 0 : index
    %141 = vector.load %arg4[%c10, %c0_126] : memref<24x128xf32, #tpu.memory_space<vmem>>, vector<1x32xf32>
    tpu.vector_store %arg4[%c10, %c0_126], %138 {strides = array<i32>} : memref<24x128xf32, #tpu.memory_space<vmem>>, vector<1x32xf32>,
    %c0_127 = arith.constant 0 : index
    %c0_128 = arith.constant 0 : index
    %142 = vector.load %arg4[%c0_127, %c0_128] : memref<24x128xf32, #tpu.memory_space<vmem>>, vector<9x32xf32>
    %c2_129 = arith.constant 2 : index
    %c0_130 = arith.constant 0 : index
    %143 = vector.load %arg4[%c2_129, %c0_130] : memref<24x128xf32, #tpu.memory_space<vmem>>, vector<9x32xf32>
    %144 = tpu.concatenate %142, %137, %143 in 1 : vector<9x32xf32>, vector<9x32xf32>, vector<9x32xf32> -> vector<9x96xf32>
    %c1744 = arith.constant 1744 : index
    %c0_131 = arith.constant 0 : index
    %145 = vector.load %arg2[%c1744, %c0_131] : memref<3696x128xf32, #tpu.memory_space<vmem>>, vector<96x32xf32>
    %cst_132 = arith.constant dense<0.000000e+00> : vector<9x32xf32>
    %146 = tpu.matmul %144, %145, %cst_132 {dimension_numbers = #tpu.dot_dimension_numbers<[1], [0], [0], [1], [0, 0, 1, 1], [], []>} : vector<9x96xf32>, vector<96x32xf32>, vector<9x32xf32> -> vector<9x32xf32>
    %c1840 = arith.constant 1840 : index
    %c0_133 = arith.constant 0 : index
    %147 = vector.load %arg2[%c1840, %c0_133] : memref<3696x128xf32, #tpu.memory_space<vmem>>, vector<1x32xf32>
    %148 = vector.broadcast %147 : vector<1x32xf32> to vector<9x32xf32>
    %149 = arith.addf %146, %148 : vector<9x32xf32>
    %150 = arith.addf %149, %130 : vector<9x32xf32>
    %cst_134 = arith.constant 0.000000e+00 : f32
    %151 = vector.broadcast %cst_134 : f32 to vector<9x32xf32>
    %152 = arith.maximumf %150, %151 : vector<9x32xf32>
    %cst_135 = arith.constant 0.000000e+00 : f32
    %153 = vector.broadcast %cst_135 : f32 to vector<1x32xf32>
    %c0_136 = arith.constant 0 : index
    %c0_137 = arith.constant 0 : index
    %154 = vector.load %arg4[%c0_136, %c0_137] : memref<24x128xf32, #tpu.memory_space<vmem>>, vector<1x32xf32>
    tpu.vector_store %arg4[%c0_136, %c0_137], %153 {strides = array<i32>} : memref<24x128xf32, #tpu.memory_space<vmem>>, vector<1x32xf32>,
    %c1_138 = arith.constant 1 : index
    %c0_139 = arith.constant 0 : index
    %155 = vector.load %arg4[%c1_138, %c0_139] : memref<24x128xf32, #tpu.memory_space<vmem>>, vector<9x32xf32>
    tpu.vector_store %arg4[%c1_138, %c0_139], %152 {strides = array<i32>} : memref<24x128xf32, #tpu.memory_space<vmem>>, vector<9x32xf32>,
    %c10_140 = arith.constant 10 : index
    %c0_141 = arith.constant 0 : index
    %156 = vector.load %arg4[%c10_140, %c0_141] : memref<24x128xf32, #tpu.memory_space<vmem>>, vector<1x32xf32>
    tpu.vector_store %arg4[%c10_140, %c0_141], %153 {strides = array<i32>} : memref<24x128xf32, #tpu.memory_space<vmem>>, vector<1x32xf32>,
    %c0_142 = arith.constant 0 : index
    %c0_143 = arith.constant 0 : index
    %157 = vector.load %arg4[%c0_142, %c0_143] : memref<24x128xf32, #tpu.memory_space<vmem>>, vector<9x32xf32>
    %c2_144 = arith.constant 2 : index
    %c0_145 = arith.constant 0 : index
    %158 = vector.load %arg4[%c2_144, %c0_145] : memref<24x128xf32, #tpu.memory_space<vmem>>, vector<9x32xf32>
    %159 = tpu.concatenate %157, %152, %158 in 1 : vector<9x32xf32>, vector<9x32xf32>, vector<9x32xf32> -> vector<9x96xf32>
    %c1848 = arith.constant 1848 : index
    %c0_146 = arith.constant 0 : index
    %160 = vector.load %arg2[%c1848, %c0_146] : memref<3696x128xf32, #tpu.memory_space<vmem>>, vector<96x32xf32>
    %cst_147 = arith.constant dense<0.000000e+00> : vector<9x32xf32>
    %161 = tpu.matmul %159, %160, %cst_147 {dimension_numbers = #tpu.dot_dimension_numbers<[1], [0], [0], [1], [0, 0, 1, 1], [], []>} : vector<9x96xf32>, vector<96x32xf32>, vector<9x32xf32> -> vector<9x32xf32>
    %c1944 = arith.constant 1944 : index
    %c0_148 = arith.constant 0 : index
    %162 = vector.load %arg2[%c1944, %c0_148] : memref<3696x128xf32, #tpu.memory_space<vmem>>, vector<1x32xf32>
    %163 = vector.broadcast %162 : vector<1x32xf32> to vector<9x32xf32>
    %164 = arith.addf %161, %163 : vector<9x32xf32>
    %cst_149 = arith.constant 0.000000e+00 : f32
    %165 = vector.broadcast %cst_149 : f32 to vector<9x32xf32>
    %166 = arith.maximumf %164, %165 : vector<9x32xf32>
    %cst_150 = arith.constant 0.000000e+00 : f32
    %167 = vector.broadcast %cst_150 : f32 to vector<1x32xf32>
    %c0_151 = arith.constant 0 : index
    %c0_152 = arith.constant 0 : index
    %168 = vector.load %arg4[%c0_151, %c0_152] : memref<24x128xf32, #tpu.memory_space<vmem>>, vector<1x32xf32>
    tpu.vector_store %arg4[%c0_151, %c0_152], %167 {strides = array<i32>} : memref<24x128xf32, #tpu.memory_space<vmem>>, vector<1x32xf32>,
    %c1_153 = arith.constant 1 : index
    %c0_154 = arith.constant 0 : index
    %169 = vector.load %arg4[%c1_153, %c0_154] : memref<24x128xf32, #tpu.memory_space<vmem>>, vector<9x32xf32>
    tpu.vector_store %arg4[%c1_153, %c0_154], %166 {strides = array<i32>} : memref<24x128xf32, #tpu.memory_space<vmem>>, vector<9x32xf32>,
    %c10_155 = arith.constant 10 : index
    %c0_156 = arith.constant 0 : index
    %170 = vector.load %arg4[%c10_155, %c0_156] : memref<24x128xf32, #tpu.memory_space<vmem>>, vector<1x32xf32>
    tpu.vector_store %arg4[%c10_155, %c0_156], %167 {strides = array<i32>} : memref<24x128xf32, #tpu.memory_space<vmem>>, vector<1x32xf32>,
    %c0_157 = arith.constant 0 : index
    %c0_158 = arith.constant 0 : index
    %171 = vector.load %arg4[%c0_157, %c0_158] : memref<24x128xf32, #tpu.memory_space<vmem>>, vector<9x32xf32>
    %c2_159 = arith.constant 2 : index
    %c0_160 = arith.constant 0 : index
    %172 = vector.load %arg4[%c2_159, %c0_160] : memref<24x128xf32, #tpu.memory_space<vmem>>, vector<9x32xf32>
    %173 = tpu.concatenate %171, %166, %172 in 1 : vector<9x32xf32>, vector<9x32xf32>, vector<9x32xf32> -> vector<9x96xf32>
    %c1952 = arith.constant 1952 : index
    %c0_161 = arith.constant 0 : index
    %174 = vector.load %arg2[%c1952, %c0_161] : memref<3696x128xf32, #tpu.memory_space<vmem>>, vector<96x32xf32>
    %cst_162 = arith.constant dense<0.000000e+00> : vector<9x32xf32>
    %175 = tpu.matmul %173, %174, %cst_162 {dimension_numbers = #tpu.dot_dimension_numbers<[1], [0], [0], [1], [0, 0, 1, 1], [], []>} : vector<9x96xf32>, vector<96x32xf32>, vector<9x32xf32> -> vector<9x32xf32>
    %c2048 = arith.constant 2048 : index
    %c0_163 = arith.constant 0 : index
    %176 = vector.load %arg2[%c2048, %c0_163] : memref<3696x128xf32, #tpu.memory_space<vmem>>, vector<1x32xf32>
    %177 = vector.broadcast %176 : vector<1x32xf32> to vector<9x32xf32>
    %178 = arith.addf %175, %177 : vector<9x32xf32>
    %179 = arith.addf %178, %152 : vector<9x32xf32>
    %cst_164 = arith.constant 0.000000e+00 : f32
    %180 = vector.broadcast %cst_164 : f32 to vector<9x32xf32>
    %181 = arith.maximumf %179, %180 : vector<9x32xf32>
    %cst_165 = arith.constant 0.000000e+00 : f32
    %182 = vector.broadcast %cst_165 : f32 to vector<1x32xf32>
    %c0_166 = arith.constant 0 : index
    %c0_167 = arith.constant 0 : index
    %183 = vector.load %arg4[%c0_166, %c0_167] : memref<24x128xf32, #tpu.memory_space<vmem>>, vector<1x32xf32>
    tpu.vector_store %arg4[%c0_166, %c0_167], %182 {strides = array<i32>} : memref<24x128xf32, #tpu.memory_space<vmem>>, vector<1x32xf32>,
    %c1_168 = arith.constant 1 : index
    %c0_169 = arith.constant 0 : index
    %184 = vector.load %arg4[%c1_168, %c0_169] : memref<24x128xf32, #tpu.memory_space<vmem>>, vector<9x32xf32>
    tpu.vector_store %arg4[%c1_168, %c0_169], %181 {strides = array<i32>} : memref<24x128xf32, #tpu.memory_space<vmem>>, vector<9x32xf32>,
    %c10_170 = arith.constant 10 : index
    %c0_171 = arith.constant 0 : index
    %185 = vector.load %arg4[%c10_170, %c0_171] : memref<24x128xf32, #tpu.memory_space<vmem>>, vector<1x32xf32>
    tpu.vector_store %arg4[%c10_170, %c0_171], %182 {strides = array<i32>} : memref<24x128xf32, #tpu.memory_space<vmem>>, vector<1x32xf32>,
    %c0_172 = arith.constant 0 : index
    %c0_173 = arith.constant 0 : index
    %186 = vector.load %arg4[%c0_172, %c0_173] : memref<24x128xf32, #tpu.memory_space<vmem>>, vector<9x32xf32>
    %c2_174 = arith.constant 2 : index
    %c0_175 = arith.constant 0 : index
    %187 = vector.load %arg4[%c2_174, %c0_175] : memref<24x128xf32, #tpu.memory_space<vmem>>, vector<9x32xf32>
    %188 = tpu.concatenate %186, %181, %187 in 1 : vector<9x32xf32>, vector<9x32xf32>, vector<9x32xf32> -> vector<9x96xf32>
    %c2056 = arith.constant 2056 : index
    %c0_176 = arith.constant 0 : index
    %189 = vector.load %arg2[%c2056, %c0_176] : memref<3696x128xf32, #tpu.memory_space<vmem>>, vector<96x32xf32>
    %cst_177 = arith.constant dense<0.000000e+00> : vector<9x32xf32>
    %190 = tpu.matmul %188, %189, %cst_177 {dimension_numbers = #tpu.dot_dimension_numbers<[1], [0], [0], [1], [0, 0, 1, 1], [], []>} : vector<9x96xf32>, vector<96x32xf32>, vector<9x32xf32> -> vector<9x32xf32>
    %c2152 = arith.constant 2152 : index
    %c0_178 = arith.constant 0 : index
    %191 = vector.load %arg2[%c2152, %c0_178] : memref<3696x128xf32, #tpu.memory_space<vmem>>, vector<1x32xf32>
    %192 = vector.broadcast %191 : vector<1x32xf32> to vector<9x32xf32>
    %193 = arith.addf %190, %192 : vector<9x32xf32>
    %cst_179 = arith.constant 0.000000e+00 : f32
    %194 = vector.broadcast %cst_179 : f32 to vector<9x32xf32>
    %195 = arith.maximumf %193, %194 : vector<9x32xf32>
    %cst_180 = arith.constant 0.000000e+00 : f32
    %196 = vector.broadcast %cst_180 : f32 to vector<1x32xf32>
    %c0_181 = arith.constant 0 : index
    %c0_182 = arith.constant 0 : index
    %197 = vector.load %arg4[%c0_181, %c0_182] : memref<24x128xf32, #tpu.memory_space<vmem>>, vector<1x32xf32>
    tpu.vector_store %arg4[%c0_181, %c0_182], %196 {strides = array<i32>} : memref<24x128xf32, #tpu.memory_space<vmem>>, vector<1x32xf32>,
    %c1_183 = arith.constant 1 : index
    %c0_184 = arith.constant 0 : index
    %198 = vector.load %arg4[%c1_183, %c0_184] : memref<24x128xf32, #tpu.memory_space<vmem>>, vector<9x32xf32>
    tpu.vector_store %arg4[%c1_183, %c0_184], %195 {strides = array<i32>} : memref<24x128xf32, #tpu.memory_space<vmem>>, vector<9x32xf32>,
    %c10_185 = arith.constant 10 : index
    %c0_186 = arith.constant 0 : index
    %199 = vector.load %arg4[%c10_185, %c0_186] : memref<24x128xf32, #tpu.memory_space<vmem>>, vector<1x32xf32>
    tpu.vector_store %arg4[%c10_185, %c0_186], %196 {strides = array<i32>} : memref<24x128xf32, #tpu.memory_space<vmem>>, vector<1x32xf32>,
    %c0_187 = arith.constant 0 : index
    %c0_188 = arith.constant 0 : index
    %200 = vector.load %arg4[%c0_187, %c0_188] : memref<24x128xf32, #tpu.memory_space<vmem>>, vector<9x32xf32>
    %c2_189 = arith.constant 2 : index
    %c0_190 = arith.constant 0 : index
    %201 = vector.load %arg4[%c2_189, %c0_190] : memref<24x128xf32, #tpu.memory_space<vmem>>, vector<9x32xf32>
    %202 = tpu.concatenate %200, %195, %201 in 1 : vector<9x32xf32>, vector<9x32xf32>, vector<9x32xf32> -> vector<9x96xf32>
    %c2160 = arith.constant 2160 : index
    %c0_191 = arith.constant 0 : index
    %203 = vector.load %arg2[%c2160, %c0_191] : memref<3696x128xf32, #tpu.memory_space<vmem>>, vector<96x32xf32>
    %cst_192 = arith.constant dense<0.000000e+00> : vector<9x32xf32>
    %204 = tpu.matmul %202, %203, %cst_192 {dimension_numbers = #tpu.dot_dimension_numbers<[1], [0], [0], [1], [0, 0, 1, 1], [], []>} : vector<9x96xf32>, vector<96x32xf32>, vector<9x32xf32> -> vector<9x32xf32>
    %c2256 = arith.constant 2256 : index
    %c0_193 = arith.constant 0 : index
    %205 = vector.load %arg2[%c2256, %c0_193] : memref<3696x128xf32, #tpu.memory_space<vmem>>, vector<1x32xf32>
    %206 = vector.broadcast %205 : vector<1x32xf32> to vector<9x32xf32>
    %207 = arith.addf %204, %206 : vector<9x32xf32>
    %208 = arith.addf %207, %181 : vector<9x32xf32>
    %cst_194 = arith.constant 0.000000e+00 : f32
    %209 = vector.broadcast %cst_194 : f32 to vector<9x32xf32>
    %210 = arith.maximumf %208, %209 : vector<9x32xf32>
    %cst_195 = arith.constant 0.000000e+00 : f32
    %211 = vector.broadcast %cst_195 : f32 to vector<1x32xf32>
    %c0_196 = arith.constant 0 : index
    %c0_197 = arith.constant 0 : index
    %212 = vector.load %arg4[%c0_196, %c0_197] : memref<24x128xf32, #tpu.memory_space<vmem>>, vector<1x32xf32>
    tpu.vector_store %arg4[%c0_196, %c0_197], %211 {strides = array<i32>} : memref<24x128xf32, #tpu.memory_space<vmem>>, vector<1x32xf32>,
    %c1_198 = arith.constant 1 : index
    %c0_199 = arith.constant 0 : index
    %213 = vector.load %arg4[%c1_198, %c0_199] : memref<24x128xf32, #tpu.memory_space<vmem>>, vector<9x32xf32>
    tpu.vector_store %arg4[%c1_198, %c0_199], %210 {strides = array<i32>} : memref<24x128xf32, #tpu.memory_space<vmem>>, vector<9x32xf32>,
    %c10_200 = arith.constant 10 : index
    %c0_201 = arith.constant 0 : index
    %214 = vector.load %arg4[%c10_200, %c0_201] : memref<24x128xf32, #tpu.memory_space<vmem>>, vector<1x32xf32>
    tpu.vector_store %arg4[%c10_200, %c0_201], %211 {strides = array<i32>} : memref<24x128xf32, #tpu.memory_space<vmem>>, vector<1x32xf32>,
    %c0_202 = arith.constant 0 : index
    %c0_203 = arith.constant 0 : index
    %215 = vector.load %arg4[%c0_202, %c0_203] : memref<24x128xf32, #tpu.memory_space<vmem>>, vector<9x32xf32>
    %c2_204 = arith.constant 2 : index
    %c0_205 = arith.constant 0 : index
    %216 = vector.load %arg4[%c2_204, %c0_205] : memref<24x128xf32, #tpu.memory_space<vmem>>, vector<9x32xf32>
    %217 = tpu.concatenate %215, %210, %216 in 1 : vector<9x32xf32>, vector<9x32xf32>, vector<9x32xf32> -> vector<9x96xf32>
    %218 = tpu.iota {dimensions = array<i32: 0>} : vector<5x9xi32>
    %219 = tpu.iota {dimensions = array<i32: 1>} : vector<5x9xi32>
    %c2_i32_206 = arith.constant 2 : i32
    %220 = vector.broadcast %c2_i32_206 : i32 to vector<5x9xi32>
    %221 = arith.muli %220, %218 : vector<5x9xi32>
    %222 = arith.cmpi eq, %219, %221 : vector<5x9xi32>
    %cst_207 = arith.constant 1.000000e+00 : f32
    %cst_208 = arith.constant 0.000000e+00 : f32
    %223 = vector.broadcast %cst_207 : f32 to vector<5x9xf32>
    %224 = vector.broadcast %cst_208 : f32 to vector<5x9xf32>
    %225 = arith.select %222, %223, %224 : vector<5x9xi1>, vector<5x9xf32>
    %cst_209 = arith.constant dense<0.000000e+00> : vector<5x96xf32>
    %226 = tpu.matmul %225, %217, %cst_209 {dimension_numbers = #tpu.dot_dimension_numbers<[1], [0], [0], [1], [0, 0, 1, 1], [], []>} : vector<5x9xf32>, vector<9x96xf32>, vector<5x96xf32> -> vector<5x96xf32>
    %227 = vector.extract_strided_slice %226 {offsets = [0, 32], sizes = [5, 32], strides = [1, 1]} : vector<5x96xf32> to vector<5x32xf32>
    %cst_210 = arith.constant 0.000000e+00 : f32
    %228 = vector.broadcast %cst_210 : f32 to vector<5x8xf32>
    %cst_211 = arith.constant 0.000000e+00 : f32
    %229 = vector.broadcast %cst_211 : f32 to vector<5x8xf32>
    %230 = tpu.concatenate %228, %227, %229 in 1 : vector<5x8xf32>, vector<5x32xf32>, vector<5x8xf32> -> vector<5x48xf32>
    %c2264 = arith.constant 2264 : index
    %c0_212 = arith.constant 0 : index
    %231 = vector.load %arg2[%c2264, %c0_212] : memref<3696x128xf32, #tpu.memory_space<vmem>>, vector<96x48xf32>
    %cst_213 = arith.constant dense<0.000000e+00> : vector<5x48xf32>
    %232 = tpu.matmul %226, %231, %cst_213 {dimension_numbers = #tpu.dot_dimension_numbers<[1], [0], [0], [1], [0, 0, 1, 1], [], []>} : vector<5x96xf32>, vector<96x48xf32>, vector<5x48xf32> -> vector<5x48xf32>
    %c2360 = arith.constant 2360 : index
    %c0_214 = arith.constant 0 : index
    %233 = vector.load %arg2[%c2360, %c0_214] : memref<3696x128xf32, #tpu.memory_space<vmem>>, vector<1x48xf32>
    %234 = vector.broadcast %233 : vector<1x48xf32> to vector<5x48xf32>
    %235 = arith.addf %232, %234 : vector<5x48xf32>
    %cst_215 = arith.constant 0.000000e+00 : f32
    %236 = vector.broadcast %cst_215 : f32 to vector<5x48xf32>
    %237 = arith.maximumf %235, %236 : vector<5x48xf32>
    %cst_216 = arith.constant 0.000000e+00 : f32
    %238 = vector.broadcast %cst_216 : f32 to vector<1x48xf32>
    %c0_217 = arith.constant 0 : index
    %c0_218 = arith.constant 0 : index
    %239 = vector.load %arg4[%c0_217, %c0_218] : memref<24x128xf32, #tpu.memory_space<vmem>>, vector<1x48xf32>
    tpu.vector_store %arg4[%c0_217, %c0_218], %238 {strides = array<i32>} : memref<24x128xf32, #tpu.memory_space<vmem>>, vector<1x48xf32>,
    %c1_219 = arith.constant 1 : index
    %c0_220 = arith.constant 0 : index
    %240 = vector.load %arg4[%c1_219, %c0_220] : memref<24x128xf32, #tpu.memory_space<vmem>>, vector<5x48xf32>
    tpu.vector_store %arg4[%c1_219, %c0_220], %237 {strides = array<i32>} : memref<24x128xf32, #tpu.memory_space<vmem>>, vector<5x48xf32>,
    %c6 = arith.constant 6 : index
    %c0_221 = arith.constant 0 : index
    %241 = vector.load %arg4[%c6, %c0_221] : memref<24x128xf32, #tpu.memory_space<vmem>>, vector<1x48xf32>
    tpu.vector_store %arg4[%c6, %c0_221], %238 {strides = array<i32>} : memref<24x128xf32, #tpu.memory_space<vmem>>, vector<1x48xf32>,
    %c0_222 = arith.constant 0 : index
    %c0_223 = arith.constant 0 : index
    %242 = vector.load %arg4[%c0_222, %c0_223] : memref<24x128xf32, #tpu.memory_space<vmem>>, vector<5x48xf32>
    %c2_224 = arith.constant 2 : index
    %c0_225 = arith.constant 0 : index
    %243 = vector.load %arg4[%c2_224, %c0_225] : memref<24x128xf32, #tpu.memory_space<vmem>>, vector<5x48xf32>
    %244 = tpu.concatenate %242, %237, %243 in 1 : vector<5x48xf32>, vector<5x48xf32>, vector<5x48xf32> -> vector<5x144xf32>
    %c2368 = arith.constant 2368 : index
    %c0_226 = arith.constant 0 : index
    %245 = vector.load %arg2[%c2368, %c0_226] : memref<3696x128xf32, #tpu.memory_space<vmem>>, vector<144x48xf32>
    %cst_227 = arith.constant dense<0.000000e+00> : vector<5x48xf32>
    %246 = tpu.matmul %244, %245, %cst_227 {dimension_numbers = #tpu.dot_dimension_numbers<[1], [0], [0], [1], [0, 0, 1, 1], [], []>} : vector<5x144xf32>, vector<144x48xf32>, vector<5x48xf32> -> vector<5x48xf32>
    %c2512 = arith.constant 2512 : index
    %c0_228 = arith.constant 0 : index
    %247 = vector.load %arg2[%c2512, %c0_228] : memref<3696x128xf32, #tpu.memory_space<vmem>>, vector<1x48xf32>
    %248 = vector.broadcast %247 : vector<1x48xf32> to vector<5x48xf32>
    %249 = arith.addf %246, %248 : vector<5x48xf32>
    %250 = arith.addf %249, %230 : vector<5x48xf32>
    %cst_229 = arith.constant 0.000000e+00 : f32
    %251 = vector.broadcast %cst_229 : f32 to vector<5x48xf32>
    %252 = arith.maximumf %250, %251 : vector<5x48xf32>
    %cst_230 = arith.constant 0.000000e+00 : f32
    %253 = vector.broadcast %cst_230 : f32 to vector<1x48xf32>
    %c0_231 = arith.constant 0 : index
    %c0_232 = arith.constant 0 : index
    %254 = vector.load %arg4[%c0_231, %c0_232] : memref<24x128xf32, #tpu.memory_space<vmem>>, vector<1x48xf32>
    tpu.vector_store %arg4[%c0_231, %c0_232], %253 {strides = array<i32>} : memref<24x128xf32, #tpu.memory_space<vmem>>, vector<1x48xf32>,
    %c1_233 = arith.constant 1 : index
    %c0_234 = arith.constant 0 : index
    %255 = vector.load %arg4[%c1_233, %c0_234] : memref<24x128xf32, #tpu.memory_space<vmem>>, vector<5x48xf32>
    tpu.vector_store %arg4[%c1_233, %c0_234], %252 {strides = array<i32>} : memref<24x128xf32, #tpu.memory_space<vmem>>, vector<5x48xf32>,
    %c6_235 = arith.constant 6 : index
    %c0_236 = arith.constant 0 : index
    %256 = vector.load %arg4[%c6_235, %c0_236] : memref<24x128xf32, #tpu.memory_space<vmem>>, vector<1x48xf32>
    tpu.vector_store %arg4[%c6_235, %c0_236], %253 {strides = array<i32>} : memref<24x128xf32, #tpu.memory_space<vmem>>, vector<1x48xf32>,
    %c0_237 = arith.constant 0 : index
    %c0_238 = arith.constant 0 : index
    %257 = vector.load %arg4[%c0_237, %c0_238] : memref<24x128xf32, #tpu.memory_space<vmem>>, vector<5x48xf32>
    %c2_239 = arith.constant 2 : index
    %c0_240 = arith.constant 0 : index
    %258 = vector.load %arg4[%c2_239, %c0_240] : memref<24x128xf32, #tpu.memory_space<vmem>>, vector<5x48xf32>
    %259 = tpu.concatenate %257, %252, %258 in 1 : vector<5x48xf32>, vector<5x48xf32>, vector<5x48xf32> -> vector<5x144xf32>
    %c2520 = arith.constant 2520 : index
    %c0_241 = arith.constant 0 : index
    %260 = vector.load %arg2[%c2520, %c0_241] : memref<3696x128xf32, #tpu.memory_space<vmem>>, vector<144x48xf32>
    %cst_242 = arith.constant dense<0.000000e+00> : vector<5x48xf32>
    %261 = tpu.matmul %259, %260, %cst_242 {dimension_numbers = #tpu.dot_dimension_numbers<[1], [0], [0], [1], [0, 0, 1, 1], [], []>} : vector<5x144xf32>, vector<144x48xf32>, vector<5x48xf32> -> vector<5x48xf32>
    %c2664 = arith.constant 2664 : index
    %c0_243 = arith.constant 0 : index
    %262 = vector.load %arg2[%c2664, %c0_243] : memref<3696x128xf32, #tpu.memory_space<vmem>>, vector<1x48xf32>
    %263 = vector.broadcast %262 : vector<1x48xf32> to vector<5x48xf32>
    %264 = arith.addf %261, %263 : vector<5x48xf32>
    %cst_244 = arith.constant 0.000000e+00 : f32
    %265 = vector.broadcast %cst_244 : f32 to vector<5x48xf32>
    %266 = arith.maximumf %264, %265 : vector<5x48xf32>
    %cst_245 = arith.constant 0.000000e+00 : f32
    %267 = vector.broadcast %cst_245 : f32 to vector<1x48xf32>
    %c0_246 = arith.constant 0 : index
    %c0_247 = arith.constant 0 : index
    %268 = vector.load %arg4[%c0_246, %c0_247] : memref<24x128xf32, #tpu.memory_space<vmem>>, vector<1x48xf32>
    tpu.vector_store %arg4[%c0_246, %c0_247], %267 {strides = array<i32>} : memref<24x128xf32, #tpu.memory_space<vmem>>, vector<1x48xf32>,
    %c1_248 = arith.constant 1 : index
    %c0_249 = arith.constant 0 : index
    %269 = vector.load %arg4[%c1_248, %c0_249] : memref<24x128xf32, #tpu.memory_space<vmem>>, vector<5x48xf32>
    tpu.vector_store %arg4[%c1_248, %c0_249], %266 {strides = array<i32>} : memref<24x128xf32, #tpu.memory_space<vmem>>, vector<5x48xf32>,
    %c6_250 = arith.constant 6 : index
    %c0_251 = arith.constant 0 : index
    %270 = vector.load %arg4[%c6_250, %c0_251] : memref<24x128xf32, #tpu.memory_space<vmem>>, vector<1x48xf32>
    tpu.vector_store %arg4[%c6_250, %c0_251], %267 {strides = array<i32>} : memref<24x128xf32, #tpu.memory_space<vmem>>, vector<1x48xf32>,
    %c0_252 = arith.constant 0 : index
    %c0_253 = arith.constant 0 : index
    %271 = vector.load %arg4[%c0_252, %c0_253] : memref<24x128xf32, #tpu.memory_space<vmem>>, vector<5x48xf32>
    %c2_254 = arith.constant 2 : index
    %c0_255 = arith.constant 0 : index
    %272 = vector.load %arg4[%c2_254, %c0_255] : memref<24x128xf32, #tpu.memory_space<vmem>>, vector<5x48xf32>
    %273 = tpu.concatenate %271, %266, %272 in 1 : vector<5x48xf32>, vector<5x48xf32>, vector<5x48xf32> -> vector<5x144xf32>
    %c2672 = arith.constant 2672 : index
    %c0_256 = arith.constant 0 : index
    %274 = vector.load %arg2[%c2672, %c0_256] : memref<3696x128xf32, #tpu.memory_space<vmem>>, vector<144x48xf32>
    %cst_257 = arith.constant dense<0.000000e+00> : vector<5x48xf32>
    %275 = tpu.matmul %273, %274, %cst_257 {dimension_numbers = #tpu.dot_dimension_numbers<[1], [0], [0], [1], [0, 0, 1, 1], [], []>} : vector<5x144xf32>, vector<144x48xf32>, vector<5x48xf32> -> vector<5x48xf32>
    %c2816 = arith.constant 2816 : index
    %c0_258 = arith.constant 0 : index
    %276 = vector.load %arg2[%c2816, %c0_258] : memref<3696x128xf32, #tpu.memory_space<vmem>>, vector<1x48xf32>
    %277 = vector.broadcast %276 : vector<1x48xf32> to vector<5x48xf32>
    %278 = arith.addf %275, %277 : vector<5x48xf32>
    %279 = arith.addf %278, %252 : vector<5x48xf32>
    %cst_259 = arith.constant 0.000000e+00 : f32
    %280 = vector.broadcast %cst_259 : f32 to vector<5x48xf32>
    %281 = arith.maximumf %279, %280 : vector<5x48xf32>
    %cst_260 = arith.constant 0.000000e+00 : f32
    %282 = vector.broadcast %cst_260 : f32 to vector<1x48xf32>
    %c0_261 = arith.constant 0 : index
    %c0_262 = arith.constant 0 : index
    %283 = vector.load %arg4[%c0_261, %c0_262] : memref<24x128xf32, #tpu.memory_space<vmem>>, vector<1x48xf32>
    tpu.vector_store %arg4[%c0_261, %c0_262], %282 {strides = array<i32>} : memref<24x128xf32, #tpu.memory_space<vmem>>, vector<1x48xf32>,
    %c1_263 = arith.constant 1 : index
    %c0_264 = arith.constant 0 : index
    %284 = vector.load %arg4[%c1_263, %c0_264] : memref<24x128xf32, #tpu.memory_space<vmem>>, vector<5x48xf32>
    tpu.vector_store %arg4[%c1_263, %c0_264], %281 {strides = array<i32>} : memref<24x128xf32, #tpu.memory_space<vmem>>, vector<5x48xf32>,
    %c6_265 = arith.constant 6 : index
    %c0_266 = arith.constant 0 : index
    %285 = vector.load %arg4[%c6_265, %c0_266] : memref<24x128xf32, #tpu.memory_space<vmem>>, vector<1x48xf32>
    tpu.vector_store %arg4[%c6_265, %c0_266], %282 {strides = array<i32>} : memref<24x128xf32, #tpu.memory_space<vmem>>, vector<1x48xf32>,
    %c0_267 = arith.constant 0 : index
    %c0_268 = arith.constant 0 : index
    %286 = vector.load %arg4[%c0_267, %c0_268] : memref<24x128xf32, #tpu.memory_space<vmem>>, vector<5x48xf32>
    %c2_269 = arith.constant 2 : index
    %c0_270 = arith.constant 0 : index
    %287 = vector.load %arg4[%c2_269, %c0_270] : memref<24x128xf32, #tpu.memory_space<vmem>>, vector<5x48xf32>
    %288 = tpu.concatenate %286, %281, %287 in 1 : vector<5x48xf32>, vector<5x48xf32>, vector<5x48xf32> -> vector<5x144xf32>
    %289 = tpu.iota {dimensions = array<i32: 0>} : vector<3x5xi32>
    %290 = tpu.iota {dimensions = array<i32: 1>} : vector<3x5xi32>
    %c2_i32_271 = arith.constant 2 : i32
    %291 = vector.broadcast %c2_i32_271 : i32 to vector<3x5xi32>
    %292 = arith.muli %291, %289 : vector<3x5xi32>
    %293 = arith.cmpi eq, %290, %292 : vector<3x5xi32>
    %cst_272 = arith.constant 1.000000e+00 : f32
    %cst_273 = arith.constant 0.000000e+00 : f32
    %294 = vector.broadcast %cst_272 : f32 to vector<3x5xf32>
    %295 = vector.broadcast %cst_273 : f32 to vector<3x5xf32>
    %296 = arith.select %293, %294, %295 : vector<3x5xi1>, vector<3x5xf32>
    %cst_274 = arith.constant dense<0.000000e+00> : vector<3x144xf32>
    %297 = tpu.matmul %296, %288, %cst_274 {dimension_numbers = #tpu.dot_dimension_numbers<[1], [0], [0], [1], [0, 0, 1, 1], [], []>} : vector<3x5xf32>, vector<5x144xf32>, vector<3x144xf32> -> vector<3x144xf32>
    %298 = vector.extract_strided_slice %297 {offsets = [0, 48], sizes = [3, 48], strides = [1, 1]} : vector<3x144xf32> to vector<3x48xf32>
    %cst_275 = arith.constant 0.000000e+00 : f32
    %299 = vector.broadcast %cst_275 : f32 to vector<3x6xf32>
    %cst_276 = arith.constant 0.000000e+00 : f32
    %300 = vector.broadcast %cst_276 : f32 to vector<3x6xf32>
    %301 = tpu.concatenate %299, %298, %300 in 1 : vector<3x6xf32>, vector<3x48xf32>, vector<3x6xf32> -> vector<3x60xf32>
    %c2824 = arith.constant 2824 : index
    %c0_277 = arith.constant 0 : index
    %302 = vector.load %arg2[%c2824, %c0_277] : memref<3696x128xf32, #tpu.memory_space<vmem>>, vector<144x60xf32>
    %cst_278 = arith.constant dense<0.000000e+00> : vector<3x60xf32>
    %303 = tpu.matmul %297, %302, %cst_278 {dimension_numbers = #tpu.dot_dimension_numbers<[1], [0], [0], [1], [0, 0, 1, 1], [], []>} : vector<3x144xf32>, vector<144x60xf32>, vector<3x60xf32> -> vector<3x60xf32>
    %c2968 = arith.constant 2968 : index
    %c0_279 = arith.constant 0 : index
    %304 = vector.load %arg2[%c2968, %c0_279] : memref<3696x128xf32, #tpu.memory_space<vmem>>, vector<1x60xf32>
    %305 = vector.broadcast %304 : vector<1x60xf32> to vector<3x60xf32>
    %306 = arith.addf %303, %305 : vector<3x60xf32>
    %cst_280 = arith.constant 0.000000e+00 : f32
    %307 = vector.broadcast %cst_280 : f32 to vector<3x60xf32>
    %308 = arith.maximumf %306, %307 : vector<3x60xf32>
    %cst_281 = arith.constant 0.000000e+00 : f32
    %309 = vector.broadcast %cst_281 : f32 to vector<1x60xf32>
    %c0_282 = arith.constant 0 : index
    %c0_283 = arith.constant 0 : index
    %310 = vector.load %arg4[%c0_282, %c0_283] : memref<24x128xf32, #tpu.memory_space<vmem>>, vector<1x60xf32>
    tpu.vector_store %arg4[%c0_282, %c0_283], %309 {strides = array<i32>} : memref<24x128xf32, #tpu.memory_space<vmem>>, vector<1x60xf32>,
    %c1_284 = arith.constant 1 : index
    %c0_285 = arith.constant 0 : index
    %311 = vector.load %arg4[%c1_284, %c0_285] : memref<24x128xf32, #tpu.memory_space<vmem>>, vector<3x60xf32>
    tpu.vector_store %arg4[%c1_284, %c0_285], %308 {strides = array<i32>} : memref<24x128xf32, #tpu.memory_space<vmem>>, vector<3x60xf32>,
    %c4 = arith.constant 4 : index
    %c0_286 = arith.constant 0 : index
    %312 = vector.load %arg4[%c4, %c0_286] : memref<24x128xf32, #tpu.memory_space<vmem>>, vector<1x60xf32>
    tpu.vector_store %arg4[%c4, %c0_286], %309 {strides = array<i32>} : memref<24x128xf32, #tpu.memory_space<vmem>>, vector<1x60xf32>,
    %c0_287 = arith.constant 0 : index
    %c0_288 = arith.constant 0 : index
    %313 = vector.load %arg4[%c0_287, %c0_288] : memref<24x128xf32, #tpu.memory_space<vmem>>, vector<3x60xf32>
    %c2_289 = arith.constant 2 : index
    %c0_290 = arith.constant 0 : index
    %314 = vector.load %arg4[%c2_289, %c0_290] : memref<24x128xf32, #tpu.memory_space<vmem>>, vector<3x60xf32>
    %315 = tpu.concatenate %313, %308, %314 in 1 : vector<3x60xf32>, vector<3x60xf32>, vector<3x60xf32> -> vector<3x180xf32>
    %c2976 = arith.constant 2976 : index
    %c0_291 = arith.constant 0 : index
    %316 = vector.load %arg2[%c2976, %c0_291] : memref<3696x128xf32, #tpu.memory_space<vmem>>, vector<180x60xf32>
    %cst_292 = arith.constant dense<0.000000e+00> : vector<3x60xf32>
    %317 = tpu.matmul %315, %316, %cst_292 {dimension_numbers = #tpu.dot_dimension_numbers<[1], [0], [0], [1], [0, 0, 1, 1], [], []>} : vector<3x180xf32>, vector<180x60xf32>, vector<3x60xf32> -> vector<3x60xf32>
    %c3160 = arith.constant 3160 : index
    %c0_293 = arith.constant 0 : index
    %318 = vector.load %arg2[%c3160, %c0_293] : memref<3696x128xf32, #tpu.memory_space<vmem>>, vector<1x60xf32>
    %319 = vector.broadcast %318 : vector<1x60xf32> to vector<3x60xf32>
    %320 = arith.addf %317, %319 : vector<3x60xf32>
    %321 = arith.addf %320, %301 : vector<3x60xf32>
    %cst_294 = arith.constant 0.000000e+00 : f32
    %322 = vector.broadcast %cst_294 : f32 to vector<3x60xf32>
    %323 = arith.maximumf %321, %322 : vector<3x60xf32>
    %cst_295 = arith.constant 0.000000e+00 : f32
    %324 = vector.broadcast %cst_295 : f32 to vector<1x60xf32>
    %c0_296 = arith.constant 0 : index
    %c0_297 = arith.constant 0 : index
    %325 = vector.load %arg4[%c0_296, %c0_297] : memref<24x128xf32, #tpu.memory_space<vmem>>, vector<1x60xf32>
    tpu.vector_store %arg4[%c0_296, %c0_297], %324 {strides = array<i32>} : memref<24x128xf32, #tpu.memory_space<vmem>>, vector<1x60xf32>,
    %c1_298 = arith.constant 1 : index
    %c0_299 = arith.constant 0 : index
    %326 = vector.load %arg4[%c1_298, %c0_299] : memref<24x128xf32, #tpu.memory_space<vmem>>, vector<3x60xf32>
    tpu.vector_store %arg4[%c1_298, %c0_299], %323 {strides = array<i32>} : memref<24x128xf32, #tpu.memory_space<vmem>>, vector<3x60xf32>,
    %c4_300 = arith.constant 4 : index
    %c0_301 = arith.constant 0 : index
    %327 = vector.load %arg4[%c4_300, %c0_301] : memref<24x128xf32, #tpu.memory_space<vmem>>, vector<1x60xf32>
    tpu.vector_store %arg4[%c4_300, %c0_301], %324 {strides = array<i32>} : memref<24x128xf32, #tpu.memory_space<vmem>>, vector<1x60xf32>,
    %c0_302 = arith.constant 0 : index
    %c0_303 = arith.constant 0 : index
    %328 = vector.load %arg4[%c0_302, %c0_303] : memref<24x128xf32, #tpu.memory_space<vmem>>, vector<3x60xf32>
    %c2_304 = arith.constant 2 : index
    %c0_305 = arith.constant 0 : index
    %329 = vector.load %arg4[%c2_304, %c0_305] : memref<24x128xf32, #tpu.memory_space<vmem>>, vector<3x60xf32>
    %330 = tpu.concatenate %328, %323, %329 in 1 : vector<3x60xf32>, vector<3x60xf32>, vector<3x60xf32> -> vector<3x180xf32>
    %c3168 = arith.constant 3168 : index
    %c0_306 = arith.constant 0 : index
    %331 = vector.load %arg2[%c3168, %c0_306] : memref<3696x128xf32, #tpu.memory_space<vmem>>, vector<180x60xf32>
    %cst_307 = arith.constant dense<0.000000e+00> : vector<3x60xf32>
    %332 = tpu.matmul %330, %331, %cst_307 {dimension_numbers = #tpu.dot_dimension_numbers<[1], [0], [0], [1], [0, 0, 1, 1], [], []>} : vector<3x180xf32>, vector<180x60xf32>, vector<3x60xf32> -> vector<3x60xf32>
    %c3352 = arith.constant 3352 : index
    %c0_308 = arith.constant 0 : index
    %333 = vector.load %arg2[%c3352, %c0_308] : memref<3696x128xf32, #tpu.memory_space<vmem>>, vector<1x60xf32>
    %334 = vector.broadcast %333 : vector<1x60xf32> to vector<3x60xf32>
    %335 = arith.addf %332, %334 : vector<3x60xf32>
    %cst_309 = arith.constant 0.000000e+00 : f32
    %336 = vector.broadcast %cst_309 : f32 to vector<3x60xf32>
    %337 = arith.maximumf %335, %336 : vector<3x60xf32>
    %cst_310 = arith.constant 0.000000e+00 : f32
    %338 = vector.broadcast %cst_310 : f32 to vector<1x60xf32>
    %c0_311 = arith.constant 0 : index
    %c0_312 = arith.constant 0 : index
    %339 = vector.load %arg4[%c0_311, %c0_312] : memref<24x128xf32, #tpu.memory_space<vmem>>, vector<1x60xf32>
    tpu.vector_store %arg4[%c0_311, %c0_312], %338 {strides = array<i32>} : memref<24x128xf32, #tpu.memory_space<vmem>>, vector<1x60xf32>,
    %c1_313 = arith.constant 1 : index
    %c0_314 = arith.constant 0 : index
    %340 = vector.load %arg4[%c1_313, %c0_314] : memref<24x128xf32, #tpu.memory_space<vmem>>, vector<3x60xf32>
    tpu.vector_store %arg4[%c1_313, %c0_314], %337 {strides = array<i32>} : memref<24x128xf32, #tpu.memory_space<vmem>>, vector<3x60xf32>,
    %c4_315 = arith.constant 4 : index
    %c0_316 = arith.constant 0 : index
    %341 = vector.load %arg4[%c4_315, %c0_316] : memref<24x128xf32, #tpu.memory_space<vmem>>, vector<1x60xf32>
    tpu.vector_store %arg4[%c4_315, %c0_316], %338 {strides = array<i32>} : memref<24x128xf32, #tpu.memory_space<vmem>>, vector<1x60xf32>,
    %c0_317 = arith.constant 0 : index
    %c0_318 = arith.constant 0 : index
    %342 = vector.load %arg4[%c0_317, %c0_318] : memref<24x128xf32, #tpu.memory_space<vmem>>, vector<3x60xf32>
    %c2_319 = arith.constant 2 : index
    %c0_320 = arith.constant 0 : index
    %343 = vector.load %arg4[%c2_319, %c0_320] : memref<24x128xf32, #tpu.memory_space<vmem>>, vector<3x60xf32>
    %344 = tpu.concatenate %342, %337, %343 in 1 : vector<3x60xf32>, vector<3x60xf32>, vector<3x60xf32> -> vector<3x180xf32>
    %c3360 = arith.constant 3360 : index
    %c0_321 = arith.constant 0 : index
    %345 = vector.load %arg2[%c3360, %c0_321] : memref<3696x128xf32, #tpu.memory_space<vmem>>, vector<180x60xf32>
    %cst_322 = arith.constant dense<0.000000e+00> : vector<3x60xf32>
    %346 = tpu.matmul %344, %345, %cst_322 {dimension_numbers = #tpu.dot_dimension_numbers<[1], [0], [0], [1], [0, 0, 1, 1], [], []>} : vector<3x180xf32>, vector<180x60xf32>, vector<3x60xf32> -> vector<3x60xf32>
    %c3544 = arith.constant 3544 : index
    %c0_323 = arith.constant 0 : index
    %347 = vector.load %arg2[%c3544, %c0_323] : memref<3696x128xf32, #tpu.memory_space<vmem>>, vector<1x60xf32>
    %348 = vector.broadcast %347 : vector<1x60xf32> to vector<3x60xf32>
    %349 = arith.addf %346, %348 : vector<3x60xf32>
    %350 = arith.addf %349, %323 : vector<3x60xf32>
    %cst_324 = arith.constant 0.000000e+00 : f32
    %351 = vector.broadcast %cst_324 : f32 to vector<3x60xf32>
    %352 = arith.maximumf %350, %351 : vector<3x60xf32>
    %cst_325 = arith.constant dense<0.000000e+00> : vector<60xf32>
    %353 = vector.multi_reduction <add>, %352, %cst_325 [0] : vector<3x60xf32> to vector<60xf32>
    %354 = vector.shape_cast %353 : vector<60xf32> to vector<1x60xf32>
    %cst_326 = arith.constant 3.000000e+00 : f32
    %355 = vector.broadcast %cst_326 : f32 to vector<1x60xf32>
    %356 = arith.divf %354, %355 : vector<1x60xf32>
    %c3552 = arith.constant 3552 : index
    %c0_327 = arith.constant 0 : index
    %357 = vector.load %arg2[%c3552, %c0_327] : memref<3696x128xf32, #tpu.memory_space<vmem>>, vector<60x60xf32>
    %cst_328 = arith.constant dense<0.000000e+00> : vector<1x60xf32>
    %358 = tpu.matmul %356, %357, %cst_328 {dimension_numbers = #tpu.dot_dimension_numbers<[1], [0], [0], [1], [0, 0, 1, 1], [], []>} : vector<1x60xf32>, vector<60x60xf32>, vector<1x60xf32> -> vector<1x60xf32>
    %c3616 = arith.constant 3616 : index
    %c0_329 = arith.constant 0 : index
    %359 = vector.load %arg2[%c3616, %c0_329] : memref<3696x128xf32, #tpu.memory_space<vmem>>, vector<1x60xf32>
    %360 = arith.addf %358, %359 : vector<1x60xf32>
    %cst_330 = arith.constant 0.000000e+00 : f32
    %361 = vector.broadcast %cst_330 : f32 to vector<1x60xf32>
    %362 = arith.maximumf %360, %361 : vector<1x60xf32>
    %c3624 = arith.constant 3624 : index
    %c0_331 = arith.constant 0 : index
    %363 = vector.load %arg2[%c3624, %c0_331] : memref<3696x128xf32, #tpu.memory_space<vmem>>, vector<60x2xf32>
    %cst_332 = arith.constant dense<0.000000e+00> : vector<1x2xf32>
    %364 = tpu.matmul %362, %363, %cst_332 {dimension_numbers = #tpu.dot_dimension_numbers<[1], [0], [0], [1], [0, 0, 1, 1], [], []>} : vector<1x60xf32>, vector<60x2xf32>, vector<1x2xf32> -> vector<1x2xf32>
    %c3688 = arith.constant 3688 : index
    %c0_333 = arith.constant 0 : index
    %365 = vector.load %arg2[%c3688, %c0_333] : memref<3696x128xf32, #tpu.memory_space<vmem>>, vector<1x2xf32>
    %366 = arith.addf %364, %365 : vector<1x2xf32>
    %cst_334 = arith.constant dense<0xFF800000> : vector<1xf32>
    %367 = vector.multi_reduction <maximumf>, %366, %cst_334 [1] : vector<1x2xf32> to vector<1xf32>
    %368 = vector.shape_cast %367 : vector<1xf32> to vector<1x1xf32>
    %369 = vector.broadcast %368 : vector<1x1xf32> to vector<1x2xf32>
    %370 = arith.subf %366, %369 : vector<1x2xf32>
    %371 = math.exp %370 : vector<1x2xf32>
    %cst_335 = arith.constant dense<0.000000e+00> : vector<1xf32>
    %372 = vector.multi_reduction <add>, %371, %cst_335 [1] : vector<1x2xf32> to vector<1xf32>
    %373 = vector.shape_cast %372 : vector<1xf32> to vector<1x1xf32>
    %374 = vector.broadcast %373 : vector<1x1xf32> to vector<1x2xf32>
    %375 = arith.divf %371, %374 : vector<1x2xf32>
    %c0_336 = arith.constant 0 : index
    %c0_337 = arith.constant 0 : index
    %c0_338 = arith.constant 0 : index
    %376 = vector.load %arg3[%c0_336, %c0_337, %c0_338] : memref<1x1x2xf32, #tpu.memory_space<vmem>>, vector<1x1x2xf32>
    %377 = vector.shape_cast %376 : vector<1x1x2xf32> to vector<1x2xf32>
    %378 = vector.shape_cast %375 : vector<1x2xf32> to vector<1x1x2xf32>
    tpu.vector_store %arg3[%c0_336, %c0_337, %c0_338], %378 {strides = array<i32>} : memref<1x1x2xf32, #tpu.memory_space<vmem>>, vector<1x1x2xf32>,
    return
  }
  func.func @transform_0(%arg0: i32) -> (i32, i32, i32) {
    %c0_i32 = arith.constant 0 : i32
    %c0_i32_0 = arith.constant 0 : i32
    %c0_i32_1 = arith.constant 0 : i32
    return %arg0, %c0_i32, %c0_i32_0 : i32, i32, i32
  }
  func.func @transform_1(%arg0: i32) -> (i32, i32) {
    %c0_i32 = arith.constant 0 : i32
    %c0_i32_0 = arith.constant 0 : i32
    %c0_i32_1 = arith.constant 0 : i32
    return %c0_i32, %c0_i32_0 : i32, i32
  }
  func.func @transform_2(%arg0: i32) -> (i32, i32, i32) {
    %c0_i32 = arith.constant 0 : i32
    %c0_i32_0 = arith.constant 0 : i32
    %c0_i32_1 = arith.constant 0 : i32
    return %arg0, %c0_i32, %c0_i32_0 : i32, i32, i32
  }
}

</mosaic_0001>

<llo_original>
// kernel: forward.1
$region0: #{forward.1}
  #allocation0 [shape = 'u32[]', space=smem, size = 0x4, offset = 0x4, fixed_abs, tag = 'smem constant byte address 0x4 - core index']
  #allocation1 [shape = 'u32[144,128]{1,0:T(1,128)}', space=vmem, size = 0x12000, scoped, tag = 'internal scratch']
  #allocation2 [shape = 'f32[24,128]{1,0:T(8,128)}', space=vmem, size = 0x3000, scoped, tag = 'scratch operand']
  %s0 = inlined_call_operand.vmem [shape: f32[2,17,1152], index: 0, kind: input, shape index: {}]
  %s1 = inlined_call_operand.vmem [shape: f32[3696,128], index: 1, kind: input, shape index: {}]
  %s2 = inlined_call_operand.hbm [shape: f32[2,1,2], index: 2, kind: output, shape index: {}]
  %s3 = sld [smem:[#allocation0]]
  $region41: #{forward.1} parent=0
    _
  %s5 = ssub.s32 1, %s3
  %s6 = scalar_select 0, %s5, %s3
  $region1: #{forward.1} parent=0
    #allocation3 [shape = 'u8[1024]{0}', space=vmem, size = 0x400, scoped, tag = 'output window, operand 0']
    #allocation4 [shape = 's32[2]{0}', space=sflag, size = 0x8, scoped, tag = 'scoped memory for forward.1']
    %7 = vsyncpa [#allocation4], 0
    %s8 = scalar_lea.sflag [#allocation4], 1
    %9 = vsyncpa %s8, 0
    loop: start=0, step=1, limit=4
    $region2: #{forward.1} parent=1 // loop_pre_header
      _
    $region3: #{forward.1} parent=1 // loop_header
      %s11 = sphi 0, %s15
      %p12 = scmp.ge.s32.totalorder %s11, 4
      %s21 = sphi 0, %s23
      %s24 = sphi 0, %s21
      %s25 = sphi 0, %s24
      %s41 = sphi 0, %s25
      %s45 = sphi 0, %s45
      %s47 = sphi 0, %s45
      %s48 = sphi 0, %s47
      %s62 = sphi 0, %s48
      %s68 = sphi 0, %s70
      %s71 = sphi 0, %s68
      %s72 = sphi 0, %s71
      %s88 = sphi 0, %s72
    $region4: #{forward.1} parent=1 // loop_header_branch
      %14 = sbr.rel (%p12) target = $region8
    $region5: #{forward.1} parent=1 // loop_body
      %s16 = ssub.s32 %s11, 1
      %s17 = ssub.s32 %s11, 2
      %s18 = sadd.s32 %s11, 1
      %s19 = ssub.s32 %s11, %s18
      %p20 = scmp.eq.s32.totalorder %s19, 0
      %s22 = sadd.s32 %s21, 1
      %s23 = scalar_select %p20, %s21, %s22
      %p26 = pneg %p20
      %p27 = scmp.eq.s32.totalorder %s11, 1
      %p28 = por %p26, %p27
      %p29 = scmp.ne.s32.totalorder %s21, %s24
      %p30 = scmp.eq.s32.totalorder %s11, 0
      %p31 = por %p29, %p30
      %p32 = scmp.ne.s32.totalorder %s21, %s24
      %p33 = scmp.eq.s32.totalorder %s16, 1
      %p34 = por %p32, %p33
      %p35 = scmp.ne.s32.totalorder %s24, %s25
      %p36 = scmp.eq.s32.totalorder %s16, 0
      %p37 = por %p35, %p36
      %p38 = scmp.ne.s32.totalorder %s24, %s25
      %p39 = scmp.eq.s32.totalorder %s17, 1
      %p40 = por %p38, %p39
      %p42 = scmp.ne.s32.totalorder %s25, %s41
      %p43 = scmp.eq.s32.totalorder %s17, 0
      %p44 = por %p42, %p43
      %s46 = sadd.s32 %s45, 1
      %p49 = scmp.eq.s32.totalorder %s11, 1
      %p50 = scmp.ne.s32.totalorder %s45, %s47
      %p51 = scmp.eq.s32.totalorder %s11, 0
      %p52 = por %p50, %p51
      %p53 = scmp.ne.s32.totalorder %s45, %s47
      %p54 = scmp.eq.s32.totalorder %s16, 1
      %p55 = por %p53, %p54
      %p56 = scmp.ne.s32.totalorder %s47, %s48
      %p57 = scmp.eq.s32.totalorder %s16, 0
      %p58 = por %p56, %p57
      %p59 = scmp.ne.s32.totalorder %s47, %s48
      %p60 = scmp.eq.s32.totalorder %s17, 1
      %p61 = por %p59, %p60
      %p63 = scmp.ne.s32.totalorder %s48, %s62
      %p64 = scmp.eq.s32.totalorder %s17, 0
      %p65 = por %p63, %p64
      %s66 = ssub.s32 %s11, %s18
      %p67 = scmp.eq.s32.totalorder %s66, 0
      %s69 = sadd.s32 %s68, 1
      %s70 = scalar_select %p67, %s68, %s69
      %p73 = pneg %p67
      %p74 = scmp.eq.s32.totalorder %s11, 1
      %p75 = por %p73, %p74
      %p76 = scmp.ne.s32.totalorder %s68, %s71
      %p77 = scmp.eq.s32.totalorder %s11, 0
      %p78 = por %p76, %p77
      %p79 = scmp.ne.s32.totalorder %s68, %s71
      %p80 = scmp.eq.s32.totalorder %s16, 1
      %p81 = por %p79, %p80
      %p82 = scmp.ne.s32.totalorder %s71, %s72
      %p83 = scmp.eq.s32.totalorder %s16, 0
      %p84 = por %p82, %p83
      %p85 = scmp.ne.s32.totalorder %s71, %s72
      %p86 = scmp.eq.s32.totalorder %s17, 1
      %p87 = por %p85, %p86
      %p89 = scmp.ne.s32.totalorder %s72, %s88
      %p90 = scmp.eq.s32.totalorder %s17, 0
      %p91 = por %p89, %p90
      %p92 = scmp.le.s32.totalorder 1, %s11
      %p93 = scmp.lt.s32.totalorder %s11, 3
      %p94 = pnand %p92, %p93
      %p95 = pneg %p94
      // Predicated region
      $region9: #{forward.1} parent=5 // pred_check
        _
      $region10: #{forward.1} parent=5 // pred_check_branch
        %97 = sbr.rel (%p94) target = $region12
      $region11: #{forward.1} parent=5 // pred_region
        %s98 = ssub.s32 %s11, 1
        // Predicated region
        $region13: #{forward.1} parent=11 // pred_check
          %p99 = pneg %p58
        $region14: #{forward.1} parent=11 // pred_check_branch
          %101 = sbr.rel (%p99) target = $region16
        $region15: #{forward.1} parent=11 // pred_region
          _
        $region16: #{forward.1} parent=11 // pred_fallthru
          _
      $region12: #{forward.1} parent=5 // pred_fallthru
        _
      %p102 = scmp.lt.s32.totalorder %s11, 2
      // Predicated region
      $region17: #{forward.1} parent=5 // pred_check
        %p103 = pneg %p102
      $region18: #{forward.1} parent=5 // pred_check_branch
        %105 = sbr.rel (%p103) target = $region20
      $region19: #{forward.1} parent=5 // pred_region
        // Predicated region
        $region21: #{forward.1} parent=19 // pred_check
          %p106 = pneg %p31
        $region22: #{forward.1} parent=19 // pred_check_branch
          %108 = sbr.rel (%p106) target = $region24
        $region23: #{forward.1} parent=19 // pred_region
          %p109 = scmp.lt.s32.totalorder %s11, 1
          %s110 = scalar_select %p109, %s11, 1
          %s111 = smul.addr %s110, 27
          %s112 = smul.addr %s111, 8
          %s113 = scalar_lea.vmem %s0, %s112
        $region24: #{forward.1} parent=19 // pred_fallthru
          _
      $region20: #{forward.1} parent=5 // pred_fallthru
        _
      %p114 = scmp.le.s32.totalorder 1, %s11
      %p115 = scmp.lt.s32.totalorder %s11, 3
      %p116 = pnand %p114, %p115
      %p117 = pneg %p116
      // Predicated region
      $region25: #{forward.1} parent=5 // pred_check
        _
      $region26: #{forward.1} parent=5 // pred_check_branch
        %119 = sbr.rel (%p116) target = $region28
      $region27: #{forward.1} parent=5 // pred_region
        %s120 = ssub.s32 %s11, 1
        %p121 = scmp.lt.s32.totalorder %s16, 1
        %s122 = scalar_select %p121, %s16, 1
        %s123 = smul.addr %s122, 27
        %s124 = smul.addr %s123, 8
        %s125 = scalar_lea.vmem %s0, %s124
        %p126 = pneg %p37
        %p127 = pneg %p34
        %p128 = pneg %p58
        %p129 = pneg %p55
        %p130 = pneg %p84
        %p131 = pneg %p81
        %s132 = sand.u32 %s71, 1
        %s133 = scalar_lea.sflag [#allocation4], %s132
        %s134 = sand.u32 %s71, 1
        %s135 = scalar_lea.vmem [#allocation3], %s134
        %p136 = scmp.lt.s32.totalorder %s16, 1
        %s137 = scalar_select %p136, %s16, 1
        %s138 = smul.addr %s137, 27
        %s139 = smul.addr %s138, 8
        %s140 = scalar_lea.vmem %s0, %s139
        %v141 = vld [vmem:[%s140] sm:$0xff]
        %v142 = vld [vmem:[%s140 + $0x8] sm:$0xff]
        %v143 = vld [vmem:[%s140 + $0x10] sm:$0xff]
        %v144 = vld [vmem:[%s140 + $0x18] sm:$0xff]
        %v145 = vld [vmem:[%s140 + $0x20] sm:$0xff]
        %v146 = vld [vmem:[%s140 + $0x28] sm:$0xff]
        %v147 = vld [vmem:[%s140 + $0x30] sm:$0xff]
        %v148 = vld [vmem:[%s140 + $0x38] sm:$0xff]
        %v149 = vld [vmem:[%s140 + $0x40] sm:$0xff]
        %v150 = vld [vmem:[%s140 + $0x48] sm:$0xff]
        %v151 = vld [vmem:[%s140 + $0x50] sm:$0xff]
        %v152 = vld [vmem:[%s140 + $0x58] sm:$0xff]
        %v153 = vld [vmem:[%s140 + $0x60] sm:$0xff]
        %v154 = vld [vmem:[%s140 + $0x68] sm:$0xff]
        %v155 = vld [vmem:[%s140 + $0x70] sm:$0xff]
        %v156 = vld [vmem:[%s140 + $0x78] sm:$0xff]
        %v157 = vld [vmem:[%s140 + $0x80] sm:$0xff]
        %v158 = vld [vmem:[%s140 + $0x88] sm:$0xff]
        %v159 = vld [vmem:[%s140 + $0x90] sm:$0x1]
        %v160 = vld [vmem:[%s140 + $0x98] sm:$0x1]
        %v161 = vld [vmem:[%s140 + $0xa0] sm:$0x1]
        %v162 = vld [vmem:[%s140 + $0xa8] sm:$0x1]
        %v163 = vld [vmem:[%s140 + $0xb0] sm:$0x1]
        %v164 = vld [vmem:[%s140 + $0xb8] sm:$0x1]
        %v165 = vld [vmem:[%s140 + $0xc0] sm:$0x1]
        %v166 = vld [vmem:[%s140 + $0xc8] sm:$0x1]
        %v167 = vld [vmem:[%s140 + $0xd0] sm:$0x1]
        %v168 = vld [vmem:[%s1] sm:$0xff]
        %v169 = vld [vmem:[%s1 + $0x8] sm:$0xff]
        %v170 = vld [vmem:[%s1 + $0x10] sm:$0xff]
        %v171 = vld [vmem:[%s1 + $0x18] sm:$0xff]
        %v172 = vld [vmem:[%s1 + $0x20] sm:$0xff]
        %v173 = vld [vmem:[%s1 + $0x28] sm:$0xff]
        %v174 = vld [vmem:[%s1 + $0x30] sm:$0xff]
        %v175 = vld [vmem:[%s1 + $0x38] sm:$0xff]
        %v176 = vld [vmem:[%s1 + $0x40] sm:$0xff]
        %v177 = vld [vmem:[%s1 + $0x48] sm:$0xff]
        %v178 = vld [vmem:[%s1 + $0x50] sm:$0xff]
        %v179 = vld [vmem:[%s1 + $0x58] sm:$0xff]
        %v180 = vld [vmem:[%s1 + $0x60] sm:$0xff]
        %v181 = vld [vmem:[%s1 + $0x68] sm:$0xff]
        %v182 = vld [vmem:[%s1 + $0x70] sm:$0xff]
        %v183 = vld [vmem:[%s1 + $0x78] sm:$0xff]
        %v184 = vld [vmem:[%s1 + $0x80] sm:$0xff]
        %v185 = vld [vmem:[%s1 + $0x88] sm:$0xff]
        %v186 = vld [vmem:[%s1 + $0x90] sm:$0xff]
        %v187 = vld [vmem:[%s1 + $0x98] sm:$0xff]
        %v188 = vld [vmem:[%s1 + $0xa0] sm:$0xff]
        %v189 = vld [vmem:[%s1 + $0xa8] sm:$0xff]
        %v190 = vld [vmem:[%s1 + $0xb0] sm:$0xff]
        %v191 = vld [vmem:[%s1 + $0xb8] sm:$0xff]
        %v192 = vld [vmem:[%s1 + $0xc0] sm:$0xff]
        %v193 = vld [vmem:[%s1 + $0xc8] sm:$0xff]
        %v194 = vld [vmem:[%s1 + $0xd0] sm:$0xff]
        %v195 = vld [vmem:[%s1 + $0xd8] sm:$0xff]
        %v196 = vld [vmem:[%s1 + $0xe0] sm:$0xff]
        %v197 = vld [vmem:[%s1 + $0xe8] sm:$0xff]
        %v198 = vld [vmem:[%s1 + $0xf0] sm:$0xff]
        %v199 = vld [vmem:[%s1 + $0xf8] sm:$0xff]
        %v200 = vld [vmem:[%s1 + $0x100] sm:$0xff]
        %v201 = vld [vmem:[%s1 + $0x108] sm:$0xff]
        %v202 = vld [vmem:[%s1 + $0x110] sm:$0xff]
        %v203 = vld [vmem:[%s1 + $0x118] sm:$0xff]
        %v204 = vld [vmem:[%s1 + $0x120] sm:$0xff]
        %v205 = vld [vmem:[%s1 + $0x128] sm:$0xff]
        %v206 = vld [vmem:[%s1 + $0x130] sm:$0xff]
        %v207 = vld [vmem:[%s1 + $0x138] sm:$0xff]
        %v208 = vld [vmem:[%s1 + $0x140] sm:$0xff]
        %v209 = vld [vmem:[%s1 + $0x148] sm:$0xff]
        %v210 = vld [vmem:[%s1 + $0x150] sm:$0xff]
        %v211 = vld [vmem:[%s1 + $0x158] sm:$0xff]
        %v212 = vld [vmem:[%s1 + $0x160] sm:$0xff]
        %v213 = vld [vmem:[%s1 + $0x168] sm:$0xff]
        %v214 = vld [vmem:[%s1 + $0x170] sm:$0xff]
        %v215 = vld [vmem:[%s1 + $0x178] sm:$0xff]
        %v216 = vld [vmem:[%s1 + $0x180] sm:$0xff]
        %v217 = vld [vmem:[%s1 + $0x188] sm:$0xff]
        %v218 = vld [vmem:[%s1 + $0x190] sm:$0xff]
        %v219 = vld [vmem:[%s1 + $0x198] sm:$0xff]
        %v220 = vld [vmem:[%s1 + $0x1a0] sm:$0xff]
        %v221 = vld [vmem:[%s1 + $0x1a8] sm:$0xff]
        %v222 = vld [vmem:[%s1 + $0x1b0] sm:$0xff]
        %v223 = vld [vmem:[%s1 + $0x1b8] sm:$0xff]
        %v224 = vld [vmem:[%s1 + $0x1c0] sm:$0xff]
        %v225 = vld [vmem:[%s1 + $0x1c8] sm:$0xff]
        %v226 = vld [vmem:[%s1 + $0x1d0] sm:$0xff]
        %v227 = vld [vmem:[%s1 + $0x1d8] sm:$0xff]
        %v228 = vld [vmem:[%s1 + $0x1e0] sm:$0xff]
        %v229 = vld [vmem:[%s1 + $0x1e8] sm:$0xff]
        %v230 = vld [vmem:[%s1 + $0x1f0] sm:$0xff]
        %v231 = vld [vmem:[%s1 + $0x1f8] sm:$0xff]
        %v232 = vld [vmem:[%s1 + $0x200] sm:$0xff]
        %v233 = vld [vmem:[%s1 + $0x208] sm:$0xff]
        %v234 = vld [vmem:[%s1 + $0x210] sm:$0xff]
        %v235 = vld [vmem:[%s1 + $0x218] sm:$0xff]
        %v236 = vld [vmem:[%s1 + $0x220] sm:$0xff]
        %v237 = vld [vmem:[%s1 + $0x228] sm:$0xff]
        %v238 = vld [vmem:[%s1 + $0x230] sm:$0xff]
        %v239 = vld [vmem:[%s1 + $0x238] sm:$0xff]
        %v240 = vld [vmem:[%s1 + $0x240] sm:$0xff]
        %v241 = vld [vmem:[%s1 + $0x248] sm:$0xff]
        %v242 = vld [vmem:[%s1 + $0x250] sm:$0xff]
        %v243 = vld [vmem:[%s1 + $0x258] sm:$0xff]
        %v244 = vld [vmem:[%s1 + $0x260] sm:$0xff]
        %v245 = vld [vmem:[%s1 + $0x268] sm:$0xff]
        %v246 = vld [vmem:[%s1 + $0x270] sm:$0xff]
        %v247 = vld [vmem:[%s1 + $0x278] sm:$0xff]
        %v248 = vld [vmem:[%s1 + $0x280] sm:$0xff]
        %v249 = vld [vmem:[%s1 + $0x288] sm:$0xff]
        %v250 = vld [vmem:[%s1 + $0x290] sm:$0xff]
        %v251 = vld [vmem:[%s1 + $0x298] sm:$0xff]
        %v252 = vld [vmem:[%s1 + $0x2a0] sm:$0xff]
        %v253 = vld [vmem:[%s1 + $0x2a8] sm:$0xff]
        %v254 = vld [vmem:[%s1 + $0x2b0] sm:$0xff]
        %v255 = vld [vmem:[%s1 + $0x2b8] sm:$0xff]
        %v256 = vld [vmem:[%s1 + $0x2c0] sm:$0xff]
        %v257 = vld [vmem:[%s1 + $0x2c8] sm:$0xff]
        %v258 = vld [vmem:[%s1 + $0x2d0] sm:$0xff]
        %v259 = vld [vmem:[%s1 + $0x2d8] sm:$0xff]
        %v260 = vld [vmem:[%s1 + $0x2e0] sm:$0xff]
        %v261 = vld [vmem:[%s1 + $0x2e8] sm:$0xff]
        %v262 = vld [vmem:[%s1 + $0x2f0] sm:$0xff]
        %v263 = vld [vmem:[%s1 + $0x2f8] sm:$0xff]
        %v264 = vld [vmem:[%s1 + $0x300] sm:$0xff]
        %v265 = vld [vmem:[%s1 + $0x308] sm:$0xff]
        %v266 = vld [vmem:[%s1 + $0x310] sm:$0xff]
        %v267 = vld [vmem:[%s1 + $0x318] sm:$0xff]
        %v268 = vld [vmem:[%s1 + $0x320] sm:$0xff]
        %v269 = vld [vmem:[%s1 + $0x328] sm:$0xff]
        %v270 = vld [vmem:[%s1 + $0x330] sm:$0xff]
        %v271 = vld [vmem:[%s1 + $0x338] sm:$0xff]
        %v272 = vld [vmem:[%s1 + $0x340] sm:$0xff]
        %v273 = vld [vmem:[%s1 + $0x348] sm:$0xff]
        %v274 = vld [vmem:[%s1 + $0x350] sm:$0xff]
        %v275 = vld [vmem:[%s1 + $0x358] sm:$0xff]
        %v276 = vld [vmem:[%s1 + $0x360] sm:$0xff]
        %v277 = vld [vmem:[%s1 + $0x368] sm:$0xff]
        %v278 = vld [vmem:[%s1 + $0x370] sm:$0xff]
        %v279 = vld [vmem:[%s1 + $0x378] sm:$0xff]
        %v280 = vld [vmem:[%s1 + $0x380] sm:$0xff]
        %v281 = vld [vmem:[%s1 + $0x388] sm:$0xff]
        %v282 = vld [vmem:[%s1 + $0x390] sm:$0xff]
        %v283 = vld [vmem:[%s1 + $0x398] sm:$0xff]
        %v284 = vld [vmem:[%s1 + $0x3a0] sm:$0xff]
        %v285 = vld [vmem:[%s1 + $0x3a8] sm:$0xff]
        %v286 = vld [vmem:[%s1 + $0x3b0] sm:$0xff]
        %v287 = vld [vmem:[%s1 + $0x3b8] sm:$0xff]
        %v288 = vld [vmem:[%s1 + $0x3c0] sm:$0xff]
        %v289 = vld [vmem:[%s1 + $0x3c8] sm:$0xff]
        %v290 = vld [vmem:[%s1 + $0x3d0] sm:$0xff]
        %v291 = vld [vmem:[%s1 + $0x3d8] sm:$0xff]
        %v292 = vld [vmem:[%s1 + $0x3e0] sm:$0xff]
        %v293 = vld [vmem:[%s1 + $0x3e8] sm:$0xff]
        %v294 = vld [vmem:[%s1 + $0x3f0] sm:$0xff]
        %v295 = vld [vmem:[%s1 + $0x3f8] sm:$0xff]
        %v296 = vld [vmem:[%s1 + $0x400] sm:$0xff]
        %v297 = vld [vmem:[%s1 + $0x408] sm:$0xff]
        %v298 = vld [vmem:[%s1 + $0x410] sm:$0xff]
        %v299 = vld [vmem:[%s1 + $0x418] sm:$0xff]
        %v300 = vld [vmem:[%s1 + $0x420] sm:$0xff]
        %v301 = vld [vmem:[%s1 + $0x428] sm:$0xff]
        %v302 = vld [vmem:[%s1 + $0x430] sm:$0xff]
        %v303 = vld [vmem:[%s1 + $0x438] sm:$0xff]
        %v304 = vld [vmem:[%s1 + $0x440] sm:$0xff]
        %v305 = vld [vmem:[%s1 + $0x448] sm:$0xff]
        %v306 = vld [vmem:[%s1 + $0x450] sm:$0xff]
        %v307 = vld [vmem:[%s1 + $0x458] sm:$0xff]
        %v308 = vld [vmem:[%s1 + $0x460] sm:$0xff]
        %v309 = vld [vmem:[%s1 + $0x468] sm:$0xff]
        %v310 = vld [vmem:[%s1 + $0x470] sm:$0xff]
        %v311 = vld [vmem:[%s1 + $0x478] sm:$0xff]
        %312 = vmatprep.subr.mxu0 0.0
        %313 = vmatpush1.msra.mxu0 %v183
        %314 = vmatprep.subr.mxu0 0.0
        %315 = vmatpush1.msra.mxu0 %v182
        %316 = vmatprep.subr.mxu0 0.0
        %317 = vmatpush1.msra.mxu0 %v181
        %318 = vmatprep.subr.mxu0 0.0
        %319 = vmatpush1.msra.mxu0 %v180
        %320 = vmatprep.subr.mxu0 0.0
        %321 = vmatpush1.msra.mxu0 %v179
        %322 = vmatprep.subr.mxu0 0.0
        %323 = vmatpush1.msra.mxu0 %v178
        %324 = vmatprep.subr.mxu0 0.0
        %325 = vmatpush1.msra.mxu0 %v177
        %326 = vmatprep.subr.mxu0 0.0
        %327 = vmatpush1.msra.mxu0 %v176
        %328 = vmatprep.subr.mxu0 0.0
        %329 = vmatpush1.msra.mxu0 %v175
        %330 = vmatprep.subr.mxu0 0.0
        %331 = vmatpush1.msra.mxu0 %v174
        %332 = vmatprep.subr.mxu0 0.0
        %333 = vmatpush1.msra.mxu0 %v173
        %334 = vmatprep.subr.mxu0 0.0
        %335 = vmatpush1.msra.mxu0 %v172
        %336 = vmatprep.subr.mxu0 0.0
        %337 = vmatpush1.msra.mxu0 %v171
        %338 = vmatprep.subr.mxu0 0.0
        %339 = vmatpush1.msra.mxu0 %v170
        %340 = vmatprep.subr.mxu0 0.0
        %341 = vmatpush1.msra.mxu0 %v169
        %342 = vmatprep.subr.mxu0 0.0
        %343 = vmatpush1.msra.mxu0 %v168
        %344 = vmatprep.subr.mxu0 0.0
        %345 = vmatpush2.msra.mxu0 %v199
        %346 = vmatprep.subr.mxu0 0.0
        %347 = vmatpush2.msra.mxu0 %v198
        %348 = vmatprep.subr.mxu0 0.0
        %349 = vmatpush2.msra.mxu0 %v197
        %350 = vmatprep.subr.mxu0 0.0
        %351 = vmatpush2.msra.mxu0 %v196
        %352 = vmatprep.subr.mxu0 0.0
        %353 = vmatpush2.msra.mxu0 %v195
        %354 = vmatprep.subr.mxu0 0.0
        %355 = vmatpush2.msra.mxu0 %v194
        %356 = vmatprep.subr.mxu0 0.0
        %357 = vmatpush2.msra.mxu0 %v193
        %358 = vmatprep.subr.mxu0 0.0
        %359 = vmatpush2.msra.mxu0 %v192
        %360 = vmatprep.subr.mxu0 0.0
        %361 = vmatpush2.msra.mxu0 %v191
        %362 = vmatprep.subr.mxu0 0.0
        %363 = vmatpush2.msra.mxu0 %v190
        %364 = vmatprep.subr.mxu0 0.0
        %365 = vmatpush2.msra.mxu0 %v189
        %366 = vmatprep.subr.mxu0 0.0
        %367 = vmatpush2.msra.mxu0 %v188
        %368 = vmatprep.subr.mxu0 0.0
        %369 = vmatpush2.msra.mxu0 %v187
        %370 = vmatprep.subr.mxu0 0.0
        %371 = vmatpush2.msra.mxu0 %v186
        %372 = vmatprep.subr.mxu0 0.0
        %373 = vmatpush2.msra.mxu0 %v185
        %374 = vmatprep.subr.mxu0 0.0
        %375 = vmatpush2.msra.mxu0 %v184
        %376 = vmatprep.mubr.f32.mxu0 %v142
        %377 = vmatmul.mubr.f32.gmra.mxu0 %v141
        %v378 = vpop.f32.mrf.mxu0
        %v379 = vadd.f32 0.0, %v378
        %v380 = vpop.f32.mrf.mxu0
        %381 = vmatprep.mubr.f32.mxu0 %v151
        %382 = vmatmul.mubr.f32.gmra.mxu0 %v150
        %v383 = vpop.f32.mrf.mxu0
        %v384 = vadd.f32 0.0, %v383
        %v385 = vpop.f32.mrf.mxu0
        %386 = vmatprep.mubr.f32.mxu0 %v160
        %387 = vmatmul.mubr.f32.gmra.mxu0 %v159
        %v388 = vpop.f32.mrf.mxu0
        %v389 = vadd.f32 0.0, %v388
        %v390 = vpop.f32.mrf.mxu0
        %391 = vdwg.mxu0
        %392 = vmatprep.subr.mxu0 0.0
        %393 = vmatpush1.msra.mxu0 %v215
        %394 = vmatprep.subr.mxu0 0.0
        %395 = vmatpush1.msra.mxu0 %v214
        %396 = vmatprep.subr.mxu0 0.0
        %397 = vmatpush1.msra.mxu0 %v213
        %398 = vmatprep.subr.mxu0 0.0
        %399 = vmatpush1.msra.mxu0 %v212
        %400 = vmatprep.subr.mxu0 0.0
        %401 = vmatpush1.msra.mxu0 %v211
        %402 = vmatprep.subr.mxu0 0.0
        %403 = vmatpush1.msra.mxu0 %v210
        %404 = vmatprep.subr.mxu0 0.0
        %405 = vmatpush1.msra.mxu0 %v209
        %406 = vmatprep.subr.mxu0 0.0
        %407 = vmatpush1.msra.mxu0 %v208
        %408 = vmatprep.subr.mxu0 0.0
        %409 = vmatpush1.msra.mxu0 %v207
        %410 = vmatprep.subr.mxu0 0.0
        %411 = vmatpush1.msra.mxu0 %v206
        %412 = vmatprep.subr.mxu0 0.0
        %413 = vmatpush1.msra.mxu0 %v205
        %414 = vmatprep.subr.mxu0 0.0
        %415 = vmatpush1.msra.mxu0 %v204
        %416 = vmatprep.subr.mxu0 0.0
        %417 = vmatpush1.msra.mxu0 %v203
        %418 = vmatprep.subr.mxu0 0.0
        %419 = vmatpush1.msra.mxu0 %v202
        %420 = vmatprep.subr.mxu0 0.0
        %421 = vmatpush1.msra.mxu0 %v201
        %422 = vmatprep.subr.mxu0 0.0
        %423 = vmatpush1.msra.mxu0 %v200
        %424 = vmatprep.subr.mxu0 0.0
        %425 = vmatpush2.msra.mxu0 %v231
        %426 = vmatprep.subr.mxu0 0.0
        %427 = vmatpush2.msra.mxu0 %v230
        %428 = vmatprep.subr.mxu0 0.0
        %429 = vmatpush2.msra.mxu0 %v229
        %430 = vmatprep.subr.mxu0 0.0
        %431 = vmatpush2.msra.mxu0 %v228
        %432 = vmatprep.subr.mxu0 0.0
        %433 = vmatpush2.msra.mxu0 %v227
        %434 = vmatprep.subr.mxu0 0.0
        %435 = vmatpush2.msra.mxu0 %v226
        %436 = vmatprep.subr.mxu0 0.0
        %437 = vmatpush2.msra.mxu0 %v225
        %438 = vmatprep.subr.mxu0 0.0
        %439 = vmatpush2.msra.mxu0 %v224
        %440 = vmatprep.subr.mxu0 0.0
        %441 = vmatpush2.msra.mxu0 %v223
        %442 = vmatprep.subr.mxu0 0.0
        %443 = vmatpush2.msra.mxu0 %v222
        %444 = vmatprep.subr.mxu0 0.0
        %445 = vmatpush2.msra.mxu0 %v221
        %446 = vmatprep.subr.mxu0 0.0
        %447 = vmatpush2.msra.mxu0 %v220
        %448 = vmatprep.subr.mxu0 0.0
        %449 = vmatpush2.msra.mxu0 %v219
        %450 = vmatprep.subr.mxu0 0.0
        %451 = vmatpush2.msra.mxu0 %v218
        %452 = vmatprep.subr.mxu0 0.0
        %453 = vmatpush2.msra.mxu0 %v217
        %454 = vmatprep.subr.mxu0 0.0
        %455 = vmatpush2.msra.mxu0 %v216
        %456 = vmatprep.mubr.f32.mxu0 %v144
        %457 = vmatmul.mubr.f32.gmra.mxu0 %v143
        %v458 = vpop.f32.mrf.mxu0
        %v459 = vadd.f32 %v379, %v458
        %v460 = vpop.f32.mrf.mxu0
        %461 = vmatprep.mubr.f32.mxu0 %v153
        %462 = vmatmul.mubr.f32.gmra.mxu0 %v152
        %v463 = vpop.f32.mrf.mxu0
        %v464 = vadd.f32 %v384, %v463
        %v465 = vpop.f32.mrf.mxu0
        %466 = vmatprep.mubr.f32.mxu0 %v162
        %467 = vmatmul.mubr.f32.gmra.mxu0 %v161
        %v468 = vpop.f32.mrf.mxu0
        %v469 = vadd.f32 %v389, %v468
        %v470 = vpop.f32.mrf.mxu0
        %471 = vdwg.mxu0
        %472 = vmatprep.subr.mxu0 0.0
        %473 = vmatpush1.msra.mxu0 %v247
        %474 = vmatprep.subr.mxu0 0.0
        %475 = vmatpush1.msra.mxu0 %v246
        %476 = vmatprep.subr.mxu0 0.0
        %477 = vmatpush1.msra.mxu0 %v245
        %478 = vmatprep.subr.mxu0 0.0
        %479 = vmatpush1.msra.mxu0 %v244
        %480 = vmatprep.subr.mxu0 0.0
        %481 = vmatpush1.msra.mxu0 %v243
        %482 = vmatprep.subr.mxu0 0.0
        %483 = vmatpush1.msra.mxu0 %v242
        %484 = vmatprep.subr.mxu0 0.0
        %485 = vmatpush1.msra.mxu0 %v241
        %486 = vmatprep.subr.mxu0 0.0
        %487 = vmatpush1.msra.mxu0 %v240
        %488 = vmatprep.subr.mxu0 0.0
        %489 = vmatpush1.msra.mxu0 %v239
        %490 = vmatprep.subr.mxu0 0.0
        %491 = vmatpush1.msra.mxu0 %v238
        %492 = vmatprep.subr.mxu0 0.0
        %493 = vmatpush1.msra.mxu0 %v237
        %494 = vmatprep.subr.mxu0 0.0
        %495 = vmatpush1.msra.mxu0 %v236
        %496 = vmatprep.subr.mxu0 0.0
        %497 = vmatpush1.msra.mxu0 %v235
        %498 = vmatprep.subr.mxu0 0.0
        %499 = vmatpush1.msra.mxu0 %v234
        %500 = vmatprep.subr.mxu0 0.0
        %501 = vmatpush1.msra.mxu0 %v233
        %502 = vmatprep.subr.mxu0 0.0
        %503 = vmatpush1.msra.mxu0 %v232
        %504 = vmatprep.subr.mxu0 0.0
        %505 = vmatpush2.msra.mxu0 %v263
        %506 = vmatprep.subr.mxu0 0.0
        %507 = vmatpush2.msra.mxu0 %v262
        %508 = vmatprep.subr.mxu0 0.0
        %509 = vmatpush2.msra.mxu0 %v261
        %510 = vmatprep.subr.mxu0 0.0
        %511 = vmatpush2.msra.mxu0 %v260
        %512 = vmatprep.subr.mxu0 0.0
        %513 = vmatpush2.msra.mxu0 %v259
        %514 = vmatprep.subr.mxu0 0.0
        %515 = vmatpush2.msra.mxu0 %v258
        %516 = vmatprep.subr.mxu0 0.0
        %517 = vmatpush2.msra.mxu0 %v257
        %518 = vmatprep.subr.mxu0 0.0
        %519 = vmatpush2.msra.mxu0 %v256
        %520 = vmatprep.subr.mxu0 0.0
        %521 = vmatpush2.msra.mxu0 %v255
        %522 = vmatprep.subr.mxu0 0.0
        %523 = vmatpush2.msra.mxu0 %v254
        %524 = vmatprep.subr.mxu0 0.0
        %525 = vmatpush2.msra.mxu0 %v253
        %526 = vmatprep.subr.mxu0 0.0
        %527 = vmatpush2.msra.mxu0 %v252
        %528 = vmatprep.subr.mxu0 0.0
        %529 = vmatpush2.msra.mxu0 %v251
        %530 = vmatprep.subr.mxu0 0.0
        %531 = vmatpush2.msra.mxu0 %v250
        %532 = vmatprep.subr.mxu0 0.0
        %533 = vmatpush2.msra.mxu0 %v249
        %534 = vmatprep.subr.mxu0 0.0
        %535 = vmatpush2.msra.mxu0 %v248
        %536 = vmatprep.mubr.f32.mxu0 %v146
        %537 = vmatmul.mubr.f32.gmra.mxu0 %v145
        %v538 = vpop.f32.mrf.mxu0
        %v539 = vadd.f32 %v459, %v538
        %v540 = vpop.f32.mrf.mxu0
        %541 = vmatprep.mubr.f32.mxu0 %v155
        %542 = vmatmul.mubr.f32.gmra.mxu0 %v154
        %v543 = vpop.f32.mrf.mxu0
        %v544 = vadd.f32 %v464, %v543
        %v545 = vpop.f32.mrf.mxu0
        %546 = vmatprep.mubr.f32.mxu0 %v164
        %547 = vmatmul.mubr.f32.gmra.mxu0 %v163
        %v548 = vpop.f32.mrf.mxu0
        %v549 = vadd.f32 %v469, %v548
        %v550 = vpop.f32.mrf.mxu0
        %551 = vdwg.mxu0
        %552 = vmatprep.subr.mxu0 0.0
        %553 = vmatpush1.msra.mxu0 %v279
        %554 = vmatprep.subr.mxu0 0.0
        %555 = vmatpush1.msra.mxu0 %v278
        %556 = vmatprep.subr.mxu0 0.0
        %557 = vmatpush1.msra.mxu0 %v277
        %558 = vmatprep.subr.mxu0 0.0
        %559 = vmatpush1.msra.mxu0 %v276
        %560 = vmatprep.subr.mxu0 0.0
        %561 = vmatpush1.msra.mxu0 %v275
        %562 = vmatprep.subr.mxu0 0.0
        %563 = vmatpush1.msra.mxu0 %v274
        %564 = vmatprep.subr.mxu0 0.0
        %565 = vmatpush1.msra.mxu0 %v273
        %566 = vmatprep.subr.mxu0 0.0
        %567 = vmatpush1.msra.mxu0 %v272
        %568 = vmatprep.subr.mxu0 0.0
        %569 = vmatpush1.msra.mxu0 %v271
        %570 = vmatprep.subr.mxu0 0.0
        %571 = vmatpush1.msra.mxu0 %v270
        %572 = vmatprep.subr.mxu0 0.0
        %573 = vmatpush1.msra.mxu0 %v269
        %574 = vmatprep.subr.mxu0 0.0
        %575 = vmatpush1.msra.mxu0 %v268
        %576 = vmatprep.subr.mxu0 0.0
        %577 = vmatpush1.msra.mxu0 %v267
        %578 = vmatprep.subr.mxu0 0.0
        %579 = vmatpush1.msra.mxu0 %v266
        %580 = vmatprep.subr.mxu0 0.0
        %581 = vmatpush1.msra.mxu0 %v265
        %582 = vmatprep.subr.mxu0 0.0
        %583 = vmatpush1.msra.mxu0 %v264
        %584 = vmatprep.subr.mxu0 0.0
        %585 = vmatpush2.msra.mxu0 %v295
        %586 = vmatprep.subr.mxu0 0.0
        %587 = vmatpush2.msra.mxu0 %v294
        %588 = vmatprep.subr.mxu0 0.0
        %589 = vmatpush2.msra.mxu0 %v293
        %590 = vmatprep.subr.mxu0 0.0
        %591 = vmatpush2.msra.mxu0 %v292
        %592 = vmatprep.subr.mxu0 0.0
        %593 = vmatpush2.msra.mxu0 %v291
        %594 = vmatprep.subr.mxu0 0.0
        %595 = vmatpush2.msra.mxu0 %v290
        %596 = vmatprep.subr.mxu0 0.0
        %597 = vmatpush2.msra.mxu0 %v289
        %598 = vmatprep.subr.mxu0 0.0
        %599 = vmatpush2.msra.mxu0 %v288
        %600 = vmatprep.subr.mxu0 0.0
        %601 = vmatpush2.msra.mxu0 %v287
        %602 = vmatprep.subr.mxu0 0.0
        %603 = vmatpush2.msra.mxu0 %v286
        %604 = vmatprep.subr.mxu0 0.0
        %605 = vmatpush2.msra.mxu0 %v285
        %606 = vmatprep.subr.mxu0 0.0
        %607 = vmatpush2.msra.mxu0 %v284
        %608 = vmatprep.subr.mxu0 0.0
        %609 = vmatpush2.msra.mxu0 %v283
        %610 = vmatprep.subr.mxu0 0.0
        %611 = vmatpush2.msra.mxu0 %v282
        %612 = vmatprep.subr.mxu0 0.0
        %613 = vmatpush2.msra.mxu0 %v281
        %614 = vmatprep.subr.mxu0 0.0
        %615 = vmatpush2.msra.mxu0 %v280
        %616 = vmatprep.mubr.f32.mxu0 %v148
        %617 = vmatmul.mubr.f32.gmra.mxu0 %v147
        %v618 = vpop.f32.mrf.mxu0
        %v619 = vadd.f32 %v539, %v618
        %v620 = vpop.f32.mrf.mxu0
        %621 = vmatprep.mubr.f32.mxu0 %v157
        %622 = vmatmul.mubr.f32.gmra.mxu0 %v156
        %v623 = vpop.f32.mrf.mxu0
        %v624 = vadd.f32 %v544, %v623
        %v625 = vpop.f32.mrf.mxu0
        %626 = vmatprep.mubr.f32.mxu0 %v166
        %627 = vmatmul.mubr.f32.gmra.mxu0 %v165
        %v628 = vpop.f32.mrf.mxu0
        %v629 = vadd.f32 %v549, %v628
        %v630 = vpop.f32.mrf.mxu0
        %631 = vdwg.mxu0
        %632 = vmatprep.subr.mxu0 0.0
        %633 = vmatpush1.msra.mxu0 %v311
        %634 = vmatprep.subr.mxu0 0.0
        %635 = vmatpush1.msra.mxu0 %v310
        %636 = vmatprep.subr.mxu0 0.0
        %637 = vmatpush1.msra.mxu0 %v309
        %638 = vmatprep.subr.mxu0 0.0
        %639 = vmatpush1.msra.mxu0 %v308
        %640 = vmatprep.subr.mxu0 0.0
        %641 = vmatpush1.msra.mxu0 %v307
        %642 = vmatprep.subr.mxu0 0.0
        %643 = vmatpush1.msra.mxu0 %v306
        %644 = vmatprep.subr.mxu0 0.0
        %645 = vmatpush1.msra.mxu0 %v305
        %646 = vmatprep.subr.mxu0 0.0
        %647 = vmatpush1.msra.mxu0 %v304
        %648 = vmatprep.subr.mxu0 0.0
        %649 = vmatpush1.msra.mxu0 %v303
        %650 = vmatprep.subr.mxu0 0.0
        %651 = vmatpush1.msra.mxu0 %v302
        %652 = vmatprep.subr.mxu0 0.0
        %653 = vmatpush1.msra.mxu0 %v301
        %654 = vmatprep.subr.mxu0 0.0
        %655 = vmatpush1.msra.mxu0 %v300
        %656 = vmatprep.subr.mxu0 0.0
        %657 = vmatpush1.msra.mxu0 %v299
        %658 = vmatprep.subr.mxu0 0.0
        %659 = vmatpush1.msra.mxu0 %v298
        %660 = vmatprep.subr.mxu0 0.0
        %661 = vmatpush1.msra.mxu0 %v297
        %662 = vmatprep.subr.mxu0 0.0
        %663 = vmatpush1.msra.mxu0 %v296
        %664 = vmatprep.subr.mxu0 0.0
        %665 = vmatpush2.msra.mxu0 0.0
        %666 = vmatprep.subr.mxu0 0.0
        %667 = vmatpush2.msra.mxu0 0.0
        %668 = vmatprep.subr.mxu0 0.0
        %669 = vmatpush2.msra.mxu0 0.0
        %670 = vmatprep.subr.mxu0 0.0
        %671 = vmatpush2.msra.mxu0 0.0
        %672 = vmatprep.subr.mxu0 0.0
        %673 = vmatpush2.msra.mxu0 0.0
        %674 = vmatprep.subr.mxu0 0.0
        %675 = vmatpush2.msra.mxu0 0.0
        %676 = vmatprep.subr.mxu0 0.0
        %677 = vmatpush2.msra.mxu0 0.0
        %678 = vmatprep.subr.mxu0 0.0
        %679 = vmatpush2.msra.mxu0 0.0
        %680 = vmatprep.subr.mxu0 0.0
        %681 = vmatpush2.msra.mxu0 0.0
        %682 = vmatprep.subr.mxu0 0.0
        %683 = vmatpush2.msra.mxu0 0.0
        %684 = vmatprep.subr.mxu0 0.0
        %685 = vmatpush2.msra.mxu0 0.0
        %686 = vmatprep.subr.mxu0 0.0
        %687 = vmatpush2.msra.mxu0 0.0
        %688 = vmatprep.subr.mxu0 0.0
        %689 = vmatpush2.msra.mxu0 0.0
        %690 = vmatprep.subr.mxu0 0.0
        %691 = vmatpush2.msra.mxu0 0.0
        %692 = vmatprep.subr.mxu0 0.0
        %693 = vmatpush2.msra.mxu0 0.0
        %694 = vmatprep.subr.mxu0 0.0
        %695 = vmatpush2.msra.mxu0 0.0
        %696 = vmatprep.mubr.f32.mxu0 0.0
        %697 = vmatmul.mubr.f32.gmra.mxu0 %v149
        %v698 = vpop.f32.mrf.mxu0
        %v699 = vadd.f32 %v619, %v698
        %v700 = vpop.f32.mrf.mxu0
        %701 = vmatprep.mubr.f32.mxu0 0.0
        %702 = vmatmul.mubr.f32.gmra.mxu0 %v158
        %v703 = vpop.f32.mrf.mxu0
        %v704 = vadd.f32 %v624, %v703
        %v705 = vpop.f32.mrf.mxu0
        %706 = vmatprep.mubr.f32.mxu0 0.0
        %707 = vmatmul.mubr.f32.gmra.mxu0 %v167
        %v708 = vpop.f32.mrf.mxu0
        %v709 = vadd.f32 %v629, %v708
        %v710 = vpop.f32.mrf.mxu0
        %711 = vdwg.mxu0
        %v712 = vmax.f32 %v699, 1e-10
        %v713 = vmax.f32 %v704, 1e-10
        %v714 = vmax.f32 %v709, 1e-10
        %v715 = vlog2.pop %v712
        %v716 = vmul.f32 %v715, 0.6931472
        %v717 = vlog2.pop %v713
        %v718 = vmul.f32 %v717, 0.6931472
        %v719 = vlog2.pop %v714
        %v720 = vmul.f32 %v719, 0.6931472
        %v721 = vmul.f32 %v716, 0.4342945
        %v722 = vmul.f32 %v718, 0.4342945
        %v723 = vmul.f32 %v720, 0.4342945
        %v724 = vmul.f32 %v721, 10.0
        %v725 = vmul.f32 %v722, 10.0
        %v726 = vmul.f32 %v723, 10.0
        %vm727 = vcmask 326656
        %v728 = vsel %vm727, %v724, -inf
        %729 = vmax.xlane.f32.xlu0 %v728
        %v730 = vpop.xlane.xlu0 %729
        %v731 = vsel %vm727, %v725, -inf
        %732 = vmax.xlane.f32.xlu0 %v731
        %v733 = vpop.xlane.xlu0 %732
        %vm734 = vcmask 319488
        %v735 = vsel %vm734, %v726, -inf
        %736 = vmax.xlane.f32.xlu0 %v735
        %v737 = vpop.xlane.xlu0 %736
        %vm738 = vcmask 1040384
        %v739 = vsel %vm738, %v737, -inf
        %v740 = vmax.f32 %v730, %v733
        %v741 = vmax.f32 %v740, %v739
        %v742 = vrot.slane %v741, 4
        %v743 = vmax.f32 %v741, %v742
        %v744 = vrot.slane %v743, 2
        %v745 = vmax.f32 %v743, %v744
        %v746 = vrot.slane %v745, 1
        %v747 = vmax.f32 %v745, %v746
        %v748 = vsub.f32 %v747, 80.0
        %v749 = vmax.f32 %v724, %v748
        %v750 = vmax.f32 %v725, %v748
        %v751 = vmax.f32 %v726, %v748
        %v752 = vld [vmem:[%s1 + $0x480] sm:$0xff]
        %v753 = vld [vmem:[%s1 + $0x488] sm:$0xff]
        %v754 = vld [vmem:[%s1 + $0x490] sm:$0xff]
        %v755 = vld [vmem:[%s1 + $0x498] sm:$0xff]
        %v756 = vld [vmem:[%s1 + $0x4a0] sm:$0xff]
        %v758 = vsel %vm727, %v749, 0
        %v761 = vsel %vm727, %v750, 0
        %v764 = vsel %vm727, %v751, 0
        %766 = vmatprep.subr.mxu0 0.0
        %767 = vmatpush1.msra.mxu0 0.0
        %768 = vmatprep.subr.mxu0 0.0
        %769 = vmatpush1.msra.mxu0 0.0
        %770 = vmatprep.subr.mxu0 0.0
        %771 = vmatpush1.msra.mxu0 0.0
        %772 = vmatprep.subr.mxu0 0.0
        %773 = vmatpush1.msra.mxu0 0.0
        %774 = vmatprep.subr.mxu0 0.0
        %775 = vmatpush1.msra.mxu0 0.0
        %776 = vmatprep.subr.mxu0 0.0
        %777 = vmatpush1.msra.mxu0 0.0
        %778 = vmatprep.subr.mxu0 0.0
        %779 = vmatpush1.msra.mxu0 0.0
        %780 = vmatprep.subr.mxu0 0.0
        %781 = vmatpush1.msra.mxu0 0.0
        %782 = vmatprep.subr.mxu0 0.0
        %783 = vmatpush1.msra.mxu0 0.0
        %784 = vmatprep.subr.mxu0 0.0
        %785 = vmatpush1.msra.mxu0 0.0
        %786 = vmatprep.subr.mxu0 0.0
        %787 = vmatpush1.msra.mxu0 0.0
        %788 = vmatprep.subr.mxu0 0.0
        %789 = vmatpush1.msra.mxu0 %v756
        %790 = vmatprep.subr.mxu0 0.0
        %791 = vmatpush1.msra.mxu0 %v755
        %792 = vmatprep.subr.mxu0 0.0
        %793 = vmatpush1.msra.mxu0 %v754
        %794 = vmatprep.subr.mxu0 0.0
        %795 = vmatpush1.msra.mxu0 %v753
        %796 = vmatprep.subr.mxu0 0.0
        %797 = vmatpush1.msra.mxu0 %v752
        %798 = vmatprep.subr.mxu0 0.0
        %799 = vmatpush2.msra.mxu0 0.0
        %800 = vmatprep.subr.mxu0 0.0
        %801 = vmatpush2.msra.mxu0 0.0
        %802 = vmatprep.subr.mxu0 0.0
        %803 = vmatpush2.msra.mxu0 0.0
        %804 = vmatprep.subr.mxu0 0.0
        %805 = vmatpush2.msra.mxu0 0.0
        %806 = vmatprep.subr.mxu0 0.0
        %807 = vmatpush2.msra.mxu0 0.0
        %808 = vmatprep.subr.mxu0 0.0
        %809 = vmatpush2.msra.mxu0 0.0
        %810 = vmatprep.subr.mxu0 0.0
        %811 = vmatpush2.msra.mxu0 0.0
        %812 = vmatprep.subr.mxu0 0.0
        %813 = vmatpush2.msra.mxu0 0.0
        %814 = vmatprep.subr.mxu0 0.0
        %815 = vmatpush2.msra.mxu0 0.0
        %816 = vmatprep.subr.mxu0 0.0
        %817 = vmatpush2.msra.mxu0 0.0
        %818 = vmatprep.subr.mxu0 0.0
        %819 = vmatpush2.msra.mxu0 0.0
        %820 = vmatprep.subr.mxu0 0.0
        %821 = vmatpush2.msra.mxu0 0.0
        %822 = vmatprep.subr.mxu0 0.0
        %823 = vmatpush2.msra.mxu0 0.0
        %824 = vmatprep.subr.mxu0 0.0
        %825 = vmatpush2.msra.mxu0 0.0
        %826 = vmatprep.subr.mxu0 0.0
        %827 = vmatpush2.msra.mxu0 0.0
        %828 = vmatprep.subr.mxu0 0.0
        %829 = vmatpush2.msra.mxu0 0.0
        %830 = vmatprep.mubr.f32.mxu0 0.0
        %831 = vmatmul.mubr.f32.gmra.mxu0 %v758
        %v832 = vpop.f32.mrf.mxu0
        %v833 = vadd.f32 0.0, %v832
        %v834 = vpop.f32.mrf.mxu0
        %835 = vmatprep.mubr.f32.mxu0 0.0
        %836 = vmatmul.mubr.f32.gmra.mxu0 %v761
        %v837 = vpop.f32.mrf.mxu0
        %v838 = vadd.f32 0.0, %v837
        %v839 = vpop.f32.mrf.mxu0
        %840 = vmatprep.mubr.f32.mxu0 0.0
        %841 = vmatmul.mubr.f32.gmra.mxu0 %v764
        %v842 = vpop.f32.mrf.mxu0
        %v843 = vadd.f32 0.0, %v842
        %v844 = vpop.f32.mrf.mxu0
        %845 = vdwg.mxu0
        %vm846 = vcmask 155648
        %847 = vst.msk [vmem:[#allocation2] sm:$0x1] %vm846, 0.0
        %vm848 = vcmask 162816
        %849 = vst.msk [vmem:[#allocation2 + $0x1] sm:$0xff] %vm848, %v833
        %850 = vst.msk [vmem:[#allocation2 + $0x9] sm:$0xff] %vm848, %v838
        %851 = vst.msk [vmem:[#allocation2 + $0x11] sm:$0x1] %vm846, %v843
        %852 = vst.msk [vmem:[#allocation2 + $0x12] sm:$0x1] %vm846, 0.0
        %v853 = vld [vmem:[#allocation2] sm:$0xff]
        %v854 = vld [vmem:[#allocation2 + $0x8] sm:$0xff]
        %v855 = vld [vmem:[#allocation2 + $0x10] sm:$0x1]
        %v856 = vld [vmem:[#allocation2 + $0x2] sm:$0xff]
        %v857 = vld [vmem:[#allocation2 + $0xa] sm:$0xff]
        %v858 = vld [vmem:[#allocation2 + $0x12] sm:$0x1]
        %862 = vrot.lane.b32.xlu0 %v833, 20
        %v863 = vpop.permute.xlu0 %862
        %864 = vrot.lane.b32.xlu0 %v838, 20
        %v865 = vpop.permute.xlu0 %864
        %866 = vrot.lane.b32.xlu0 %v843, 20
        %v867 = vpop.permute.xlu0 %866
        %874 = vrot.lane.b32.xlu0 %v856, 40
        %v875 = vpop.permute.xlu0 %874
        %876 = vrot.lane.b32.xlu0 %v857, 40
        %v877 = vpop.permute.xlu0 %876
        %878 = vrot.lane.b32.xlu0 %v858, 40
        %v879 = vpop.permute.xlu0 %878
        %v883 = vsel %vm848, %v853, %v863
        %v884 = vsel %vm848, %v854, %v865
        %v885 = vsel %vm848, %v855, %v867
        %v886 = vsel %vm727, %v883, %v875
        %v887 = vsel %vm727, %v884, %v877
        %v888 = vsel %vm727, %v885, %v879
        %889 = vrot.lane.b32.xlu0 %v833, 2
        %v890 = vpop.permute.xlu0 %889
        %891 = vrot.lane.b32.xlu0 %v838, 2
        %v892 = vpop.permute.xlu0 %891
        %893 = vrot.lane.b32.xlu0 %v843, 2
        %v894 = vpop.permute.xlu0 %893
        %vm898 = vcmask 15360
        %v899 = vsel %vm898, 0.0, %v890
        %v900 = vsel %vm898, 0.0, %v892
        %v901 = vsel %vm898, 0.0, %v894
        %vm902 = vcmask 179200
        %v903 = vsel %vm902, %v899, 0.0
        %v904 = vsel %vm902, %v900, 0.0
        %v905 = vsel %vm902, %v901, 0.0
        %v906 = vld [vmem:[%s1 + $0x4a8] sm:$0xff]
        %v907 = vld [vmem:[%s1 + $0x4b0] sm:$0xff]
        %v908 = vld [vmem:[%s1 + $0x4b8] sm:$0xff]
        %v909 = vld [vmem:[%s1 + $0x4c0] sm:$0xff]
        %v910 = vld [vmem:[%s1 + $0x4c8] sm:$0xff]
        %v911 = vld [vmem:[%s1 + $0x4d0] sm:$0xff]
        %v912 = vld [vmem:[%s1 + $0x4d8] sm:$0xff]
        %v913 = vld [vmem:[%s1 + $0x4e0] sm:$0xf]
        %v914 = vld [vmem:[%s1 + $0x4e8] sm:$0x1]
        %v915 = vlaneseq
        %v916 = vshrl.u32 %v915, 7
        %v917 = vsub.s32 0, %v916
        %v918 = vrot.slane %v914, %v917
        %vm919 = vcmask 490496
        %v921 = vsel %vm919, %v886, 0
        %v924 = vsel %vm919, %v887, 0
        %v927 = vsel %vm919, %v888, 0
        %vm929 = vcmask 1043456
        %v931 = vsel %vm929, %v913, 0
        %933 = vmatprep.subr.mxu0 0.0
        %934 = vmatpush1.msra.mxu0 0.0
        %935 = vmatprep.subr.mxu0 0.0
        %936 = vmatpush1.msra.mxu0 0.0
        %937 = vmatprep.subr.mxu0 0.0
        %938 = vmatpush1.msra.mxu0 0.0
        %939 = vmatprep.subr.mxu0 0.0
        %940 = vmatpush1.msra.mxu0 0.0
        %941 = vmatprep.subr.mxu0 0.0
        %942 = vmatpush1.msra.mxu0 0.0
        %943 = vmatprep.subr.mxu0 0.0
        %944 = vmatpush1.msra.mxu0 0.0
        %945 = vmatprep.subr.mxu0 0.0
        %946 = vmatpush1.msra.mxu0 0.0
        %947 = vmatprep.subr.mxu0 0.0
        %948 = vmatpush1.msra.mxu0 0.0
        %949 = vmatprep.subr.mxu0 0.0
        %950 = vmatpush1.msra.mxu0 %v931
        %951 = vmatprep.subr.mxu0 0.0
        %952 = vmatpush1.msra.mxu0 %v912
        %953 = vmatprep.subr.mxu0 0.0
        %954 = vmatpush1.msra.mxu0 %v911
        %955 = vmatprep.subr.mxu0 0.0
        %956 = vmatpush1.msra.mxu0 %v910
        %957 = vmatprep.subr.mxu0 0.0
        %958 = vmatpush1.msra.mxu0 %v909
        %959 = vmatprep.subr.mxu0 0.0
        %960 = vmatpush1.msra.mxu0 %v908
        %961 = vmatprep.subr.mxu0 0.0
        %962 = vmatpush1.msra.mxu0 %v907
        %963 = vmatprep.subr.mxu0 0.0
        %964 = vmatpush1.msra.mxu0 %v906
        %965 = vmatprep.subr.mxu0 0.0
        %966 = vmatpush2.msra.mxu0 0.0
        %967 = vmatprep.subr.mxu0 0.0
        %968 = vmatpush2.msra.mxu0 0.0
        %969 = vmatprep.subr.mxu0 0.0
        %970 = vmatpush2.msra.mxu0 0.0
        %971 = vmatprep.subr.mxu0 0.0
        %972 = vmatpush2.msra.mxu0 0.0
        %973 = vmatprep.subr.mxu0 0.0
        %974 = vmatpush2.msra.mxu0 0.0
        %975 = vmatprep.subr.mxu0 0.0
        %976 = vmatpush2.msra.mxu0 0.0
        %977 = vmatprep.subr.mxu0 0.0
        %978 = vmatpush2.msra.mxu0 0.0
        %979 = vmatprep.subr.mxu0 0.0
        %980 = vmatpush2.msra.mxu0 0.0
        %981 = vmatprep.subr.mxu0 0.0
        %982 = vmatpush2.msra.mxu0 0.0
        %983 = vmatprep.subr.mxu0 0.0
        %984 = vmatpush2.msra.mxu0 0.0
        %985 = vmatprep.subr.mxu0 0.0
        %986 = vmatpush2.msra.mxu0 0.0
        %987 = vmatprep.subr.mxu0 0.0
        %988 = vmatpush2.msra.mxu0 0.0
        %989 = vmatprep.subr.mxu0 0.0
        %990 = vmatpush2.msra.mxu0 0.0
        %991 = vmatprep.subr.mxu0 0.0
        %992 = vmatpush2.msra.mxu0 0.0
        %993 = vmatprep.subr.mxu0 0.0
        %994 = vmatpush2.msra.mxu0 0.0
        %995 = vmatprep.subr.mxu0 0.0
        %996 = vmatpush2.msra.mxu0 0.0
        %997 = vmatprep.mubr.f32.mxu0 0.0
        %998 = vmatmul.mubr.f32.gmra.mxu0 %v921
        %v999 = vpop.f32.mrf.mxu0
        %v1000 = vadd.f32 %v918, %v999
        %v1001 = vpop.f32.mrf.mxu0
        %1002 = vmatprep.mubr.f32.mxu0 0.0
        %1003 = vmatmul.mubr.f32.gmra.mxu0 %v924
        %v1004 = vpop.f32.mrf.mxu0
        %v1005 = vadd.f32 %v918, %v1004
        %v1006 = vpop.f32.mrf.mxu0
        %1007 = vmatprep.mubr.f32.mxu0 0.0
        %1008 = vmatmul.mubr.f32.gmra.mxu0 %v927
        %v1009 = vpop.f32.mrf.mxu0
        %v1010 = vadd.f32 %v918, %v1009
        %v1011 = vpop.f32.mrf.mxu0
        %1012 = vdwg.mxu0
        %v1013 = vmax.f32 %v1000, 0.0
        %v1014 = vmax.f32 %v1005, 0.0
        %v1015 = vmax.f32 %v1010, 0.0
        %vm1016 = vcmask 188416
        %1017 = vst.msk [vmem:[#allocation2] sm:$0x1] %vm1016, 0.0
        %vm1018 = vcmask 195584
        %1019 = vst.msk [vmem:[#allocation2 + $0x1] sm:$0xff] %vm1018, %v1013
        %1020 = vst.msk [vmem:[#allocation2 + $0x9] sm:$0xff] %vm1018, %v1014
        %1021 = vst.msk [vmem:[#allocation2 + $0x11] sm:$0x1] %vm1016, %v1015
        %1022 = vst.msk [vmem:[#allocation2 + $0x12] sm:$0x1] %vm1016, 0.0
        %v1023 = vld [vmem:[#allocation2] sm:$0xff]
        %v1024 = vld [vmem:[#allocation2 + $0x8] sm:$0xff]
        %v1025 = vld [vmem:[#allocation2 + $0x10] sm:$0x1]
        %v1026 = vld [vmem:[#allocation2 + $0x2] sm:$0xff]
        %v1027 = vld [vmem:[#allocation2 + $0xa] sm:$0xff]
        %v1028 = vld [vmem:[#allocation2 + $0x12] sm:$0x1]
        %1032 = vrot.lane.b32.xlu0 %v1013, 24
        %v1033 = vpop.permute.xlu0 %1032
        %1034 = vrot.lane.b32.xlu0 %v1014, 24
        %v1035 = vpop.permute.xlu0 %1034
        %1036 = vrot.lane.b32.xlu0 %v1015, 24
        %v1037 = vpop.permute.xlu0 %1036
        %1044 = vrot.lane.b32.xlu0 %v1026, 48
        %v1045 = vpop.permute.xlu0 %1044
        %1046 = vrot.lane.b32.xlu0 %v1027, 48
        %v1047 = vpop.permute.xlu0 %1046
        %1048 = vrot.lane.b32.xlu0 %v1028, 48
        %v1049 = vpop.permute.xlu0 %1048
        %v1053 = vsel %vm1018, %v1023, %v1033
        %v1054 = vsel %vm1018, %v1024, %v1035
        %v1055 = vsel %vm1018, %v1025, %v1037
        %vm1056 = vcmask 392192
        %v1057 = vsel %vm1056, %v1053, %v1045
        %v1058 = vsel %vm1056, %v1054, %v1047
        %v1059 = vsel %vm1056, %v1055, %v1049
        %v1060 = vld [vmem:[%s1 + $0x4f0] sm:$0xff]
        %v1061 = vld [vmem:[%s1 + $0x4f8] sm:$0xff]
        %v1062 = vld [vmem:[%s1 + $0x500] sm:$0xff]
        %v1063 = vld [vmem:[%s1 + $0x508] sm:$0xff]
        %v1064 = vld [vmem:[%s1 + $0x510] sm:$0xff]
        %v1065 = vld [vmem:[%s1 + $0x518] sm:$0xff]
        %v1066 = vld [vmem:[%s1 + $0x520] sm:$0xff]
        %v1067 = vld [vmem:[%s1 + $0x528] sm:$0xff]
        %v1068 = vld [vmem:[%s1 + $0x530] sm:$0xff]
        %v1069 = vld [vmem:[%s1 + $0x538] sm:$0x1]
        %v1070 = vlaneseq
        %v1071 = vshrl.u32 %v1070, 7
        %v1072 = vsub.s32 0, %v1071
        %v1073 = vrot.slane %v1069, %v1072
        %vm1074 = vcmask 588800
        %v1076 = vsel %vm1074, %v1057, 0
        %v1079 = vsel %vm1074, %v1058, 0
        %v1082 = vsel %vm1074, %v1059, 0
        %1084 = vmatprep.subr.mxu0 0.0
        %1085 = vmatpush1.msra.mxu0 0.0
        %1086 = vmatprep.subr.mxu0 0.0
        %1087 = vmatpush1.msra.mxu0 0.0
        %1088 = vmatprep.subr.mxu0 0.0
        %1089 = vmatpush1.msra.mxu0 0.0
        %1090 = vmatprep.subr.mxu0 0.0
        %1091 = vmatpush1.msra.mxu0 0.0
        %1092 = vmatprep.subr.mxu0 0.0
        %1093 = vmatpush1.msra.mxu0 0.0
        %1094 = vmatprep.subr.mxu0 0.0
        %1095 = vmatpush1.msra.mxu0 0.0
        %1096 = vmatprep.subr.mxu0 0.0
        %1097 = vmatpush1.msra.mxu0 0.0
        %1098 = vmatprep.subr.mxu0 0.0
        %1099 = vmatpush1.msra.mxu0 %v1068
        %1100 = vmatprep.subr.mxu0 0.0
        %1101 = vmatpush1.msra.mxu0 %v1067
        %1102 = vmatprep.subr.mxu0 0.0
        %1103 = vmatpush1.msra.mxu0 %v1066
        %1104 = vmatprep.subr.mxu0 0.0
        %1105 = vmatpush1.msra.mxu0 %v1065
        %1106 = vmatprep.subr.mxu0 0.0
        %1107 = vmatpush1.msra.mxu0 %v1064
        %1108 = vmatprep.subr.mxu0 0.0
        %1109 = vmatpush1.msra.mxu0 %v1063
        %1110 = vmatprep.subr.mxu0 0.0
        %1111 = vmatpush1.msra.mxu0 %v1062
        %1112 = vmatprep.subr.mxu0 0.0
        %1113 = vmatpush1.msra.mxu0 %v1061
        %1114 = vmatprep.subr.mxu0 0.0
        %1115 = vmatpush1.msra.mxu0 %v1060
        %1116 = vmatprep.subr.mxu0 0.0
        %1117 = vmatpush2.msra.mxu0 0.0
        %1118 = vmatprep.subr.mxu0 0.0
        %1119 = vmatpush2.msra.mxu0 0.0
        %1120 = vmatprep.subr.mxu0 0.0
        %1121 = vmatpush2.msra.mxu0 0.0
        %1122 = vmatprep.subr.mxu0 0.0
        %1123 = vmatpush2.msra.mxu0 0.0
        %1124 = vmatprep.subr.mxu0 0.0
        %1125 = vmatpush2.msra.mxu0 0.0
        %1126 = vmatprep.subr.mxu0 0.0
        %1127 = vmatpush2.msra.mxu0 0.0
        %1128 = vmatprep.subr.mxu0 0.0
        %1129 = vmatpush2.msra.mxu0 0.0
        %1130 = vmatprep.subr.mxu0 0.0
        %1131 = vmatpush2.msra.mxu0 0.0
        %1132 = vmatprep.subr.mxu0 0.0
        %1133 = vmatpush2.msra.mxu0 0.0
        %1134 = vmatprep.subr.mxu0 0.0
        %1135 = vmatpush2.msra.mxu0 0.0
        %1136 = vmatprep.subr.mxu0 0.0
        %1137 = vmatpush2.msra.mxu0 0.0
        %1138 = vmatprep.subr.mxu0 0.0
        %1139 = vmatpush2.msra.mxu0 0.0
        %1140 = vmatprep.subr.mxu0 0.0
        %1141 = vmatpush2.msra.mxu0 0.0
        %1142 = vmatprep.subr.mxu0 0.0
        %1143 = vmatpush2.msra.mxu0 0.0
        %1144 = vmatprep.subr.mxu0 0.0
        %1145 = vmatpush2.msra.mxu0 0.0
        %1146 = vmatprep.subr.mxu0 0.0
        %1147 = vmatpush2.msra.mxu0 0.0
        %1148 = vmatprep.mubr.f32.mxu0 0.0
        %1149 = vmatmul.mubr.f32.gmra.mxu0 %v1076
        %v1150 = vpop.f32.mrf.mxu0
        %v1151 = vadd.f32 %v1073, %v1150
        %v1152 = vpop.f32.mrf.mxu0
        %1153 = vmatprep.mubr.f32.mxu0 0.0
        %1154 = vmatmul.mubr.f32.gmra.mxu0 %v1079
        %v1155 = vpop.f32.mrf.mxu0
        %v1156 = vadd.f32 %v1073, %v1155
        %v1157 = vpop.f32.mrf.mxu0
        %1158 = vmatprep.mubr.f32.mxu0 0.0
        %1159 = vmatmul.mubr.f32.gmra.mxu0 %v1082
        %v1160 = vpop.f32.mrf.mxu0
        %v1161 = vadd.f32 %v1073, %v1160
        %v1162 = vpop.f32.mrf.mxu0
        %1163 = vdwg.mxu0
        %v1164 = vadd.f32 %v1151, %v903
        %v1165 = vadd.f32 %v1156, %v904
        %v1166 = vadd.f32 %v1161, %v905
        %v1167 = vmax.f32 %v1164, 0.0
        %v1168 = vmax.f32 %v1165, 0.0
        %v1169 = vmax.f32 %v1166, 0.0
        %1170 = vst.msk [vmem:[#allocation2] sm:$0x1] %vm1016, 0.0
        %1171 = vst.msk [vmem:[#allocation2 + $0x1] sm:$0xff] %vm1018, %v1167
        %1172 = vst.msk [vmem:[#allocation2 + $0x9] sm:$0xff] %vm1018, %v1168
        %1173 = vst.msk [vmem:[#allocation2 + $0x11] sm:$0x1] %vm1016, %v1169
        %1174 = vst.msk [vmem:[#allocation2 + $0x12] sm:$0x1] %vm1016, 0.0
        %v1175 = vld [vmem:[#allocation2] sm:$0xff]
        %v1176 = vld [vmem:[#allocation2 + $0x8] sm:$0xff]
        %v1177 = vld [vmem:[#allocation2 + $0x10] sm:$0x1]
        %v1178 = vld [vmem:[#allocation2 + $0x2] sm:$0xff]
        %v1179 = vld [vmem:[#allocation2 + $0xa] sm:$0xff]
        %v1180 = vld [vmem:[#allocation2 + $0x12] sm:$0x1]
        %1184 = vrot.lane.b32.xlu0 %v1167, 24
        %v1185 = vpop.permute.xlu0 %1184
        %1186 = vrot.lane.b32.xlu0 %v1168, 24
        %v1187 = vpop.permute.xlu0 %1186
        %1188 = vrot.lane.b32.xlu0 %v1169, 24
        %v1189 = vpop.permute.xlu0 %1188
        %1196 = vrot.lane.b32.xlu0 %v1178, 48
        %v1197 = vpop.permute.xlu0 %1196
        %1198 = vrot.lane.b32.xlu0 %v1179, 48
        %v1199 = vpop.permute.xlu0 %1198
        %1200 = vrot.lane.b32.xlu0 %v1180, 48
        %v1201 = vpop.permute.xlu0 %1200
        %v1205 = vsel %vm1018, %v1175, %v1185
        %v1206 = vsel %vm1018, %v1176, %v1187
        %v1207 = vsel %vm1018, %v1177, %v1189
        %v1208 = vsel %vm1056, %v1205, %v1197
        %v1209 = vsel %vm1056, %v1206, %v1199
        %v1210 = vsel %vm1056, %v1207, %v1201
        %v1211 = vld [vmem:[%s1 + $0x540] sm:$0xff]
        %v1212 = vld [vmem:[%s1 + $0x548] sm:$0xff]
        %v1213 = vld [vmem:[%s1 + $0x550] sm:$0xff]
        %v1214 = vld [vmem:[%s1 + $0x558] sm:$0xff]
        %v1215 = vld [vmem:[%s1 + $0x560] sm:$0xff]
        %v1216 = vld [vmem:[%s1 + $0x568] sm:$0xff]
        %v1217 = vld [vmem:[%s1 + $0x570] sm:$0xff]
        %v1218 = vld [vmem:[%s1 + $0x578] sm:$0xff]
        %v1219 = vld [vmem:[%s1 + $0x580] sm:$0xff]
        %v1220 = vld [vmem:[%s1 + $0x588] sm:$0x1]
        %v1221 = vlaneseq
        %v1222 = vshrl.u32 %v1221, 7
        %v1223 = vsub.s32 0, %v1222
        %v1224 = vrot.slane %v1220, %v1223
        %v1226 = vsel %vm1074, %v1208, 0
        %v1229 = vsel %vm1074, %v1209, 0
        %v1232 = vsel %vm1074, %v1210, 0
        %1234 = vmatprep.subr.mxu0 0.0
        %1235 = vmatpush1.msra.mxu0 0.0
        %1236 = vmatprep.subr.mxu0 0.0
        %1237 = vmatpush1.msra.mxu0 0.0
        %1238 = vmatprep.subr.mxu0 0.0
        %1239 = vmatpush1.msra.mxu0 0.0
        %1240 = vmatprep.subr.mxu0 0.0
        %1241 = vmatpush1.msra.mxu0 0.0
        %1242 = vmatprep.subr.mxu0 0.0
        %1243 = vmatpush1.msra.mxu0 0.0
        %1244 = vmatprep.subr.mxu0 0.0
        %1245 = vmatpush1.msra.mxu0 0.0
        %1246 = vmatprep.subr.mxu0 0.0
        %1247 = vmatpush1.msra.mxu0 0.0
        %1248 = vmatprep.subr.mxu0 0.0
        %1249 = vmatpush1.msra.mxu0 %v1219
        %1250 = vmatprep.subr.mxu0 0.0
        %1251 = vmatpush1.msra.mxu0 %v1218
        %1252 = vmatprep.subr.mxu0 0.0
        %1253 = vmatpush1.msra.mxu0 %v1217
        %1254 = vmatprep.subr.mxu0 0.0
        %1255 = vmatpush1.msra.mxu0 %v1216
        %1256 = vmatprep.subr.mxu0 0.0
        %1257 = vmatpush1.msra.mxu0 %v1215
        %1258 = vmatprep.subr.mxu0 0.0
        %1259 = vmatpush1.msra.mxu0 %v1214
        %1260 = vmatprep.subr.mxu0 0.0
        %1261 = vmatpush1.msra.mxu0 %v1213
        %1262 = vmatprep.subr.mxu0 0.0
        %1263 = vmatpush1.msra.mxu0 %v1212
        %1264 = vmatprep.subr.mxu0 0.0
        %1265 = vmatpush1.msra.mxu0 %v1211
        %1266 = vmatprep.subr.mxu0 0.0
        %1267 = vmatpush2.msra.mxu0 0.0
        %1268 = vmatprep.subr.mxu0 0.0
        %1269 = vmatpush2.msra.mxu0 0.0
        %1270 = vmatprep.subr.mxu0 0.0
        %1271 = vmatpush2.msra.mxu0 0.0
        %1272 = vmatprep.subr.mxu0 0.0
        %1273 = vmatpush2.msra.mxu0 0.0
        %1274 = vmatprep.subr.mxu0 0.0
        %1275 = vmatpush2.msra.mxu0 0.0
        %1276 = vmatprep.subr.mxu0 0.0
        %1277 = vmatpush2.msra.mxu0 0.0
        %1278 = vmatprep.subr.mxu0 0.0
        %1279 = vmatpush2.msra.mxu0 0.0
        %1280 = vmatprep.subr.mxu0 0.0
        %1281 = vmatpush2.msra.mxu0 0.0
        %1282 = vmatprep.subr.mxu0 0.0
        %1283 = vmatpush2.msra.mxu0 0.0
        %1284 = vmatprep.subr.mxu0 0.0
        %1285 = vmatpush2.msra.mxu0 0.0
        %1286 = vmatprep.subr.mxu0 0.0
        %1287 = vmatpush2.msra.mxu0 0.0
        %1288 = vmatprep.subr.mxu0 0.0
        %1289 = vmatpush2.msra.mxu0 0.0
        %1290 = vmatprep.subr.mxu0 0.0
        %1291 = vmatpush2.msra.mxu0 0.0
        %1292 = vmatprep.subr.mxu0 0.0
        %1293 = vmatpush2.msra.mxu0 0.0
        %1294 = vmatprep.subr.mxu0 0.0
        %1295 = vmatpush2.msra.mxu0 0.0
        %1296 = vmatprep.subr.mxu0 0.0
        %1297 = vmatpush2.msra.mxu0 0.0
        %1298 = vmatprep.mubr.f32.mxu0 0.0
        %1299 = vmatmul.mubr.f32.gmra.mxu0 %v1226
        %v1300 = vpop.f32.mrf.mxu0
        %v1301 = vadd.f32 %v1224, %v1300
        %v1302 = vpop.f32.mrf.mxu0
        %1303 = vmatprep.mubr.f32.mxu0 0.0
        %1304 = vmatmul.mubr.f32.gmra.mxu0 %v1229
        %v1305 = vpop.f32.mrf.mxu0
        %v1306 = vadd.f32 %v1224, %v1305
        %v1307 = vpop.f32.mrf.mxu0
        %1308 = vmatprep.mubr.f32.mxu0 0.0
        %1309 = vmatmul.mubr.f32.gmra.mxu0 %v1232
        %v1310 = vpop.f32.mrf.mxu0
        %v1311 = vadd.f32 %v1224, %v1310
        %v1312 = vpop.f32.mrf.mxu0
        %1313 = vdwg.mxu0
        %v1314 = vmax.f32 %v1301, 0.0
        %v1315 = vmax.f32 %v1306, 0.0
        %v1316 = vmax.f32 %v1311, 0.0
        %1317 = vst.msk [vmem:[#allocation2] sm:$0x1] %vm1016, 0.0
        %1318 = vst.msk [vmem:[#allocation2 + $0x1] sm:$0xff] %vm1018, %v1314
        %1319 = vst.msk [vmem:[#allocation2 + $0x9] sm:$0xff] %vm1018, %v1315
        %1320 = vst.msk [vmem:[#allocation2 + $0x11] sm:$0x1] %vm1016, %v1316
        %1321 = vst.msk [vmem:[#allocation2 + $0x12] sm:$0x1] %vm1016, 0.0
        %v1322 = vld [vmem:[#allocation2] sm:$0xff]
        %v1323 = vld [vmem:[#allocation2 + $0x8] sm:$0xff]
        %v1324 = vld [vmem:[#allocation2 + $0x10] sm:$0x1]
        %v1325 = vld [vmem:[#allocation2 + $0x2] sm:$0xff]
        %v1326 = vld [vmem:[#allocation2 + $0xa] sm:$0xff]
        %v1327 = vld [vmem:[#allocation2 + $0x12] sm:$0x1]
        %1331 = vrot.lane.b32.xlu0 %v1314, 24
        %v1332 = vpop.permute.xlu0 %1331
        %1333 = vrot.lane.b32.xlu0 %v1315, 24
        %v1334 = vpop.permute.xlu0 %1333
        %1335 = vrot.lane.b32.xlu0 %v1316, 24
        %v1336 = vpop.permute.xlu0 %1335
        %1343 = vrot.lane.b32.xlu0 %v1325, 48
        %v1344 = vpop.permute.xlu0 %1343
        %1345 = vrot.lane.b32.xlu0 %v1326, 48
        %v1346 = vpop.permute.xlu0 %1345
        %1347 = vrot.lane.b32.xlu0 %v1327, 48
        %v1348 = vpop.permute.xlu0 %1347
        %v1352 = vsel %vm1018, %v1322, %v1332
        %v1353 = vsel %vm1018, %v1323, %v1334
        %v1354 = vsel %vm1018, %v1324, %v1336
        %v1355 = vsel %vm1056, %v1352, %v1344
        %v1356 = vsel %vm1056, %v1353, %v1346
        %v1357 = vsel %vm1056, %v1354, %v1348
        %v1358 = vld [vmem:[%s1 + $0x590] sm:$0xff]
        %v1359 = vld [vmem:[%s1 + $0x598] sm:$0xff]
        %v1360 = vld [vmem:[%s1 + $0x5a0] sm:$0xff]
        %v1361 = vld [vmem:[%s1 + $0x5a8] sm:$0xff]
        %v1362 = vld [vmem:[%s1 + $0x5b0] sm:$0xff]
        %v1363 = vld [vmem:[%s1 + $0x5b8] sm:$0xff]
        %v1364 = vld [vmem:[%s1 + $0x5c0] sm:$0xff]
        %v1365 = vld [vmem:[%s1 + $0x5c8] sm:$0xff]
        %v1366 = vld [vmem:[%s1 + $0x5d0] sm:$0xff]
        %v1367 = vld [vmem:[%s1 + $0x5d8] sm:$0x1]
        %v1368 = vlaneseq
        %v1369 = vshrl.u32 %v1368, 7
        %v1370 = vsub.s32 0, %v1369
        %v1371 = vrot.slane %v1367, %v1370
        %v1373 = vsel %vm1074, %v1355, 0
        %v1376 = vsel %vm1074, %v1356, 0
        %v1379 = vsel %vm1074, %v1357, 0
        %1381 = vmatprep.subr.mxu0 0.0
        %1382 = vmatpush1.msra.mxu0 0.0
        %1383 = vmatprep.subr.mxu0 0.0
        %1384 = vmatpush1.msra.mxu0 0.0
        %1385 = vmatprep.subr.mxu0 0.0
        %1386 = vmatpush1.msra.mxu0 0.0
        %1387 = vmatprep.subr.mxu0 0.0
        %1388 = vmatpush1.msra.mxu0 0.0
        %1389 = vmatprep.subr.mxu0 0.0
        %1390 = vmatpush1.msra.mxu0 0.0
        %1391 = vmatprep.subr.mxu0 0.0
        %1392 = vmatpush1.msra.mxu0 0.0
        %1393 = vmatprep.subr.mxu0 0.0
        %1394 = vmatpush1.msra.mxu0 0.0
        %1395 = vmatprep.subr.mxu0 0.0
        %1396 = vmatpush1.msra.mxu0 %v1366
        %1397 = vmatprep.subr.mxu0 0.0
        %1398 = vmatpush1.msra.mxu0 %v1365
        %1399 = vmatprep.subr.mxu0 0.0
        %1400 = vmatpush1.msra.mxu0 %v1364
        %1401 = vmatprep.subr.mxu0 0.0
        %1402 = vmatpush1.msra.mxu0 %v1363
        %1403 = vmatprep.subr.mxu0 0.0
        %1404 = vmatpush1.msra.mxu0 %v1362
        %1405 = vmatprep.subr.mxu0 0.0
        %1406 = vmatpush1.msra.mxu0 %v1361
        %1407 = vmatprep.subr.mxu0 0.0
        %1408 = vmatpush1.msra.mxu0 %v1360
        %1409 = vmatprep.subr.mxu0 0.0
        %1410 = vmatpush1.msra.mxu0 %v1359
        %1411 = vmatprep.subr.mxu0 0.0
        %1412 = vmatpush1.msra.mxu0 %v1358
        %1413 = vmatprep.subr.mxu0 0.0
        %1414 = vmatpush2.msra.mxu0 0.0
        %1415 = vmatprep.subr.mxu0 0.0
        %1416 = vmatpush2.msra.mxu0 0.0
        %1417 = vmatprep.subr.mxu0 0.0
        %1418 = vmatpush2.msra.mxu0 0.0
        %1419 = vmatprep.subr.mxu0 0.0
        %1420 = vmatpush2.msra.mxu0 0.0
        %1421 = vmatprep.subr.mxu0 0.0
        %1422 = vmatpush2.msra.mxu0 0.0
        %1423 = vmatprep.subr.mxu0 0.0
        %1424 = vmatpush2.msra.mxu0 0.0
        %1425 = vmatprep.subr.mxu0 0.0
        %1426 = vmatpush2.msra.mxu0 0.0
        %1427 = vmatprep.subr.mxu0 0.0
        %1428 = vmatpush2.msra.mxu0 0.0
        %1429 = vmatprep.subr.mxu0 0.0
        %1430 = vmatpush2.msra.mxu0 0.0
        %1431 = vmatprep.subr.mxu0 0.0
        %1432 = vmatpush2.msra.mxu0 0.0
        %1433 = vmatprep.subr.mxu0 0.0
        %1434 = vmatpush2.msra.mxu0 0.0
        %1435 = vmatprep.subr.mxu0 0.0
        %1436 = vmatpush2.msra.mxu0 0.0
        %1437 = vmatprep.subr.mxu0 0.0
        %1438 = vmatpush2.msra.mxu0 0.0
        %1439 = vmatprep.subr.mxu0 0.0
        %1440 = vmatpush2.msra.mxu0 0.0
        %1441 = vmatprep.subr.mxu0 0.0
        %1442 = vmatpush2.msra.mxu0 0.0
        %1443 = vmatprep.subr.mxu0 0.0
        %1444 = vmatpush2.msra.mxu0 0.0
        %1445 = vmatprep.mubr.f32.mxu0 0.0
        %1446 = vmatmul.mubr.f32.gmra.mxu0 %v1373
        %v1447 = vpop.f32.mrf.mxu0
        %v1448 = vadd.f32 %v1371, %v1447
        %v1449 = vpop.f32.mrf.mxu0
        %1450 = vmatprep.mubr.f32.mxu0 0.0
        %1451 = vmatmul.mubr.f32.gmra.mxu0 %v1376
        %v1452 = vpop.f32.mrf.mxu0
        %v1453 = vadd.f32 %v1371, %v1452
        %v1454 = vpop.f32.mrf.mxu0
        %1455 = vmatprep.mubr.f32.mxu0 0.0
        %1456 = vmatmul.mubr.f32.gmra.mxu0 %v1379
        %v1457 = vpop.f32.mrf.mxu0
        %v1458 = vadd.f32 %v1371, %v1457
        %v1459 = vpop.f32.mrf.mxu0
        %1460 = vdwg.mxu0
        %v1461 = vadd.f32 %v1448, %v1167
        %v1462 = vadd.f32 %v1453, %v1168
        %v1463 = vadd.f32 %v1458, %v1169
        %v1464 = vmax.f32 %v1461, 0.0
        %v1465 = vmax.f32 %v1462, 0.0
        %v1466 = vmax.f32 %v1463, 0.0
        %1467 = vst.msk [vmem:[#allocation2] sm:$0x1] %vm1016, 0.0
        %1468 = vst.msk [vmem:[#allocation2 + $0x1] sm:$0xff] %vm1018, %v1464
        %1469 = vst.msk [vmem:[#allocation2 + $0x9] sm:$0xff] %vm1018, %v1465
        %1470 = vst.msk [vmem:[#allocation2 + $0x11] sm:$0x1] %vm1016, %v1466
        %1471 = vst.msk [vmem:[#allocation2 + $0x12] sm:$0x1] %vm1016, 0.0
        %v1472 = vld [vmem:[#allocation2] sm:$0xff]
        %v1473 = vld [vmem:[#allocation2 + $0x8] sm:$0xff]
        %v1474 = vld [vmem:[#allocation2 + $0x10] sm:$0x1]
        %v1475 = vld [vmem:[#allocation2 + $0x2] sm:$0xff]
        %v1476 = vld [vmem:[#allocation2 + $0xa] sm:$0xff]
        %v1477 = vld [vmem:[#allocation2 + $0x12] sm:$0x1]
        %1481 = vrot.lane.b32.xlu0 %v1464, 24
        %v1482 = vpop.permute.xlu0 %1481
        %1483 = vrot.lane.b32.xlu0 %v1465, 24
        %v1484 = vpop.permute.xlu0 %1483
        %1485 = vrot.lane.b32.xlu0 %v1466, 24
        %v1486 = vpop.permute.xlu0 %1485
        %1493 = vrot.lane.b32.xlu0 %v1475, 48
        %v1494 = vpop.permute.xlu0 %1493
        %1495 = vrot.lane.b32.xlu0 %v1476, 48
        %v1496 = vpop.permute.xlu0 %1495
        %1497 = vrot.lane.b32.xlu0 %v1477, 48
        %v1498 = vpop.permute.xlu0 %1497
        %v1502 = vsel %vm1018, %v1472, %v1482
        %v1503 = vsel %vm1018, %v1473, %v1484
        %v1504 = vsel %vm1018, %v1474, %v1486
        %v1505 = vsel %vm1056, %v1502, %v1494
        %v1506 = vsel %vm1056, %v1503, %v1496
        %v1507 = vsel %vm1056, %v1504, %v1498
        %v1508 = vld [vmem:[%s1 + $0x5e0] sm:$0xff]
        %v1509 = vld [vmem:[%s1 + $0x5e8] sm:$0xff]
        %v1510 = vld [vmem:[%s1 + $0x5f0] sm:$0xff]
        %v1511 = vld [vmem:[%s1 + $0x5f8] sm:$0xff]
        %v1512 = vld [vmem:[%s1 + $0x600] sm:$0xff]
        %v1513 = vld [vmem:[%s1 + $0x608] sm:$0xff]
        %v1514 = vld [vmem:[%s1 + $0x610] sm:$0xff]
        %v1515 = vld [vmem:[%s1 + $0x618] sm:$0xff]
        %v1516 = vld [vmem:[%s1 + $0x620] sm:$0xff]
        %v1517 = vld [vmem:[%s1 + $0x628] sm:$0x1]
        %v1518 = vlaneseq
        %v1519 = vshrl.u32 %v1518, 7
        %v1520 = vsub.s32 0, %v1519
        %v1521 = vrot.slane %v1517, %v1520
        %v1523 = vsel %vm1074, %v1505, 0
        %v1526 = vsel %vm1074, %v1506, 0
        %v1529 = vsel %vm1074, %v1507, 0
        %1531 = vmatprep.subr.mxu0 0.0
        %1532 = vmatpush1.msra.mxu0 0.0
        %1533 = vmatprep.subr.mxu0 0.0
        %1534 = vmatpush1.msra.mxu0 0.0
        %1535 = vmatprep.subr.mxu0 0.0
        %1536 = vmatpush1.msra.mxu0 0.0
        %1537 = vmatprep.subr.mxu0 0.0
        %1538 = vmatpush1.msra.mxu0 0.0
        %1539 = vmatprep.subr.mxu0 0.0
        %1540 = vmatpush1.msra.mxu0 0.0
        %1541 = vmatprep.subr.mxu0 0.0
        %1542 = vmatpush1.msra.mxu0 0.0
        %1543 = vmatprep.subr.mxu0 0.0
        %1544 = vmatpush1.msra.mxu0 0.0
        %1545 = vmatprep.subr.mxu0 0.0
        %1546 = vmatpush1.msra.mxu0 %v1516
        %1547 = vmatprep.subr.mxu0 0.0
        %1548 = vmatpush1.msra.mxu0 %v1515
        %1549 = vmatprep.subr.mxu0 0.0
        %1550 = vmatpush1.msra.mxu0 %v1514
        %1551 = vmatprep.subr.mxu0 0.0
        %1552 = vmatpush1.msra.mxu0 %v1513
        %1553 = vmatprep.subr.mxu0 0.0
        %1554 = vmatpush1.msra.mxu0 %v1512
        %1555 = vmatprep.subr.mxu0 0.0
        %1556 = vmatpush1.msra.mxu0 %v1511
        %1557 = vmatprep.subr.mxu0 0.0
        %1558 = vmatpush1.msra.mxu0 %v1510
        %1559 = vmatprep.subr.mxu0 0.0
        %1560 = vmatpush1.msra.mxu0 %v1509
        %1561 = vmatprep.subr.mxu0 0.0
        %1562 = vmatpush1.msra.mxu0 %v1508
        %1563 = vmatprep.subr.mxu0 0.0
        %1564 = vmatpush2.msra.mxu0 0.0
        %1565 = vmatprep.subr.mxu0 0.0
        %1566 = vmatpush2.msra.mxu0 0.0
        %1567 = vmatprep.subr.mxu0 0.0
        %1568 = vmatpush2.msra.mxu0 0.0
        %1569 = vmatprep.subr.mxu0 0.0
        %1570 = vmatpush2.msra.mxu0 0.0
        %1571 = vmatprep.subr.mxu0 0.0
        %1572 = vmatpush2.msra.mxu0 0.0
        %1573 = vmatprep.subr.mxu0 0.0
        %1574 = vmatpush2.msra.mxu0 0.0
        %1575 = vmatprep.subr.mxu0 0.0
        %1576 = vmatpush2.msra.mxu0 0.0
        %1577 = vmatprep.subr.mxu0 0.0
        %1578 = vmatpush2.msra.mxu0 0.0
        %1579 = vmatprep.subr.mxu0 0.0
        %1580 = vmatpush2.msra.mxu0 0.0
        %1581 = vmatprep.subr.mxu0 0.0
        %1582 = vmatpush2.msra.mxu0 0.0
        %1583 = vmatprep.subr.mxu0 0.0
        %1584 = vmatpush2.msra.mxu0 0.0
        %1585 = vmatprep.subr.mxu0 0.0
        %1586 = vmatpush2.msra.mxu0 0.0
        %1587 = vmatprep.subr.mxu0 0.0
        %1588 = vmatpush2.msra.mxu0 0.0
        %1589 = vmatprep.subr.mxu0 0.0
        %1590 = vmatpush2.msra.mxu0 0.0
        %1591 = vmatprep.subr.mxu0 0.0
        %1592 = vmatpush2.msra.mxu0 0.0
        %1593 = vmatprep.subr.mxu0 0.0
        %1594 = vmatpush2.msra.mxu0 0.0
        %1595 = vmatprep.mubr.f32.mxu0 0.0
        %1596 = vmatmul.mubr.f32.gmra.mxu0 %v1523
        %v1597 = vpop.f32.mrf.mxu0
        %v1598 = vadd.f32 %v1521, %v1597
        %v1599 = vpop.f32.mrf.mxu0
        %1600 = vmatprep.mubr.f32.mxu0 0.0
        %1601 = vmatmul.mubr.f32.gmra.mxu0 %v1526
        %v1602 = vpop.f32.mrf.mxu0
        %v1603 = vadd.f32 %v1521, %v1602
        %v1604 = vpop.f32.mrf.mxu0
        %1605 = vmatprep.mubr.f32.mxu0 0.0
        %1606 = vmatmul.mubr.f32.gmra.mxu0 %v1529
        %v1607 = vpop.f32.mrf.mxu0
        %v1608 = vadd.f32 %v1521, %v1607
        %v1609 = vpop.f32.mrf.mxu0
        %1610 = vdwg.mxu0
        %v1611 = vmax.f32 %v1598, 0.0
        %v1612 = vmax.f32 %v1603, 0.0
        %v1613 = vmax.f32 %v1608, 0.0
        %1614 = vst.msk [vmem:[#allocation2] sm:$0x1] %vm1016, 0.0
        %1615 = vst.msk [vmem:[#allocation2 + $0x1] sm:$0xff] %vm1018, %v1611
        %1616 = vst.msk [vmem:[#allocation2 + $0x9] sm:$0xff] %vm1018, %v1612
        %1617 = vst.msk [vmem:[#allocation2 + $0x11] sm:$0x1] %vm1016, %v1613
        %1618 = vst.msk [vmem:[#allocation2 + $0x12] sm:$0x1] %vm1016, 0.0
        %v1619 = vld [vmem:[#allocation2] sm:$0xff]
        %v1620 = vld [vmem:[#allocation2 + $0x8] sm:$0xff]
        %v1621 = vld [vmem:[#allocation2 + $0x10] sm:$0x1]
        %v1622 = vld [vmem:[#allocation2 + $0x2] sm:$0xff]
        %v1623 = vld [vmem:[#allocation2 + $0xa] sm:$0xff]
        %v1624 = vld [vmem:[#allocation2 + $0x12] sm:$0x1]
        %1628 = vrot.lane.b32.xlu0 %v1611, 24
        %v1629 = vpop.permute.xlu0 %1628
        %1630 = vrot.lane.b32.xlu0 %v1612, 24
        %v1631 = vpop.permute.xlu0 %1630
        %1632 = vrot.lane.b32.xlu0 %v1613, 24
        %v1633 = vpop.permute.xlu0 %1632
        %1640 = vrot.lane.b32.xlu0 %v1622, 48
        %v1641 = vpop.permute.xlu0 %1640
        %1642 = vrot.lane.b32.xlu0 %v1623, 48
        %v1643 = vpop.permute.xlu0 %1642
        %1644 = vrot.lane.b32.xlu0 %v1624, 48
        %v1645 = vpop.permute.xlu0 %1644
        %v1649 = vsel %vm1018, %v1619, %v1629
        %v1650 = vsel %vm1018, %v1620, %v1631
        %v1651 = vsel %vm1018, %v1621, %v1633
        %v1652 = vsel %vm1056, %v1649, %v1641
        %v1653 = vsel %vm1056, %v1650, %v1643
        %v1654 = vsel %vm1056, %v1651, %v1645
        %v1655 = vld [vmem:[%s1 + $0x630] sm:$0xff]
        %v1656 = vld [vmem:[%s1 + $0x638] sm:$0xff]
        %v1657 = vld [vmem:[%s1 + $0x640] sm:$0xff]
        %v1658 = vld [vmem:[%s1 + $0x648] sm:$0xff]
        %v1659 = vld [vmem:[%s1 + $0x650] sm:$0xff]
        %v1660 = vld [vmem:[%s1 + $0x658] sm:$0xff]
        %v1661 = vld [vmem:[%s1 + $0x660] sm:$0xff]
        %v1662 = vld [vmem:[%s1 + $0x668] sm:$0xff]
        %v1663 = vld [vmem:[%s1 + $0x670] sm:$0xff]
        %v1664 = vld [vmem:[%s1 + $0x678] sm:$0x1]
        %v1665 = vlaneseq
        %v1666 = vshrl.u32 %v1665, 7
        %v1667 = vsub.s32 0, %v1666
        %v1668 = vrot.slane %v1664, %v1667
        %v1670 = vsel %vm1074, %v1652, 0
        %v1673 = vsel %vm1074, %v1653, 0
        %v1676 = vsel %vm1074, %v1654, 0
        %1678 = vmatprep.subr.mxu0 0.0
        %1679 = vmatpush1.msra.mxu0 0.0
        %1680 = vmatprep.subr.mxu0 0.0
        %1681 = vmatpush1.msra.mxu0 0.0
        %1682 = vmatprep.subr.mxu0 0.0
        %1683 = vmatpush1.msra.mxu0 0.0
        %1684 = vmatprep.subr.mxu0 0.0
        %1685 = vmatpush1.msra.mxu0 0.0
        %1686 = vmatprep.subr.mxu0 0.0
        %1687 = vmatpush1.msra.mxu0 0.0
        %1688 = vmatprep.subr.mxu0 0.0
        %1689 = vmatpush1.msra.mxu0 0.0
        %1690 = vmatprep.subr.mxu0 0.0
        %1691 = vmatpush1.msra.mxu0 0.0
        %1692 = vmatprep.subr.mxu0 0.0
        %1693 = vmatpush1.msra.mxu0 %v1663
        %1694 = vmatprep.subr.mxu0 0.0
        %1695 = vmatpush1.msra.mxu0 %v1662
        %1696 = vmatprep.subr.mxu0 0.0
        %1697 = vmatpush1.msra.mxu0 %v1661
        %1698 = vmatprep.subr.mxu0 0.0
        %1699 = vmatpush1.msra.mxu0 %v1660
        %1700 = vmatprep.subr.mxu0 0.0
        %1701 = vmatpush1.msra.mxu0 %v1659
        %1702 = vmatprep.subr.mxu0 0.0
        %1703 = vmatpush1.msra.mxu0 %v1658
        %1704 = vmatprep.subr.mxu0 0.0
        %1705 = vmatpush1.msra.mxu0 %v1657
        %1706 = vmatprep.subr.mxu0 0.0
        %1707 = vmatpush1.msra.mxu0 %v1656
        %1708 = vmatprep.subr.mxu0 0.0
        %1709 = vmatpush1.msra.mxu0 %v1655
        %1710 = vmatprep.subr.mxu0 0.0
        %1711 = vmatpush2.msra.mxu0 0.0
        %1712 = vmatprep.subr.mxu0 0.0
        %1713 = vmatpush2.msra.mxu0 0.0
        %1714 = vmatprep.subr.mxu0 0.0
        %1715 = vmatpush2.msra.mxu0 0.0
        %1716 = vmatprep.subr.mxu0 0.0
        %1717 = vmatpush2.msra.mxu0 0.0
        %1718 = vmatprep.subr.mxu0 0.0
        %1719 = vmatpush2.msra.mxu0 0.0
        %1720 = vmatprep.subr.mxu0 0.0
        %1721 = vmatpush2.msra.mxu0 0.0
        %1722 = vmatprep.subr.mxu0 0.0
        %1723 = vmatpush2.msra.mxu0 0.0
        %1724 = vmatprep.subr.mxu0 0.0
        %1725 = vmatpush2.msra.mxu0 0.0
        %1726 = vmatprep.subr.mxu0 0.0
        %1727 = vmatpush2.msra.mxu0 0.0
        %1728 = vmatprep.subr.mxu0 0.0
        %1729 = vmatpush2.msra.mxu0 0.0
        %1730 = vmatprep.subr.mxu0 0.0
        %1731 = vmatpush2.msra.mxu0 0.0
        %1732 = vmatprep.subr.mxu0 0.0
        %1733 = vmatpush2.msra.mxu0 0.0
        %1734 = vmatprep.subr.mxu0 0.0
        %1735 = vmatpush2.msra.mxu0 0.0
        %1736 = vmatprep.subr.mxu0 0.0
        %1737 = vmatpush2.msra.mxu0 0.0
        %1738 = vmatprep.subr.mxu0 0.0
        %1739 = vmatpush2.msra.mxu0 0.0
        %1740 = vmatprep.subr.mxu0 0.0
        %1741 = vmatpush2.msra.mxu0 0.0
        %1742 = vmatprep.mubr.f32.mxu0 0.0
        %1743 = vmatmul.mubr.f32.gmra.mxu0 %v1670
        %v1744 = vpop.f32.mrf.mxu0
        %v1745 = vadd.f32 %v1668, %v1744
        %v1746 = vpop.f32.mrf.mxu0
        %1747 = vmatprep.mubr.f32.mxu0 0.0
        %1748 = vmatmul.mubr.f32.gmra.mxu0 %v1673
        %v1749 = vpop.f32.mrf.mxu0
        %v1750 = vadd.f32 %v1668, %v1749
        %v1751 = vpop.f32.mrf.mxu0
        %1752 = vmatprep.mubr.f32.mxu0 0.0
        %1753 = vmatmul.mubr.f32.gmra.mxu0 %v1676
        %v1754 = vpop.f32.mrf.mxu0
        %v1755 = vadd.f32 %v1668, %v1754
        %v1756 = vpop.f32.mrf.mxu0
        %1757 = vdwg.mxu0
        %v1758 = vadd.f32 %v1745, %v1464
        %v1759 = vadd.f32 %v1750, %v1465
        %v1760 = vadd.f32 %v1755, %v1466
        %v1761 = vmax.f32 %v1758, 0.0
        %v1762 = vmax.f32 %v1759, 0.0
        %v1763 = vmax.f32 %v1760, 0.0
        %1764 = vst.msk [vmem:[#allocation2] sm:$0x1] %vm1016, 0.0
        %1765 = vst.msk [vmem:[#allocation2 + $0x1] sm:$0xff] %vm1018, %v1761
        %1766 = vst.msk [vmem:[#allocation2 + $0x9] sm:$0xff] %vm1018, %v1762
        %1767 = vst.msk [vmem:[#allocation2 + $0x11] sm:$0x1] %vm1016, %v1763
        %1768 = vst.msk [vmem:[#allocation2 + $0x12] sm:$0x1] %vm1016, 0.0
        %v1769 = vld [vmem:[#allocation2] sm:$0xff]
        %v1770 = vld [vmem:[#allocation2 + $0x8] sm:$0xff]
        %v1771 = vld [vmem:[#allocation2 + $0x10] sm:$0x1]
        %v1772 = vld [vmem:[#allocation2 + $0x2] sm:$0xff]
        %v1773 = vld [vmem:[#allocation2 + $0xa] sm:$0xff]
        %v1774 = vld [vmem:[#allocation2 + $0x12] sm:$0x1]
        %1778 = vrot.lane.b32.xlu0 %v1761, 24
        %v1779 = vpop.permute.xlu0 %1778
        %1780 = vrot.lane.b32.xlu0 %v1762, 24
        %v1781 = vpop.permute.xlu0 %1780
        %1782 = vrot.lane.b32.xlu0 %v1763, 24
        %v1783 = vpop.permute.xlu0 %1782
        %1790 = vrot.lane.b32.xlu0 %v1772, 48
        %v1791 = vpop.permute.xlu0 %1790
        %1792 = vrot.lane.b32.xlu0 %v1773, 48
        %v1793 = vpop.permute.xlu0 %1792
        %1794 = vrot.lane.b32.xlu0 %v1774, 48
        %v1795 = vpop.permute.xlu0 %1794
        %v1799 = vsel %vm1018, %v1769, %v1779
        %v1800 = vsel %vm1018, %v1770, %v1781
        %v1801 = vsel %vm1018, %v1771, %v1783
        %v1802 = vsel %vm1056, %v1799, %v1791
        %v1803 = vsel %vm1056, %v1800, %v1793
        %v1804 = vsel %vm1056, %v1801, %v1795
        %v1805 = vlaneseq
        %v1806 = vshrl.u32 %v1805, 7
        %v1807 = vadd.s32 %v1806, 8
        %v1808 = vlaneseq
        %v1809 = vand.u32 %v1808, 127
        %v1810 = vmul.u32 %v1806, 2
        %v1811 = vmul.u32 %v1807, 2
        %vm1812 = vcmp.eq.s32.totalorder %v1809, %v1810
        %vm1813 = vcmp.eq.s32.totalorder %v1809, %v1811
        %v1814 = vsel %vm1812, 1.0, 0.0
        %v1815 = vsel %vm1813, 1.0, 0.0
        %vm1816 = vcmask 138240
        %v1818 = vsel %vm1816, %v1814, 0
        %v1821 = vsel %vm1816, %v1815, 0
        %v1824 = vsel %vm738, %v1804, 0
        %1826 = vmatprep.subr.mxu0 0.0
        %1827 = vmatpush1.msra.mxu0 0.0
        %1828 = vmatprep.subr.mxu0 0.0
        %1829 = vmatpush1.msra.mxu0 0.0
        %1830 = vmatprep.subr.mxu0 0.0
        %1831 = vmatpush1.msra.mxu0 0.0
        %1832 = vmatprep.subr.mxu0 0.0
        %1833 = vmatpush1.msra.mxu0 0.0
        %1834 = vmatprep.subr.mxu0 0.0
        %1835 = vmatpush1.msra.mxu0 0.0
        %1836 = vmatprep.subr.mxu0 0.0
        %1837 = vmatpush1.msra.mxu0 0.0
        %1838 = vmatprep.subr.mxu0 0.0
        %1839 = vmatpush1.msra.mxu0 0.0
        %1840 = vmatprep.subr.mxu0 0.0
        %1841 = vmatpush1.msra.mxu0 0.0
        %1842 = vmatprep.subr.mxu0 0.0
        %1843 = vmatpush1.msra.mxu0 0.0
        %1844 = vmatprep.subr.mxu0 0.0
        %1845 = vmatpush1.msra.mxu0 0.0
        %1846 = vmatprep.subr.mxu0 0.0
        %1847 = vmatpush1.msra.mxu0 0.0
        %1848 = vmatprep.subr.mxu0 0.0
        %1849 = vmatpush1.msra.mxu0 0.0
        %1850 = vmatprep.subr.mxu0 0.0
        %1851 = vmatpush1.msra.mxu0 0.0
        %1852 = vmatprep.subr.mxu0 0.0
        %1853 = vmatpush1.msra.mxu0 %v1824
        %1854 = vmatprep.subr.mxu0 0.0
        %1855 = vmatpush1.msra.mxu0 %v1803
        %1856 = vmatprep.subr.mxu0 0.0
        %1857 = vmatpush1.msra.mxu0 %v1802
        %1858 = vmatprep.subr.mxu0 0.0
        %1859 = vmatpush2.msra.mxu0 0.0
        %1860 = vmatprep.subr.mxu0 0.0
        %1861 = vmatpush2.msra.mxu0 0.0
        %1862 = vmatprep.subr.mxu0 0.0
        %1863 = vmatpush2.msra.mxu0 0.0
        %1864 = vmatprep.subr.mxu0 0.0
        %1865 = vmatpush2.msra.mxu0 0.0
        %1866 = vmatprep.subr.mxu0 0.0
        %1867 = vmatpush2.msra.mxu0 0.0
        %1868 = vmatprep.subr.mxu0 0.0
        %1869 = vmatpush2.msra.mxu0 0.0
        %1870 = vmatprep.subr.mxu0 0.0
        %1871 = vmatpush2.msra.mxu0 0.0
        %1872 = vmatprep.subr.mxu0 0.0
        %1873 = vmatpush2.msra.mxu0 0.0
        %1874 = vmatprep.subr.mxu0 0.0
        %1875 = vmatpush2.msra.mxu0 0.0
        %1876 = vmatprep.subr.mxu0 0.0
        %1877 = vmatpush2.msra.mxu0 0.0
        %1878 = vmatprep.subr.mxu0 0.0
        %1879 = vmatpush2.msra.mxu0 0.0
        %1880 = vmatprep.subr.mxu0 0.0
        %1881 = vmatpush2.msra.mxu0 0.0
        %1882 = vmatprep.subr.mxu0 0.0
        %1883 = vmatpush2.msra.mxu0 0.0
        %1884 = vmatprep.subr.mxu0 0.0
        %1885 = vmatpush2.msra.mxu0 0.0
        %1886 = vmatprep.subr.mxu0 0.0
        %1887 = vmatpush2.msra.mxu0 0.0
        %1888 = vmatprep.subr.mxu0 0.0
        %1889 = vmatpush2.msra.mxu0 0.0
        %1890 = vmatprep.mubr.f32.mxu0 0.0
        %1891 = vmatmul.mubr.f32.gmra.mxu0 %v1818
        %v1892 = vpop.f32.mrf.mxu0
        %v1893 = vadd.f32 0.0, %v1892
        %v1894 = vpop.f32.mrf.mxu0
        %1895 = vmatprep.mubr.f32.mxu0 0.0
        %1896 = vmatmul.mubr.f32.gmra.mxu0 %v1821
        %v1897 = vpop.f32.mrf.mxu0
        %v1898 = vadd.f32 0.0, %v1897
        %v1899 = vpop.f32.mrf.mxu0
        %1900 = vdwg.mxu0
        %1903 = vrot.lane.b32.xlu0 %v1893, 108
        %v1904 = vpop.permute.xlu0 %1903
        %1905 = vrot.lane.b32.xlu0 %v1898, 108
        %v1906 = vpop.permute.xlu0 %1905
        %vm1909 = vcmask 31744
        %v1910 = vsel %vm1909, 0.0, %v1904
        %v1911 = vsel %vm1909, 0.0, %v1906
        %vm1912 = vcmask 228352
        %v1913 = vsel %vm1912, %v1910, 0.0
        %v1914 = vsel %vm1912, %v1911, 0.0
        %v1915 = vld [vmem:[%s1 + $0x680] sm:$0xff]
        %v1916 = vld [vmem:[%s1 + $0x688] sm:$0xff]
        %v1917 = vld [vmem:[%s1 + $0x690] sm:$0xff]
        %v1918 = vld [vmem:[%s1 + $0x698] sm:$0xff]
        %v1919 = vld [vmem:[%s1 + $0x6a0] sm:$0xff]
        %v1920 = vld [vmem:[%s1 + $0x6a8] sm:$0xff]
        %v1921 = vld [vmem:[%s1 + $0x6b0] sm:$0xff]
        %v1922 = vld [vmem:[%s1 + $0x6b8] sm:$0xff]
        %v1923 = vld [vmem:[%s1 + $0x6c0] sm:$0xff]
        %v1924 = vld [vmem:[%s1 + $0x6c8] sm:$0x1]
        %v1925 = vlaneseq
        %v1926 = vshrl.u32 %v1925, 7
        %v1927 = vsub.s32 0, %v1926
        %v1928 = vrot.slane %v1924, %v1927
        %v1929 = vsel %vm1074, %v1893, 0
        %v1931 = vsel %vm1074, %v1898, 0
        %1933 = vmatprep.subr.mxu0 0.0
        %1934 = vmatpush1.msra.mxu0 0.0
        %1935 = vmatprep.subr.mxu0 0.0
        %1936 = vmatpush1.msra.mxu0 0.0
        %1937 = vmatprep.subr.mxu0 0.0
        %1938 = vmatpush1.msra.mxu0 0.0
        %1939 = vmatprep.subr.mxu0 0.0
        %1940 = vmatpush1.msra.mxu0 0.0
        %1941 = vmatprep.subr.mxu0 0.0
        %1942 = vmatpush1.msra.mxu0 0.0
        %1943 = vmatprep.subr.mxu0 0.0
        %1944 = vmatpush1.msra.mxu0 0.0
        %1945 = vmatprep.subr.mxu0 0.0
        %1946 = vmatpush1.msra.mxu0 0.0
        %1947 = vmatprep.subr.mxu0 0.0
        %1948 = vmatpush1.msra.mxu0 %v1923
        %1949 = vmatprep.subr.mxu0 0.0
        %1950 = vmatpush1.msra.mxu0 %v1922
        %1951 = vmatprep.subr.mxu0 0.0
        %1952 = vmatpush1.msra.mxu0 %v1921
        %1953 = vmatprep.subr.mxu0 0.0
        %1954 = vmatpush1.msra.mxu0 %v1920
        %1955 = vmatprep.subr.mxu0 0.0
        %1956 = vmatpush1.msra.mxu0 %v1919
        %1957 = vmatprep.subr.mxu0 0.0
        %1958 = vmatpush1.msra.mxu0 %v1918
        %1959 = vmatprep.subr.mxu0 0.0
        %1960 = vmatpush1.msra.mxu0 %v1917
        %1961 = vmatprep.subr.mxu0 0.0
        %1962 = vmatpush1.msra.mxu0 %v1916
        %1963 = vmatprep.subr.mxu0 0.0
        %1964 = vmatpush1.msra.mxu0 %v1915
        %1965 = vmatprep.subr.mxu0 0.0
        %1966 = vmatpush2.msra.mxu0 0.0
        %1967 = vmatprep.subr.mxu0 0.0
        %1968 = vmatpush2.msra.mxu0 0.0
        %1969 = vmatprep.subr.mxu0 0.0
        %1970 = vmatpush2.msra.mxu0 0.0
        %1971 = vmatprep.subr.mxu0 0.0
        %1972 = vmatpush2.msra.mxu0 0.0
        %1973 = vmatprep.subr.mxu0 0.0
        %1974 = vmatpush2.msra.mxu0 0.0
        %1975 = vmatprep.subr.mxu0 0.0
        %1976 = vmatpush2.msra.mxu0 0.0
        %1977 = vmatprep.subr.mxu0 0.0
        %1978 = vmatpush2.msra.mxu0 0.0
        %1979 = vmatprep.subr.mxu0 0.0
        %1980 = vmatpush2.msra.mxu0 0.0
        %1981 = vmatprep.subr.mxu0 0.0
        %1982 = vmatpush2.msra.mxu0 0.0
        %1983 = vmatprep.subr.mxu0 0.0
        %1984 = vmatpush2.msra.mxu0 0.0
        %1985 = vmatprep.subr.mxu0 0.0
        %1986 = vmatpush2.msra.mxu0 0.0
        %1987 = vmatprep.subr.mxu0 0.0
        %1988 = vmatpush2.msra.mxu0 0.0
        %1989 = vmatprep.subr.mxu0 0.0
        %1990 = vmatpush2.msra.mxu0 0.0
        %1991 = vmatprep.subr.mxu0 0.0
        %1992 = vmatpush2.msra.mxu0 0.0
        %1993 = vmatprep.subr.mxu0 0.0
        %1994 = vmatpush2.msra.mxu0 0.0
        %1995 = vmatprep.subr.mxu0 0.0
        %1996 = vmatpush2.msra.mxu0 0.0
        %1997 = vmatprep.mubr.f32.mxu0 0.0
        %1998 = vmatmul.mubr.f32.gmra.mxu0 %v1929
        %v1999 = vpop.f32.mrf.mxu0
        %v2000 = vadd.f32 %v1928, %v1999
        %v2001 = vpop.f32.mrf.mxu0
        %2002 = vmatprep.mubr.f32.mxu0 0.0
        %2003 = vmatmul.mubr.f32.gmra.mxu0 %v1931
        %v2004 = vpop.f32.mrf.mxu0
        %v2005 = vadd.f32 %v1928, %v2004
        %v2006 = vpop.f32.mrf.mxu0
        %2007 = vdwg.mxu0
        %v2008 = vmax.f32 %v2000, 0.0
        %v2009 = vmax.f32 %v2005, 0.0
        %vm2010 = vcmask 253952
        %2011 = vst.msk [vmem:[#allocation2] sm:$0x1] %vm2010, 0.0
        %vm2012 = vcmask 261120
        %2013 = vst.msk [vmem:[#allocation2 + $0x1] sm:$0xff] %vm2012, %v2008
        %2014 = vst.msk [vmem:[#allocation2 + $0x9] sm:$0x1] %vm2010, %v2009
        %2015 = vst.msk [vmem:[#allocation2 + $0xa] sm:$0x1] %vm2010, 0.0
        %v2016 = vld [vmem:[#allocation2] sm:$0xff]
        %v2017 = vld [vmem:[#allocation2 + $0x8] sm:$0x1]
        %v2018 = vld [vmem:[#allocation2 + $0x2] sm:$0xff]
        %v2019 = vld [vmem:[#allocation2 + $0xa] sm:$0x1]
        %2022 = vrot.lane.b32.xlu0 %v2008, 32
        %v2023 = vpop.permute.xlu0 %2022
        %2024 = vrot.lane.b32.xlu0 %v2009, 32
        %v2025 = vpop.permute.xlu0 %2024
        %2030 = vrot.lane.b32.xlu0 %v2018, 64
        %v2031 = vpop.permute.xlu0 %2030
        %2032 = vrot.lane.b32.xlu0 %v2019, 64
        %v2033 = vpop.permute.xlu0 %2032
        %v2036 = vsel %vm2012, %v2016, %v2023
        %v2037 = vsel %vm2012, %v2017, %v2025
        %vm2038 = vcmask 523264
        %v2039 = vsel %vm2038, %v2036, %v2031
        %v2040 = vsel %vm2038, %v2037, %v2033
        %v2041 = vld [vmem:[%s1 + $0x6d0] sm:$0xff]
        %v2042 = vld [vmem:[%s1 + $0x6d8] sm:$0xff]
        %v2043 = vld [vmem:[%s1 + $0x6e0] sm:$0xff]
        %v2044 = vld [vmem:[%s1 + $0x6e8] sm:$0xff]
        %v2045 = vld [vmem:[%s1 + $0x6f0] sm:$0xff]
        %v2046 = vld [vmem:[%s1 + $0x6f8] sm:$0xff]
        %v2047 = vld [vmem:[%s1 + $0x700] sm:$0xff]
        %v2048 = vld [vmem:[%s1 + $0x708] sm:$0xff]
        %v2049 = vld [vmem:[%s1 + $0x710] sm:$0xff]
        %v2050 = vld [vmem:[%s1 + $0x718] sm:$0xff]
        %v2051 = vld [vmem:[%s1 + $0x720] sm:$0xff]
        %v2052 = vld [vmem:[%s1 + $0x728] sm:$0xff]
        %v2053 = vld [vmem:[%s1 + $0x730] sm:$0x1]
        %v2054 = vlaneseq
        %v2055 = vshrl.u32 %v2054, 7
        %v2056 = vsub.s32 0, %v2055
        %v2057 = vrot.slane %v2053, %v2056
        %vm2058 = vcmask 785408
        %v2060 = vsel %vm2058, %v2039, 0
        %v2063 = vsel %vm2058, %v2040, 0
        %2065 = vmatprep.subr.mxu0 0.0
        %2066 = vmatpush1.msra.mxu0 0.0
        %2067 = vmatprep.subr.mxu0 0.0
        %2068 = vmatpush1.msra.mxu0 0.0
        %2069 = vmatprep.subr.mxu0 0.0
        %2070 = vmatpush1.msra.mxu0 0.0
        %2071 = vmatprep.subr.mxu0 0.0
        %2072 = vmatpush1.msra.mxu0 0.0
        %2073 = vmatprep.subr.mxu0 0.0
        %2074 = vmatpush1.msra.mxu0 %v2052
        %2075 = vmatprep.subr.mxu0 0.0
        %2076 = vmatpush1.msra.mxu0 %v2051
        %2077 = vmatprep.subr.mxu0 0.0
        %2078 = vmatpush1.msra.mxu0 %v2050
        %2079 = vmatprep.subr.mxu0 0.0
        %2080 = vmatpush1.msra.mxu0 %v2049
        %2081 = vmatprep.subr.mxu0 0.0
        %2082 = vmatpush1.msra.mxu0 %v2048
        %2083 = vmatprep.subr.mxu0 0.0
        %2084 = vmatpush1.msra.mxu0 %v2047
        %2085 = vmatprep.subr.mxu0 0.0
        %2086 = vmatpush1.msra.mxu0 %v2046
        %2087 = vmatprep.subr.mxu0 0.0
        %2088 = vmatpush1.msra.mxu0 %v2045
        %2089 = vmatprep.subr.mxu0 0.0
        %2090 = vmatpush1.msra.mxu0 %v2044
        %2091 = vmatprep.subr.mxu0 0.0
        %2092 = vmatpush1.msra.mxu0 %v2043
        %2093 = vmatprep.subr.mxu0 0.0
        %2094 = vmatpush1.msra.mxu0 %v2042
        %2095 = vmatprep.subr.mxu0 0.0
        %2096 = vmatpush1.msra.mxu0 %v2041
        %2097 = vmatprep.subr.mxu0 0.0
        %2098 = vmatpush2.msra.mxu0 0.0
        %2099 = vmatprep.subr.mxu0 0.0
        %2100 = vmatpush2.msra.mxu0 0.0
        %2101 = vmatprep.subr.mxu0 0.0
        %2102 = vmatpush2.msra.mxu0 0.0
        %2103 = vmatprep.subr.mxu0 0.0
        %2104 = vmatpush2.msra.mxu0 0.0
        %2105 = vmatprep.subr.mxu0 0.0
        %2106 = vmatpush2.msra.mxu0 0.0
        %2107 = vmatprep.subr.mxu0 0.0
        %2108 = vmatpush2.msra.mxu0 0.0
        %2109 = vmatprep.subr.mxu0 0.0
        %2110 = vmatpush2.msra.mxu0 0.0
        %2111 = vmatprep.subr.mxu0 0.0
        %2112 = vmatpush2.msra.mxu0 0.0
        %2113 = vmatprep.subr.mxu0 0.0
        %2114 = vmatpush2.msra.mxu0 0.0
        %2115 = vmatprep.subr.mxu0 0.0
        %2116 = vmatpush2.msra.mxu0 0.0
        %2117 = vmatprep.subr.mxu0 0.0
        %2118 = vmatpush2.msra.mxu0 0.0
        %2119 = vmatprep.subr.mxu0 0.0
        %2120 = vmatpush2.msra.mxu0 0.0
        %2121 = vmatprep.subr.mxu0 0.0
        %2122 = vmatpush2.msra.mxu0 0.0
        %2123 = vmatprep.subr.mxu0 0.0
        %2124 = vmatpush2.msra.mxu0 0.0
        %2125 = vmatprep.subr.mxu0 0.0
        %2126 = vmatpush2.msra.mxu0 0.0
        %2127 = vmatprep.subr.mxu0 0.0
        %2128 = vmatpush2.msra.mxu0 0.0
        %2129 = vmatprep.mubr.f32.mxu0 0.0
        %2130 = vmatmul.mubr.f32.gmra.mxu0 %v2060
        %v2131 = vpop.f32.mrf.mxu0
        %v2132 = vadd.f32 %v2057, %v2131
        %v2133 = vpop.f32.mrf.mxu0
        %2134 = vmatprep.mubr.f32.mxu0 0.0
        %2135 = vmatmul.mubr.f32.gmra.mxu0 %v2063
        %v2136 = vpop.f32.mrf.mxu0
        %v2137 = vadd.f32 %v2057, %v2136
        %v2138 = vpop.f32.mrf.mxu0
        %2139 = vdwg.mxu0
        %v2140 = vadd.f32 %v2132, %v1913
        %v2141 = vadd.f32 %v2137, %v1914
        %v2142 = vmax.f32 %v2140, 0.0
        %v2143 = vmax.f32 %v2141, 0.0
        %2144 = vst.msk [vmem:[#allocation2] sm:$0x1] %vm2010, 0.0
        %2145 = vst.msk [vmem:[#allocation2 + $0x1] sm:$0xff] %vm2012, %v2142
        %2146 = vst.msk [vmem:[#allocation2 + $0x9] sm:$0x1] %vm2010, %v2143
        %2147 = vst.msk [vmem:[#allocation2 + $0xa] sm:$0x1] %vm2010, 0.0
        %v2148 = vld [vmem:[#allocation2] sm:$0xff]
        %v2149 = vld [vmem:[#allocation2 + $0x8] sm:$0x1]
        %v2150 = vld [vmem:[#allocation2 + $0x2] sm:$0xff]
        %v2151 = vld [vmem:[#allocation2 + $0xa] sm:$0x1]
        %2154 = vrot.lane.b32.xlu0 %v2142, 32
        %v2155 = vpop.permute.xlu0 %2154
        %2156 = vrot.lane.b32.xlu0 %v2143, 32
        %v2157 = vpop.permute.xlu0 %2156
        %2162 = vrot.lane.b32.xlu0 %v2150, 64
        %v2163 = vpop.permute.xlu0 %2162
        %2164 = vrot.lane.b32.xlu0 %v2151, 64
        %v2165 = vpop.permute.xlu0 %2164
        %v2168 = vsel %vm2012, %v2148, %v2155
        %v2169 = vsel %vm2012, %v2149, %v2157
        %v2170 = vsel %vm2038, %v2168, %v2163
        %v2171 = vsel %vm2038, %v2169, %v2165
        %v2172 = vld [vmem:[%s1 + $0x738] sm:$0xff]
        %v2173 = vld [vmem:[%s1 + $0x740] sm:$0xff]
        %v2174 = vld [vmem:[%s1 + $0x748] sm:$0xff]
        %v2175 = vld [vmem:[%s1 + $0x750] sm:$0xff]
        %v2176 = vld [vmem:[%s1 + $0x758] sm:$0xff]
        %v2177 = vld [vmem:[%s1 + $0x760] sm:$0xff]
        %v2178 = vld [vmem:[%s1 + $0x768] sm:$0xff]
        %v2179 = vld [vmem:[%s1 + $0x770] sm:$0xff]
        %v2180 = vld [vmem:[%s1 + $0x778] sm:$0xff]
        %v2181 = vld [vmem:[%s1 + $0x780] sm:$0xff]
        %v2182 = vld [vmem:[%s1 + $0x788] sm:$0xff]
        %v2183 = vld [vmem:[%s1 + $0x790] sm:$0xff]
        %v2184 = vld [vmem:[%s1 + $0x798] sm:$0x1]
        %v2185 = vlaneseq
        %v2186 = vshrl.u32 %v2185, 7
        %v2187 = vsub.s32 0, %v2186
        %v2188 = vrot.slane %v2184, %v2187
        %v2190 = vsel %vm2058, %v2170, 0
        %v2193 = vsel %vm2058, %v2171, 0
        %2195 = vmatprep.subr.mxu0 0.0
        %2196 = vmatpush1.msra.mxu0 0.0
        %2197 = vmatprep.subr.mxu0 0.0
        %2198 = vmatpush1.msra.mxu0 0.0
        %2199 = vmatprep.subr.mxu0 0.0
        %2200 = vmatpush1.msra.mxu0 0.0
        %2201 = vmatprep.subr.mxu0 0.0
        %2202 = vmatpush1.msra.mxu0 0.0
        %2203 = vmatprep.subr.mxu0 0.0
        %2204 = vmatpush1.msra.mxu0 %v2183
        %2205 = vmatprep.subr.mxu0 0.0
        %2206 = vmatpush1.msra.mxu0 %v2182
        %2207 = vmatprep.subr.mxu0 0.0
        %2208 = vmatpush1.msra.mxu0 %v2181
        %2209 = vmatprep.subr.mxu0 0.0
        %2210 = vmatpush1.msra.mxu0 %v2180
        %2211 = vmatprep.subr.mxu0 0.0
        %2212 = vmatpush1.msra.mxu0 %v2179
        %2213 = vmatprep.subr.mxu0 0.0
        %2214 = vmatpush1.msra.mxu0 %v2178
        %2215 = vmatprep.subr.mxu0 0.0
        %2216 = vmatpush1.msra.mxu0 %v2177
        %2217 = vmatprep.subr.mxu0 0.0
        %2218 = vmatpush1.msra.mxu0 %v2176
        %2219 = vmatprep.subr.mxu0 0.0
        %2220 = vmatpush1.msra.mxu0 %v2175
        %2221 = vmatprep.subr.mxu0 0.0
        %2222 = vmatpush1.msra.mxu0 %v2174
        %2223 = vmatprep.subr.mxu0 0.0
        %2224 = vmatpush1.msra.mxu0 %v2173
        %2225 = vmatprep.subr.mxu0 0.0
        %2226 = vmatpush1.msra.mxu0 %v2172
        %2227 = vmatprep.subr.mxu0 0.0
        %2228 = vmatpush2.msra.mxu0 0.0
        %2229 = vmatprep.subr.mxu0 0.0
        %2230 = vmatpush2.msra.mxu0 0.0
        %2231 = vmatprep.subr.mxu0 0.0
        %2232 = vmatpush2.msra.mxu0 0.0
        %2233 = vmatprep.subr.mxu0 0.0
        %2234 = vmatpush2.msra.mxu0 0.0
        %2235 = vmatprep.subr.mxu0 0.0
        %2236 = vmatpush2.msra.mxu0 0.0
        %2237 = vmatprep.subr.mxu0 0.0
        %2238 = vmatpush2.msra.mxu0 0.0
        %2239 = vmatprep.subr.mxu0 0.0
        %2240 = vmatpush2.msra.mxu0 0.0
        %2241 = vmatprep.subr.mxu0 0.0
        %2242 = vmatpush2.msra.mxu0 0.0
        %2243 = vmatprep.subr.mxu0 0.0
        %2244 = vmatpush2.msra.mxu0 0.0
        %2245 = vmatprep.subr.mxu0 0.0
        %2246 = vmatpush2.msra.mxu0 0.0
        %2247 = vmatprep.subr.mxu0 0.0
        %2248 = vmatpush2.msra.mxu0 0.0
        %2249 = vmatprep.subr.mxu0 0.0
        %2250 = vmatpush2.msra.mxu0 0.0
        %2251 = vmatprep.subr.mxu0 0.0
        %2252 = vmatpush2.msra.mxu0 0.0
        %2253 = vmatprep.subr.mxu0 0.0
        %2254 = vmatpush2.msra.mxu0 0.0
        %2255 = vmatprep.subr.mxu0 0.0
        %2256 = vmatpush2.msra.mxu0 0.0
        %2257 = vmatprep.subr.mxu0 0.0
        %2258 = vmatpush2.msra.mxu0 0.0
        %2259 = vmatprep.mubr.f32.mxu0 0.0
        %2260 = vmatmul.mubr.f32.gmra.mxu0 %v2190
        %v2261 = vpop.f32.mrf.mxu0
        %v2262 = vadd.f32 %v2188, %v2261
        %v2263 = vpop.f32.mrf.mxu0
        %2264 = vmatprep.mubr.f32.mxu0 0.0
        %2265 = vmatmul.mubr.f32.gmra.mxu0 %v2193
        %v2266 = vpop.f32.mrf.mxu0
        %v2267 = vadd.f32 %v2188, %v2266
        %v2268 = vpop.f32.mrf.mxu0
        %2269 = vdwg.mxu0
        %v2270 = vmax.f32 %v2262, 0.0
        %v2271 = vmax.f32 %v2267, 0.0
        %2272 = vst.msk [vmem:[#allocation2] sm:$0x1] %vm2010, 0.0
        %2273 = vst.msk [vmem:[#allocation2 + $0x1] sm:$0xff] %vm2012, %v2270
        %2274 = vst.msk [vmem:[#allocation2 + $0x9] sm:$0x1] %vm2010, %v2271
        %2275 = vst.msk [vmem:[#allocation2 + $0xa] sm:$0x1] %vm2010, 0.0
        %v2276 = vld [vmem:[#allocation2] sm:$0xff]
        %v2277 = vld [vmem:[#allocation2 + $0x8] sm:$0x1]
        %v2278 = vld [vmem:[#allocation2 + $0x2] sm:$0xff]
        %v2279 = vld [vmem:[#allocation2 + $0xa] sm:$0x1]
        %2282 = vrot.lane.b32.xlu0 %v2270, 32
        %v2283 = vpop.permute.xlu0 %2282
        %2284 = vrot.lane.b32.xlu0 %v2271, 32
        %v2285 = vpop.permute.xlu0 %2284
        %2290 = vrot.lane.b32.xlu0 %v2278, 64
        %v2291 = vpop.permute.xlu0 %2290
        %2292 = vrot.lane.b32.xlu0 %v2279, 64
        %v2293 = vpop.permute.xlu0 %2292
        %v2296 = vsel %vm2012, %v2276, %v2283
        %v2297 = vsel %vm2012, %v2277, %v2285
        %v2298 = vsel %vm2038, %v2296, %v2291
        %v2299 = vsel %vm2038, %v2297, %v2293
        %v2300 = vld [vmem:[%s1 + $0x7a0] sm:$0xff]
        %v2301 = vld [vmem:[%s1 + $0x7a8] sm:$0xff]
        %v2302 = vld [vmem:[%s1 + $0x7b0] sm:$0xff]
        %v2303 = vld [vmem:[%s1 + $0x7b8] sm:$0xff]
        %v2304 = vld [vmem:[%s1 + $0x7c0] sm:$0xff]
        %v2305 = vld [vmem:[%s1 + $0x7c8] sm:$0xff]
        %v2306 = vld [vmem:[%s1 + $0x7d0] sm:$0xff]
        %v2307 = vld [vmem:[%s1 + $0x7d8] sm:$0xff]
        %v2308 = vld [vmem:[%s1 + $0x7e0] sm:$0xff]
        %v2309 = vld [vmem:[%s1 + $0x7e8] sm:$0xff]
        %v2310 = vld [vmem:[%s1 + $0x7f0] sm:$0xff]
        %v2311 = vld [vmem:[%s1 + $0x7f8] sm:$0xff]
        %v2312 = vld [vmem:[%s1 + $0x800] sm:$0x1]
        %v2313 = vlaneseq
        %v2314 = vshrl.u32 %v2313, 7
        %v2315 = vsub.s32 0, %v2314
        %v2316 = vrot.slane %v2312, %v2315
        %v2318 = vsel %vm2058, %v2298, 0
        %v2321 = vsel %vm2058, %v2299, 0
        %2323 = vmatprep.subr.mxu0 0.0
        %2324 = vmatpush1.msra.mxu0 0.0
        %2325 = vmatprep.subr.mxu0 0.0
        %2326 = vmatpush1.msra.mxu0 0.0
        %2327 = vmatprep.subr.mxu0 0.0
        %2328 = vmatpush1.msra.mxu0 0.0
        %2329 = vmatprep.subr.mxu0 0.0
        %2330 = vmatpush1.msra.mxu0 0.0
        %2331 = vmatprep.subr.mxu0 0.0
        %2332 = vmatpush1.msra.mxu0 %v2311
        %2333 = vmatprep.subr.mxu0 0.0
        %2334 = vmatpush1.msra.mxu0 %v2310
        %2335 = vmatprep.subr.mxu0 0.0
        %2336 = vmatpush1.msra.mxu0 %v2309
        %2337 = vmatprep.subr.mxu0 0.0
        %2338 = vmatpush1.msra.mxu0 %v2308
        %2339 = vmatprep.subr.mxu0 0.0
        %2340 = vmatpush1.msra.mxu0 %v2307
        %2341 = vmatprep.subr.mxu0 0.0
        %2342 = vmatpush1.msra.mxu0 %v2306
        %2343 = vmatprep.subr.mxu0 0.0
        %2344 = vmatpush1.msra.mxu0 %v2305
        %2345 = vmatprep.subr.mxu0 0.0
        %2346 = vmatpush1.msra.mxu0 %v2304
        %2347 = vmatprep.subr.mxu0 0.0
        %2348 = vmatpush1.msra.mxu0 %v2303
        %2349 = vmatprep.subr.mxu0 0.0
        %2350 = vmatpush1.msra.mxu0 %v2302
        %2351 = vmatprep.subr.mxu0 0.0
        %2352 = vmatpush1.msra.mxu0 %v2301
        %2353 = vmatprep.subr.mxu0 0.0
        %2354 = vmatpush1.msra.mxu0 %v2300
        %2355 = vmatprep.subr.mxu0 0.0
        %2356 = vmatpush2.msra.mxu0 0.0
        %2357 = vmatprep.subr.mxu0 0.0
        %2358 = vmatpush2.msra.mxu0 0.0
        %2359 = vmatprep.subr.mxu0 0.0
        %2360 = vmatpush2.msra.mxu0 0.0
        %2361 = vmatprep.subr.mxu0 0.0
        %2362 = vmatpush2.msra.mxu0 0.0
        %2363 = vmatprep.subr.mxu0 0.0
        %2364 = vmatpush2.msra.mxu0 0.0
        %2365 = vmatprep.subr.mxu0 0.0
        %2366 = vmatpush2.msra.mxu0 0.0
        %2367 = vmatprep.subr.mxu0 0.0
        %2368 = vmatpush2.msra.mxu0 0.0
        %2369 = vmatprep.subr.mxu0 0.0
        %2370 = vmatpush2.msra.mxu0 0.0
        %2371 = vmatprep.subr.mxu0 0.0
        %2372 = vmatpush2.msra.mxu0 0.0
        %2373 = vmatprep.subr.mxu0 0.0
        %2374 = vmatpush2.msra.mxu0 0.0
        %2375 = vmatprep.subr.mxu0 0.0
        %2376 = vmatpush2.msra.mxu0 0.0
        %2377 = vmatprep.subr.mxu0 0.0
        %2378 = vmatpush2.msra.mxu0 0.0
        %2379 = vmatprep.subr.mxu0 0.0
        %2380 = vmatpush2.msra.mxu0 0.0
        %2381 = vmatprep.subr.mxu0 0.0
        %2382 = vmatpush2.msra.mxu0 0.0
        %2383 = vmatprep.subr.mxu0 0.0
        %2384 = vmatpush2.msra.mxu0 0.0
        %2385 = vmatprep.subr.mxu0 0.0
        %2386 = vmatpush2.msra.mxu0 0.0
        %2387 = vmatprep.mubr.f32.mxu0 0.0
        %2388 = vmatmul.mubr.f32.gmra.mxu0 %v2318
        %v2389 = vpop.f32.mrf.mxu0
        %v2390 = vadd.f32 %v2316, %v2389
        %v2391 = vpop.f32.mrf.mxu0
        %2392 = vmatprep.mubr.f32.mxu0 0.0
        %2393 = vmatmul.mubr.f32.gmra.mxu0 %v2321
        %v2394 = vpop.f32.mrf.mxu0
        %v2395 = vadd.f32 %v2316, %v2394
        %v2396 = vpop.f32.mrf.mxu0
        %2397 = vdwg.mxu0
        %v2398 = vadd.f32 %v2390, %v2142
        %v2399 = vadd.f32 %v2395, %v2143
        %v2400 = vmax.f32 %v2398, 0.0
        %v2401 = vmax.f32 %v2399, 0.0
        %2402 = vst.msk [vmem:[#allocation2] sm:$0x1] %vm2010, 0.0
        %2403 = vst.msk [vmem:[#allocation2 + $0x1] sm:$0xff] %vm2012, %v2400
        %2404 = vst.msk [vmem:[#allocation2 + $0x9] sm:$0x1] %vm2010, %v2401
        %2405 = vst.msk [vmem:[#allocation2 + $0xa] sm:$0x1] %vm2010, 0.0
        %v2406 = vld [vmem:[#allocation2] sm:$0xff]
        %v2407 = vld [vmem:[#allocation2 + $0x8] sm:$0x1]
        %v2408 = vld [vmem:[#allocation2 + $0x2] sm:$0xff]
        %v2409 = vld [vmem:[#allocation2 + $0xa] sm:$0x1]
        %2412 = vrot.lane.b32.xlu0 %v2400, 32
        %v2413 = vpop.permute.xlu0 %2412
        %2414 = vrot.lane.b32.xlu0 %v2401, 32
        %v2415 = vpop.permute.xlu0 %2414
        %2420 = vrot.lane.b32.xlu0 %v2408, 64
        %v2421 = vpop.permute.xlu0 %2420
        %2422 = vrot.lane.b32.xlu0 %v2409, 64
        %v2423 = vpop.permute.xlu0 %2422
        %v2426 = vsel %vm2012, %v2406, %v2413
        %v2427 = vsel %vm2012, %v2407, %v2415
        %v2428 = vsel %vm2038, %v2426, %v2421
        %v2429 = vsel %vm2038, %v2427, %v2423
        %v2430 = vld [vmem:[%s1 + $0x808] sm:$0xff]
        %v2431 = vld [vmem:[%s1 + $0x810] sm:$0xff]
        %v2432 = vld [vmem:[%s1 + $0x818] sm:$0xff]
        %v2433 = vld [vmem:[%s1 + $0x820] sm:$0xff]
        %v2434 = vld [vmem:[%s1 + $0x828] sm:$0xff]
        %v2435 = vld [vmem:[%s1 + $0x830] sm:$0xff]
        %v2436 = vld [vmem:[%s1 + $0x838] sm:$0xff]
        %v2437 = vld [vmem:[%s1 + $0x840] sm:$0xff]
        %v2438 = vld [vmem:[%s1 + $0x848] sm:$0xff]
        %v2439 = vld [vmem:[%s1 + $0x850] sm:$0xff]
        %v2440 = vld [vmem:[%s1 + $0x858] sm:$0xff]
        %v2441 = vld [vmem:[%s1 + $0x860] sm:$0xff]
        %v2442 = vld [vmem:[%s1 + $0x868] sm:$0x1]
        %v2443 = vlaneseq
        %v2444 = vshrl.u32 %v2443, 7
        %v2445 = vsub.s32 0, %v2444
        %v2446 = vrot.slane %v2442, %v2445
        %v2448 = vsel %vm2058, %v2428, 0
        %v2451 = vsel %vm2058, %v2429, 0
        %2453 = vmatprep.subr.mxu0 0.0
        %2454 = vmatpush1.msra.mxu0 0.0
        %2455 = vmatprep.subr.mxu0 0.0
        %2456 = vmatpush1.msra.mxu0 0.0
        %2457 = vmatprep.subr.mxu0 0.0
        %2458 = vmatpush1.msra.mxu0 0.0
        %2459 = vmatprep.subr.mxu0 0.0
        %2460 = vmatpush1.msra.mxu0 0.0
        %2461 = vmatprep.subr.mxu0 0.0
        %2462 = vmatpush1.msra.mxu0 %v2441
        %2463 = vmatprep.subr.mxu0 0.0
        %2464 = vmatpush1.msra.mxu0 %v2440
        %2465 = vmatprep.subr.mxu0 0.0
        %2466 = vmatpush1.msra.mxu0 %v2439
        %2467 = vmatprep.subr.mxu0 0.0
        %2468 = vmatpush1.msra.mxu0 %v2438
        %2469 = vmatprep.subr.mxu0 0.0
        %2470 = vmatpush1.msra.mxu0 %v2437
        %2471 = vmatprep.subr.mxu0 0.0
        %2472 = vmatpush1.msra.mxu0 %v2436
        %2473 = vmatprep.subr.mxu0 0.0
        %2474 = vmatpush1.msra.mxu0 %v2435
        %2475 = vmatprep.subr.mxu0 0.0
        %2476 = vmatpush1.msra.mxu0 %v2434
        %2477 = vmatprep.subr.mxu0 0.0
        %2478 = vmatpush1.msra.mxu0 %v2433
        %2479 = vmatprep.subr.mxu0 0.0
        %2480 = vmatpush1.msra.mxu0 %v2432
        %2481 = vmatprep.subr.mxu0 0.0
        %2482 = vmatpush1.msra.mxu0 %v2431
        %2483 = vmatprep.subr.mxu0 0.0
        %2484 = vmatpush1.msra.mxu0 %v2430
        %2485 = vmatprep.subr.mxu0 0.0
        %2486 = vmatpush2.msra.mxu0 0.0
        %2487 = vmatprep.subr.mxu0 0.0
        %2488 = vmatpush2.msra.mxu0 0.0
        %2489 = vmatprep.subr.mxu0 0.0
        %2490 = vmatpush2.msra.mxu0 0.0
        %2491 = vmatprep.subr.mxu0 0.0
        %2492 = vmatpush2.msra.mxu0 0.0
        %2493 = vmatprep.subr.mxu0 0.0
        %2494 = vmatpush2.msra.mxu0 0.0
        %2495 = vmatprep.subr.mxu0 0.0
        %2496 = vmatpush2.msra.mxu0 0.0
        %2497 = vmatprep.subr.mxu0 0.0
        %2498 = vmatpush2.msra.mxu0 0.0
        %2499 = vmatprep.subr.mxu0 0.0
        %2500 = vmatpush2.msra.mxu0 0.0
        %2501 = vmatprep.subr.mxu0 0.0
        %2502 = vmatpush2.msra.mxu0 0.0
        %2503 = vmatprep.subr.mxu0 0.0
        %2504 = vmatpush2.msra.mxu0 0.0
        %2505 = vmatprep.subr.mxu0 0.0
        %2506 = vmatpush2.msra.mxu0 0.0
        %2507 = vmatprep.subr.mxu0 0.0
        %2508 = vmatpush2.msra.mxu0 0.0
        %2509 = vmatprep.subr.mxu0 0.0
        %2510 = vmatpush2.msra.mxu0 0.0
        %2511 = vmatprep.subr.mxu0 0.0
        %2512 = vmatpush2.msra.mxu0 0.0
        %2513 = vmatprep.subr.mxu0 0.0
        %2514 = vmatpush2.msra.mxu0 0.0
        %2515 = vmatprep.subr.mxu0 0.0
        %2516 = vmatpush2.msra.mxu0 0.0
        %2517 = vmatprep.mubr.f32.mxu0 0.0
        %2518 = vmatmul.mubr.f32.gmra.mxu0 %v2448
        %v2519 = vpop.f32.mrf.mxu0
        %v2520 = vadd.f32 %v2446, %v2519
        %v2521 = vpop.f32.mrf.mxu0
        %2522 = vmatprep.mubr.f32.mxu0 0.0
        %2523 = vmatmul.mubr.f32.gmra.mxu0 %v2451
        %v2524 = vpop.f32.mrf.mxu0
        %v2525 = vadd.f32 %v2446, %v2524
        %v2526 = vpop.f32.mrf.mxu0
        %2527 = vdwg.mxu0
        %v2528 = vmax.f32 %v2520, 0.0
        %v2529 = vmax.f32 %v2525, 0.0
        %2530 = vst.msk [vmem:[#allocation2] sm:$0x1] %vm2010, 0.0
        %2531 = vst.msk [vmem:[#allocation2 + $0x1] sm:$0xff] %vm2012, %v2528
        %2532 = vst.msk [vmem:[#allocation2 + $0x9] sm:$0x1] %vm2010, %v2529
        %2533 = vst.msk [vmem:[#allocation2 + $0xa] sm:$0x1] %vm2010, 0.0
        %v2534 = vld [vmem:[#allocation2] sm:$0xff]
        %v2535 = vld [vmem:[#allocation2 + $0x8] sm:$0x1]
        %v2536 = vld [vmem:[#allocation2 + $0x2] sm:$0xff]
        %v2537 = vld [vmem:[#allocation2 + $0xa] sm:$0x1]
        %2540 = vrot.lane.b32.xlu0 %v2528, 32
        %v2541 = vpop.permute.xlu0 %2540
        %2542 = vrot.lane.b32.xlu0 %v2529, 32
        %v2543 = vpop.permute.xlu0 %2542
        %2548 = vrot.lane.b32.xlu0 %v2536, 64
        %v2549 = vpop.permute.xlu0 %2548
        %2550 = vrot.lane.b32.xlu0 %v2537, 64
        %v2551 = vpop.permute.xlu0 %2550
        %v2554 = vsel %vm2012, %v2534, %v2541
        %v2555 = vsel %vm2012, %v2535, %v2543
        %v2556 = vsel %vm2038, %v2554, %v2549
        %v2557 = vsel %vm2038, %v2555, %v2551
        %v2558 = vld [vmem:[%s1 + $0x870] sm:$0xff]
        %v2559 = vld [vmem:[%s1 + $0x878] sm:$0xff]
        %v2560 = vld [vmem:[%s1 + $0x880] sm:$0xff]
        %v2561 = vld [vmem:[%s1 + $0x888] sm:$0xff]
        %v2562 = vld [vmem:[%s1 + $0x890] sm:$0xff]
        %v2563 = vld [vmem:[%s1 + $0x898] sm:$0xff]
        %v2564 = vld [vmem:[%s1 + $0x8a0] sm:$0xff]
        %v2565 = vld [vmem:[%s1 + $0x8a8] sm:$0xff]
        %v2566 = vld [vmem:[%s1 + $0x8b0] sm:$0xff]
        %v2567 = vld [vmem:[%s1 + $0x8b8] sm:$0xff]
        %v2568 = vld [vmem:[%s1 + $0x8c0] sm:$0xff]
        %v2569 = vld [vmem:[%s1 + $0x8c8] sm:$0xff]
        %v2570 = vld [vmem:[%s1 + $0x8d0] sm:$0x1]
        %v2571 = vlaneseq
        %v2572 = vshrl.u32 %v2571, 7
        %v2573 = vsub.s32 0, %v2572
        %v2574 = vrot.slane %v2570, %v2573
        %v2576 = vsel %vm2058, %v2556, 0
        %v2579 = vsel %vm2058, %v2557, 0
        %2581 = vmatprep.subr.mxu0 0.0
        %2582 = vmatpush1.msra.mxu0 0.0
        %2583 = vmatprep.subr.mxu0 0.0
        %2584 = vmatpush1.msra.mxu0 0.0
        %2585 = vmatprep.subr.mxu0 0.0
        %2586 = vmatpush1.msra.mxu0 0.0
        %2587 = vmatprep.subr.mxu0 0.0
        %2588 = vmatpush1.msra.mxu0 0.0
        %2589 = vmatprep.subr.mxu0 0.0
        %2590 = vmatpush1.msra.mxu0 %v2569
        %2591 = vmatprep.subr.mxu0 0.0
        %2592 = vmatpush1.msra.mxu0 %v2568
        %2593 = vmatprep.subr.mxu0 0.0
        %2594 = vmatpush1.msra.mxu0 %v2567
        %2595 = vmatprep.subr.mxu0 0.0
        %2596 = vmatpush1.msra.mxu0 %v2566
        %2597 = vmatprep.subr.mxu0 0.0
        %2598 = vmatpush1.msra.mxu0 %v2565
        %2599 = vmatprep.subr.mxu0 0.0
        %2600 = vmatpush1.msra.mxu0 %v2564
        %2601 = vmatprep.subr.mxu0 0.0
        %2602 = vmatpush1.msra.mxu0 %v2563
        %2603 = vmatprep.subr.mxu0 0.0
        %2604 = vmatpush1.msra.mxu0 %v2562
        %2605 = vmatprep.subr.mxu0 0.0
        %2606 = vmatpush1.msra.mxu0 %v2561
        %2607 = vmatprep.subr.mxu0 0.0
        %2608 = vmatpush1.msra.mxu0 %v2560
        %2609 = vmatprep.subr.mxu0 0.0
        %2610 = vmatpush1.msra.mxu0 %v2559
        %2611 = vmatprep.subr.mxu0 0.0
        %2612 = vmatpush1.msra.mxu0 %v2558
        %2613 = vmatprep.subr.mxu0 0.0
        %2614 = vmatpush2.msra.mxu0 0.0
        %2615 = vmatprep.subr.mxu0 0.0
        %2616 = vmatpush2.msra.mxu0 0.0
        %2617 = vmatprep.subr.mxu0 0.0
        %2618 = vmatpush2.msra.mxu0 0.0
        %2619 = vmatprep.subr.mxu0 0.0
        %2620 = vmatpush2.msra.mxu0 0.0
        %2621 = vmatprep.subr.mxu0 0.0
        %2622 = vmatpush2.msra.mxu0 0.0
        %2623 = vmatprep.subr.mxu0 0.0
        %2624 = vmatpush2.msra.mxu0 0.0
        %2625 = vmatprep.subr.mxu0 0.0
        %2626 = vmatpush2.msra.mxu0 0.0
        %2627 = vmatprep.subr.mxu0 0.0
        %2628 = vmatpush2.msra.mxu0 0.0
        %2629 = vmatprep.subr.mxu0 0.0
        %2630 = vmatpush2.msra.mxu0 0.0
        %2631 = vmatprep.subr.mxu0 0.0
        %2632 = vmatpush2.msra.mxu0 0.0
        %2633 = vmatprep.subr.mxu0 0.0
        %2634 = vmatpush2.msra.mxu0 0.0
        %2635 = vmatprep.subr.mxu0 0.0
        %2636 = vmatpush2.msra.mxu0 0.0
        %2637 = vmatprep.subr.mxu0 0.0
        %2638 = vmatpush2.msra.mxu0 0.0
        %2639 = vmatprep.subr.mxu0 0.0
        %2640 = vmatpush2.msra.mxu0 0.0
        %2641 = vmatprep.subr.mxu0 0.0
        %2642 = vmatpush2.msra.mxu0 0.0
        %2643 = vmatprep.subr.mxu0 0.0
        %2644 = vmatpush2.msra.mxu0 0.0
        %2645 = vmatprep.mubr.f32.mxu0 0.0
        %2646 = vmatmul.mubr.f32.gmra.mxu0 %v2576
        %v2647 = vpop.f32.mrf.mxu0
        %v2648 = vadd.f32 %v2574, %v2647
        %v2649 = vpop.f32.mrf.mxu0
        %2650 = vmatprep.mubr.f32.mxu0 0.0
        %2651 = vmatmul.mubr.f32.gmra.mxu0 %v2579
        %v2652 = vpop.f32.mrf.mxu0
        %v2653 = vadd.f32 %v2574, %v2652
        %v2654 = vpop.f32.mrf.mxu0
        %2655 = vdwg.mxu0
        %v2656 = vadd.f32 %v2648, %v2400
        %v2657 = vadd.f32 %v2653, %v2401
        %v2658 = vmax.f32 %v2656, 0.0
        %v2659 = vmax.f32 %v2657, 0.0
        %2660 = vst.msk [vmem:[#allocation2] sm:$0x1] %vm2010, 0.0
        %2661 = vst.msk [vmem:[#allocation2 + $0x1] sm:$0xff] %vm2012, %v2658
        %2662 = vst.msk [vmem:[#allocation2 + $0x9] sm:$0x1] %vm2010, %v2659
        %2663 = vst.msk [vmem:[#allocation2 + $0xa] sm:$0x1] %vm2010, 0.0
        %v2664 = vld [vmem:[#allocation2] sm:$0xff]
        %v2665 = vld [vmem:[#allocation2 + $0x8] sm:$0x1]
        %v2666 = vld [vmem:[#allocation2 + $0x2] sm:$0xff]
        %v2667 = vld [vmem:[#allocation2 + $0xa] sm:$0x1]
        %2670 = vrot.lane.b32.xlu0 %v2658, 32
        %v2671 = vpop.permute.xlu0 %2670
        %2672 = vrot.lane.b32.xlu0 %v2659, 32
        %v2673 = vpop.permute.xlu0 %2672
        %2678 = vrot.lane.b32.xlu0 %v2666, 64
        %v2679 = vpop.permute.xlu0 %2678
        %2680 = vrot.lane.b32.xlu0 %v2667, 64
        %v2681 = vpop.permute.xlu0 %2680
        %v2684 = vsel %vm2012, %v2664, %v2671
        %v2685 = vsel %vm2012, %v2665, %v2673
        %v2686 = vsel %vm2038, %v2684, %v2679
        %v2687 = vsel %vm2038, %v2685, %v2681
        %vm2688 = vcmask 72704
        %v2689 = vsel %vm2688, %v1814, 0
        %v2692 = vsel %vm738, %v2687, 0
        %2694 = vmatprep.subr.mxu0 0.0
        %2695 = vmatpush1.msra.mxu0 0.0
        %2696 = vmatprep.subr.mxu0 0.0
        %2697 = vmatpush1.msra.mxu0 0.0
        %2698 = vmatprep.subr.mxu0 0.0
        %2699 = vmatpush1.msra.mxu0 0.0
        %2700 = vmatprep.subr.mxu0 0.0
        %2701 = vmatpush1.msra.mxu0 0.0
        %2702 = vmatprep.subr.mxu0 0.0
        %2703 = vmatpush1.msra.mxu0 0.0
        %2704 = vmatprep.subr.mxu0 0.0
        %2705 = vmatpush1.msra.mxu0 0.0
        %2706 = vmatprep.subr.mxu0 0.0
        %2707 = vmatpush1.msra.mxu0 0.0
        %2708 = vmatprep.subr.mxu0 0.0
        %2709 = vmatpush1.msra.mxu0 0.0
        %2710 = vmatprep.subr.mxu0 0.0
        %2711 = vmatpush1.msra.mxu0 0.0
        %2712 = vmatprep.subr.mxu0 0.0
        %2713 = vmatpush1.msra.mxu0 0.0
        %2714 = vmatprep.subr.mxu0 0.0
        %2715 = vmatpush1.msra.mxu0 0.0
        %2716 = vmatprep.subr.mxu0 0.0
        %2717 = vmatpush1.msra.mxu0 0.0
        %2718 = vmatprep.subr.mxu0 0.0
        %2719 = vmatpush1.msra.mxu0 0.0
        %2720 = vmatprep.subr.mxu0 0.0
        %2721 = vmatpush1.msra.mxu0 0.0
        %2722 = vmatprep.subr.mxu0 0.0
        %2723 = vmatpush1.msra.mxu0 %v2692
        %2724 = vmatprep.subr.mxu0 0.0
        %2725 = vmatpush1.msra.mxu0 %v2686
        %2726 = vmatprep.subr.mxu0 0.0
        %2727 = vmatpush2.msra.mxu0 0.0
        %2728 = vmatprep.subr.mxu0 0.0
        %2729 = vmatpush2.msra.mxu0 0.0
        %2730 = vmatprep.subr.mxu0 0.0
        %2731 = vmatpush2.msra.mxu0 0.0
        %2732 = vmatprep.subr.mxu0 0.0
        %2733 = vmatpush2.msra.mxu0 0.0
        %2734 = vmatprep.subr.mxu0 0.0
        %2735 = vmatpush2.msra.mxu0 0.0
        %2736 = vmatprep.subr.mxu0 0.0
        %2737 = vmatpush2.msra.mxu0 0.0
        %2738 = vmatprep.subr.mxu0 0.0
        %2739 = vmatpush2.msra.mxu0 0.0
        %2740 = vmatprep.subr.mxu0 0.0
        %2741 = vmatpush2.msra.mxu0 0.0
        %2742 = vmatprep.subr.mxu0 0.0
        %2743 = vmatpush2.msra.mxu0 0.0
        %2744 = vmatprep.subr.mxu0 0.0
        %2745 = vmatpush2.msra.mxu0 0.0
        %2746 = vmatprep.subr.mxu0 0.0
        %2747 = vmatpush2.msra.mxu0 0.0
        %2748 = vmatprep.subr.mxu0 0.0
        %2749 = vmatpush2.msra.mxu0 0.0
        %2750 = vmatprep.subr.mxu0 0.0
        %2751 = vmatpush2.msra.mxu0 0.0
        %2752 = vmatprep.subr.mxu0 0.0
        %2753 = vmatpush2.msra.mxu0 0.0
        %2754 = vmatprep.subr.mxu0 0.0
        %2755 = vmatpush2.msra.mxu0 0.0
        %2756 = vmatprep.subr.mxu0 0.0
        %2757 = vmatpush2.msra.mxu0 0.0
        %2758 = vmatprep.mubr.f32.mxu0 0.0
        %2759 = vmatmul.mubr.f32.gmra.mxu0 %v2689
        %v2760 = vpop.f32.mrf.mxu0
        %v2761 = vadd.f32 0.0, %v2760
        %v2762 = vpop.f32.mrf.mxu0
        %2763 = vdwg.mxu0
        %2765 = vrot.lane.b32.xlu0 %v2761, 104
        %v2766 = vpop.permute.xlu0 %2765
        %vm2768 = vcmask 64512
        %v2769 = vsel %vm2768, 0.0, %v2766
        %v2770 = vsel %vm727, %v2769, 0.0
        %v2771 = vld [vmem:[%s1 + $0x8d8] sm:$0xff]
        %v2772 = vld [vmem:[%s1 + $0x8e0] sm:$0xff]
        %v2773 = vld [vmem:[%s1 + $0x8e8] sm:$0xff]
        %v2774 = vld [vmem:[%s1 + $0x8f0] sm:$0xff]
        %v2775 = vld [vmem:[%s1 + $0x8f8] sm:$0xff]
        %v2776 = vld [vmem:[%s1 + $0x900] sm:$0xff]
        %v2777 = vld [vmem:[%s1 + $0x908] sm:$0xff]
        %v2778 = vld [vmem:[%s1 + $0x910] sm:$0xff]
        %v2779 = vld [vmem:[%s1 + $0x918] sm:$0xff]
        %v2780 = vld [vmem:[%s1 + $0x920] sm:$0xff]
        %v2781 = vld [vmem:[%s1 + $0x928] sm:$0xff]
        %v2782 = vld [vmem:[%s1 + $0x930] sm:$0xff]
        %v2783 = vld [vmem:[%s1 + $0x938] sm:$0x1]
        %v2784 = vlaneseq
        %v2785 = vshrl.u32 %v2784, 7
        %v2786 = vsub.s32 0, %v2785
        %v2787 = vrot.slane %v2783, %v2786
        %v2788 = vsel %vm2058, %v2761, 0
        %2790 = vmatprep.subr.mxu0 0.0
        %2791 = vmatpush1.msra.mxu0 0.0
        %2792 = vmatprep.subr.mxu0 0.0
        %2793 = vmatpush1.msra.mxu0 0.0
        %2794 = vmatprep.subr.mxu0 0.0
        %2795 = vmatpush1.msra.mxu0 0.0
        %2796 = vmatprep.subr.mxu0 0.0
        %2797 = vmatpush1.msra.mxu0 0.0
        %2798 = vmatprep.subr.mxu0 0.0
        %2799 = vmatpush1.msra.mxu0 %v2782
        %2800 = vmatprep.subr.mxu0 0.0
        %2801 = vmatpush1.msra.mxu0 %v2781
        %2802 = vmatprep.subr.mxu0 0.0
        %2803 = vmatpush1.msra.mxu0 %v2780
        %2804 = vmatprep.subr.mxu0 0.0
        %2805 = vmatpush1.msra.mxu0 %v2779
        %2806 = vmatprep.subr.mxu0 0.0
        %2807 = vmatpush1.msra.mxu0 %v2778
        %2808 = vmatprep.subr.mxu0 0.0
        %2809 = vmatpush1.msra.mxu0 %v2777
        %2810 = vmatprep.subr.mxu0 0.0
        %2811 = vmatpush1.msra.mxu0 %v2776
        %2812 = vmatprep.subr.mxu0 0.0
        %2813 = vmatpush1.msra.mxu0 %v2775
        %2814 = vmatprep.subr.mxu0 0.0
        %2815 = vmatpush1.msra.mxu0 %v2774
        %2816 = vmatprep.subr.mxu0 0.0
        %2817 = vmatpush1.msra.mxu0 %v2773
        %2818 = vmatprep.subr.mxu0 0.0
        %2819 = vmatpush1.msra.mxu0 %v2772
        %2820 = vmatprep.subr.mxu0 0.0
        %2821 = vmatpush1.msra.mxu0 %v2771
        %2822 = vmatprep.subr.mxu0 0.0
        %2823 = vmatpush2.msra.mxu0 0.0
        %2824 = vmatprep.subr.mxu0 0.0
        %2825 = vmatpush2.msra.mxu0 0.0
        %2826 = vmatprep.subr.mxu0 0.0
        %2827 = vmatpush2.msra.mxu0 0.0
        %2828 = vmatprep.subr.mxu0 0.0
        %2829 = vmatpush2.msra.mxu0 0.0
        %2830 = vmatprep.subr.mxu0 0.0
        %2831 = vmatpush2.msra.mxu0 0.0
        %2832 = vmatprep.subr.mxu0 0.0
        %2833 = vmatpush2.msra.mxu0 0.0
        %2834 = vmatprep.subr.mxu0 0.0
        %2835 = vmatpush2.msra.mxu0 0.0
        %2836 = vmatprep.subr.mxu0 0.0
        %2837 = vmatpush2.msra.mxu0 0.0
        %2838 = vmatprep.subr.mxu0 0.0
        %2839 = vmatpush2.msra.mxu0 0.0
        %2840 = vmatprep.subr.mxu0 0.0
        %2841 = vmatpush2.msra.mxu0 0.0
        %2842 = vmatprep.subr.mxu0 0.0
        %2843 = vmatpush2.msra.mxu0 0.0
        %2844 = vmatprep.subr.mxu0 0.0
        %2845 = vmatpush2.msra.mxu0 0.0
        %2846 = vmatprep.subr.mxu0 0.0
        %2847 = vmatpush2.msra.mxu0 0.0
        %2848 = vmatprep.subr.mxu0 0.0
        %2849 = vmatpush2.msra.mxu0 0.0
        %2850 = vmatprep.subr.mxu0 0.0
        %2851 = vmatpush2.msra.mxu0 0.0
        %2852 = vmatprep.subr.mxu0 0.0
        %2853 = vmatpush2.msra.mxu0 0.0
        %2854 = vmatprep.mubr.f32.mxu0 0.0
        %2855 = vmatmul.mubr.f32.gmra.mxu0 %v2788
        %v2856 = vpop.f32.mrf.mxu0
        %v2857 = vadd.f32 %v2787, %v2856
        %v2858 = vpop.f32.mrf.mxu0
        %2859 = vdwg.mxu0
        %v2860 = vmax.f32 %v2857, 0.0
        %vm2861 = vcmask 385024
        %2862 = vst.msk [vmem:[#allocation2] sm:$0x1] %vm2861, 0.0
        %vm2863 = vcmask 389120
        %2864 = vst.msk [vmem:[#allocation2 + $0x1] sm:$0x1f] %vm2863, %v2860
        %2865 = vst.msk [vmem:[#allocation2 + $0x6] sm:$0x1] %vm2861, 0.0
        %v2866 = vld [vmem:[#allocation2] sm:$0x1f]
        %v2867 = vld [vmem:[#allocation2 + $0x2] sm:$0x1f]
        %2869 = vrot.lane.b32.xlu0 %v2860, 48
        %v2870 = vpop.permute.xlu0 %2869
        %2873 = vrot.lane.b32.xlu0 %v2867, 96
        %v2874 = vpop.permute.xlu0 %2873
        %v2876 = vsel %vm1056, %v2866, %v2870
        %v2877 = vsel %vm2058, %v2876, %v2874
        %v2878 = vld [vmem:[%s1 + $0x940] sm:$0xff]
        %v2879 = vld [vmem:[%s1 + $0x948] sm:$0xff]
        %v2880 = vld [vmem:[%s1 + $0x950] sm:$0xff]
        %v2881 = vld [vmem:[%s1 + $0x958] sm:$0xff]
        %v2882 = vld [vmem:[%s1 + $0x960] sm:$0xff]
        %v2883 = vld [vmem:[%s1 + $0x968] sm:$0xff]
        %v2884 = vld [vmem:[%s1 + $0x970] sm:$0xff]
        %v2885 = vld [vmem:[%s1 + $0x978] sm:$0xff]
        %v2886 = vld [vmem:[%s1 + $0x980] sm:$0xff]
        %v2887 = vld [vmem:[%s1 + $0x988] sm:$0xff]
        %v2888 = vld [vmem:[%s1 + $0x990] sm:$0xff]
        %v2889 = vld [vmem:[%s1 + $0x998] sm:$0xff]
        %v2890 = vld [vmem:[%s1 + $0x9a0] sm:$0xff]
        %v2891 = vld [vmem:[%s1 + $0x9a8] sm:$0xff]
        %v2892 = vld [vmem:[%s1 + $0x9b0] sm:$0xff]
        %v2893 = vld [vmem:[%s1 + $0x9b8] sm:$0xff]
        %v2894 = vld [vmem:[%s1 + $0x9c0] sm:$0xff]
        %v2895 = vld [vmem:[%s1 + $0x9c8] sm:$0xff]
        %v2896 = vld [vmem:[%s1 + $0x9d0] sm:$0x1]
        %v2897 = vlaneseq
        %v2898 = vshrl.u32 %v2897, 7
        %v2899 = vsub.s32 0, %v2898
        %v2900 = vrot.slane %v2896, %v2899
        %vm2901 = vcmask 130048
        %v2902 = vsel %vm2901, %v2874, 0
        %2904 = vmatprep.subr.mxu0 0.0
        %2905 = vmatpush1.msra.mxu0 %v2893
        %2906 = vmatprep.subr.mxu0 0.0
        %2907 = vmatpush1.msra.mxu0 %v2892
        %2908 = vmatprep.subr.mxu0 0.0
        %2909 = vmatpush1.msra.mxu0 %v2891
        %2910 = vmatprep.subr.mxu0 0.0
        %2911 = vmatpush1.msra.mxu0 %v2890
        %2912 = vmatprep.subr.mxu0 0.0
        %2913 = vmatpush1.msra.mxu0 %v2889
        %2914 = vmatprep.subr.mxu0 0.0
        %2915 = vmatpush1.msra.mxu0 %v2888
        %2916 = vmatprep.subr.mxu0 0.0
        %2917 = vmatpush1.msra.mxu0 %v2887
        %2918 = vmatprep.subr.mxu0 0.0
        %2919 = vmatpush1.msra.mxu0 %v2886
        %2920 = vmatprep.subr.mxu0 0.0
        %2921 = vmatpush1.msra.mxu0 %v2885
        %2922 = vmatprep.subr.mxu0 0.0
        %2923 = vmatpush1.msra.mxu0 %v2884
        %2924 = vmatprep.subr.mxu0 0.0
        %2925 = vmatpush1.msra.mxu0 %v2883
        %2926 = vmatprep.subr.mxu0 0.0
        %2927 = vmatpush1.msra.mxu0 %v2882
        %2928 = vmatprep.subr.mxu0 0.0
        %2929 = vmatpush1.msra.mxu0 %v2881
        %2930 = vmatprep.subr.mxu0 0.0
        %2931 = vmatpush1.msra.mxu0 %v2880
        %2932 = vmatprep.subr.mxu0 0.0
        %2933 = vmatpush1.msra.mxu0 %v2879
        %2934 = vmatprep.subr.mxu0 0.0
        %2935 = vmatpush1.msra.mxu0 %v2878
        %2936 = vmatprep.subr.mxu0 0.0
        %2937 = vmatpush2.msra.mxu0 0.0
        %2938 = vmatprep.subr.mxu0 0.0
        %2939 = vmatpush2.msra.mxu0 0.0
        %2940 = vmatprep.subr.mxu0 0.0
        %2941 = vmatpush2.msra.mxu0 0.0
        %2942 = vmatprep.subr.mxu0 0.0
        %2943 = vmatpush2.msra.mxu0 0.0
        %2944 = vmatprep.subr.mxu0 0.0
        %2945 = vmatpush2.msra.mxu0 0.0
        %2946 = vmatprep.subr.mxu0 0.0
        %2947 = vmatpush2.msra.mxu0 0.0
        %2948 = vmatprep.subr.mxu0 0.0
        %2949 = vmatpush2.msra.mxu0 0.0
        %2950 = vmatprep.subr.mxu0 0.0
        %2951 = vmatpush2.msra.mxu0 0.0
        %2952 = vmatprep.subr.mxu0 0.0
        %2953 = vmatpush2.msra.mxu0 0.0
        %2954 = vmatprep.subr.mxu0 0.0
        %2955 = vmatpush2.msra.mxu0 0.0
        %2956 = vmatprep.subr.mxu0 0.0
        %2957 = vmatpush2.msra.mxu0 0.0
        %2958 = vmatprep.subr.mxu0 0.0
        %2959 = vmatpush2.msra.mxu0 0.0
        %2960 = vmatprep.subr.mxu0 0.0
        %2961 = vmatpush2.msra.mxu0 0.0
        %2962 = vmatprep.subr.mxu0 0.0
        %2963 = vmatpush2.msra.mxu0 0.0
        %2964 = vmatprep.subr.mxu0 0.0
        %2965 = vmatpush2.msra.mxu0 %v2895
        %2966 = vmatprep.subr.mxu0 0.0
        %2967 = vmatpush2.msra.mxu0 %v2894
        %2968 = vmatprep.mubr.f32.mxu0 %v2902
        %2969 = vmatmul.mubr.f32.gmra.mxu0 %v2877
        %v2970 = vpop.f32.mrf.mxu0
        %v2971 = vadd.f32 %v2900, %v2970
        %v2972 = vpop.f32.mrf.mxu0
        %2973 = vdwg.mxu0
        %v2974 = vadd.f32 %v2971, %v2770
        %v2975 = vmax.f32 %v2974, 0.0
        %2976 = vst.msk [vmem:[#allocation2] sm:$0x1] %vm2861, 0.0
        %2977 = vst.msk [vmem:[#allocation2 + $0x1] sm:$0x1f] %vm2863, %v2975
        %2978 = vst.msk [vmem:[#allocation2 + $0x6] sm:$0x1] %vm2861, 0.0
        %v2979 = vld [vmem:[#allocation2] sm:$0x1f]
        %v2980 = vld [vmem:[#allocation2 + $0x2] sm:$0x1f]
        %2982 = vrot.lane.b32.xlu0 %v2975, 48
        %v2983 = vpop.permute.xlu0 %2982
        %2986 = vrot.lane.b32.xlu0 %v2980, 96
        %v2987 = vpop.permute.xlu0 %2986
        %v2989 = vsel %vm1056, %v2979, %v2983
        %v2990 = vsel %vm2058, %v2989, %v2987
        %v2991 = vld [vmem:[%s1 + $0x9d8] sm:$0xff]
        %v2992 = vld [vmem:[%s1 + $0x9e0] sm:$0xff]
        %v2993 = vld [vmem:[%s1 + $0x9e8] sm:$0xff]
        %v2994 = vld [vmem:[%s1 + $0x9f0] sm:$0xff]
        %v2995 = vld [vmem:[%s1 + $0x9f8] sm:$0xff]
        %v2996 = vld [vmem:[%s1 + $0xa00] sm:$0xff]
        %v2997 = vld [vmem:[%s1 + $0xa08] sm:$0xff]
        %v2998 = vld [vmem:[%s1 + $0xa10] sm:$0xff]
        %v2999 = vld [vmem:[%s1 + $0xa18] sm:$0xff]
        %v3000 = vld [vmem:[%s1 + $0xa20] sm:$0xff]
        %v3001 = vld [vmem:[%s1 + $0xa28] sm:$0xff]
        %v3002 = vld [vmem:[%s1 + $0xa30] sm:$0xff]
        %v3003 = vld [vmem:[%s1 + $0xa38] sm:$0xff]
        %v3004 = vld [vmem:[%s1 + $0xa40] sm:$0xff]
        %v3005 = vld [vmem:[%s1 + $0xa48] sm:$0xff]
        %v3006 = vld [vmem:[%s1 + $0xa50] sm:$0xff]
        %v3007 = vld [vmem:[%s1 + $0xa58] sm:$0xff]
        %v3008 = vld [vmem:[%s1 + $0xa60] sm:$0xff]
        %v3009 = vld [vmem:[%s1 + $0xa68] sm:$0x1]
        %v3010 = vlaneseq
        %v3011 = vshrl.u32 %v3010, 7
        %v3012 = vsub.s32 0, %v3011
        %v3013 = vrot.slane %v3009, %v3012
        %v3014 = vsel %vm2901, %v2987, 0
        %3016 = vmatprep.subr.mxu0 0.0
        %3017 = vmatpush1.msra.mxu0 %v3006
        %3018 = vmatprep.subr.mxu0 0.0
        %3019 = vmatpush1.msra.mxu0 %v3005
        %3020 = vmatprep.subr.mxu0 0.0
        %3021 = vmatpush1.msra.mxu0 %v3004
        %3022 = vmatprep.subr.mxu0 0.0
        %3023 = vmatpush1.msra.mxu0 %v3003
        %3024 = vmatprep.subr.mxu0 0.0
        %3025 = vmatpush1.msra.mxu0 %v3002
        %3026 = vmatprep.subr.mxu0 0.0
        %3027 = vmatpush1.msra.mxu0 %v3001
        %3028 = vmatprep.subr.mxu0 0.0
        %3029 = vmatpush1.msra.mxu0 %v3000
        %3030 = vmatprep.subr.mxu0 0.0
        %3031 = vmatpush1.msra.mxu0 %v2999
        %3032 = vmatprep.subr.mxu0 0.0
        %3033 = vmatpush1.msra.mxu0 %v2998
        %3034 = vmatprep.subr.mxu0 0.0
        %3035 = vmatpush1.msra.mxu0 %v2997
        %3036 = vmatprep.subr.mxu0 0.0
        %3037 = vmatpush1.msra.mxu0 %v2996
        %3038 = vmatprep.subr.mxu0 0.0
        %3039 = vmatpush1.msra.mxu0 %v2995
        %3040 = vmatprep.subr.mxu0 0.0
        %3041 = vmatpush1.msra.mxu0 %v2994
        %3042 = vmatprep.subr.mxu0 0.0
        %3043 = vmatpush1.msra.mxu0 %v2993
        %3044 = vmatprep.subr.mxu0 0.0
        %3045 = vmatpush1.msra.mxu0 %v2992
        %3046 = vmatprep.subr.mxu0 0.0
        %3047 = vmatpush1.msra.mxu0 %v2991
        %3048 = vmatprep.subr.mxu0 0.0
        %3049 = vmatpush2.msra.mxu0 0.0
        %3050 = vmatprep.subr.mxu0 0.0
        %3051 = vmatpush2.msra.mxu0 0.0
        %3052 = vmatprep.subr.mxu0 0.0
        %3053 = vmatpush2.msra.mxu0 0.0
        %3054 = vmatprep.subr.mxu0 0.0
        %3055 = vmatpush2.msra.mxu0 0.0
        %3056 = vmatprep.subr.mxu0 0.0
        %3057 = vmatpush2.msra.mxu0 0.0
        %3058 = vmatprep.subr.mxu0 0.0
        %3059 = vmatpush2.msra.mxu0 0.0
        %3060 = vmatprep.subr.mxu0 0.0
        %3061 = vmatpush2.msra.mxu0 0.0
        %3062 = vmatprep.subr.mxu0 0.0
        %3063 = vmatpush2.msra.mxu0 0.0
        %3064 = vmatprep.subr.mxu0 0.0
        %3065 = vmatpush2.msra.mxu0 0.0
        %3066 = vmatprep.subr.mxu0 0.0
        %3067 = vmatpush2.msra.mxu0 0.0
        %3068 = vmatprep.subr.mxu0 0.0
        %3069 = vmatpush2.msra.mxu0 0.0
        %3070 = vmatprep.subr.mxu0 0.0
        %3071 = vmatpush2.msra.mxu0 0.0
        %3072 = vmatprep.subr.mxu0 0.0
        %3073 = vmatpush2.msra.mxu0 0.0
        %3074 = vmatprep.subr.mxu0 0.0
        %3075 = vmatpush2.msra.mxu0 0.0
        %3076 = vmatprep.subr.mxu0 0.0
        %3077 = vmatpush2.msra.mxu0 %v3008
        %3078 = vmatprep.subr.mxu0 0.0
        %3079 = vmatpush2.msra.mxu0 %v3007
        %3080 = vmatprep.mubr.f32.mxu0 %v3014
        %3081 = vmatmul.mubr.f32.gmra.mxu0 %v2990
        %v3082 = vpop.f32.mrf.mxu0
        %v3083 = vadd.f32 %v3013, %v3082
        %v3084 = vpop.f32.mrf.mxu0
        %3085 = vdwg.mxu0
        %v3086 = vmax.f32 %v3083, 0.0
        %3087 = vst.msk [vmem:[#allocation2] sm:$0x1] %vm2861, 0.0
        %3088 = vst.msk [vmem:[#allocation2 + $0x1] sm:$0x1f] %vm2863, %v3086
        %3089 = vst.msk [vmem:[#allocation2 + $0x6] sm:$0x1] %vm2861, 0.0
        %v3090 = vld [vmem:[#allocation2] sm:$0x1f]
        %v3091 = vld [vmem:[#allocation2 + $0x2] sm:$0x1f]
        %3093 = vrot.lane.b32.xlu0 %v3086, 48
        %v3094 = vpop.permute.xlu0 %3093
        %3097 = vrot.lane.b32.xlu0 %v3091, 96
        %v3098 = vpop.permute.xlu0 %3097
        %v3100 = vsel %vm1056, %v3090, %v3094
        %v3101 = vsel %vm2058, %v3100, %v3098
        %v3102 = vld [vmem:[%s1 + $0xa70] sm:$0xff]
        %v3103 = vld [vmem:[%s1 + $0xa78] sm:$0xff]
        %v3104 = vld [vmem:[%s1 + $0xa80] sm:$0xff]
        %v3105 = vld [vmem:[%s1 + $0xa88] sm:$0xff]
        %v3106 = vld [vmem:[%s1 + $0xa90] sm:$0xff]
        %v3107 = vld [vmem:[%s1 + $0xa98] sm:$0xff]
        %v3108 = vld [vmem:[%s1 + $0xaa0] sm:$0xff]
        %v3109 = vld [vmem:[%s1 + $0xaa8] sm:$0xff]
        %v3110 = vld [vmem:[%s1 + $0xab0] sm:$0xff]
        %v3111 = vld [vmem:[%s1 + $0xab8] sm:$0xff]
        %v3112 = vld [vmem:[%s1 + $0xac0] sm:$0xff]
        %v3113 = vld [vmem:[%s1 + $0xac8] sm:$0xff]
        %v3114 = vld [vmem:[%s1 + $0xad0] sm:$0xff]
        %v3115 = vld [vmem:[%s1 + $0xad8] sm:$0xff]
        %v3116 = vld [vmem:[%s1 + $0xae0] sm:$0xff]
        %v3117 = vld [vmem:[%s1 + $0xae8] sm:$0xff]
        %v3118 = vld [vmem:[%s1 + $0xaf0] sm:$0xff]
        %v3119 = vld [vmem:[%s1 + $0xaf8] sm:$0xff]
        %v3120 = vld [vmem:[%s1 + $0xb00] sm:$0x1]
        %v3121 = vlaneseq
        %v3122 = vshrl.u32 %v3121, 7
        %v3123 = vsub.s32 0, %v3122
        %v3124 = vrot.slane %v3120, %v3123
        %v3125 = vsel %vm2901, %v3098, 0
        %3127 = vmatprep.subr.mxu0 0.0
        %3128 = vmatpush1.msra.mxu0 %v3117
        %3129 = vmatprep.subr.mxu0 0.0
        %3130 = vmatpush1.msra.mxu0 %v3116
        %3131 = vmatprep.subr.mxu0 0.0
        %3132 = vmatpush1.msra.mxu0 %v3115
        %3133 = vmatprep.subr.mxu0 0.0
        %3134 = vmatpush1.msra.mxu0 %v3114
        %3135 = vmatprep.subr.mxu0 0.0
        %3136 = vmatpush1.msra.mxu0 %v3113
        %3137 = vmatprep.subr.mxu0 0.0
        %3138 = vmatpush1.msra.mxu0 %v3112
        %3139 = vmatprep.subr.mxu0 0.0
        %3140 = vmatpush1.msra.mxu0 %v3111
        %3141 = vmatprep.subr.mxu0 0.0
        %3142 = vmatpush1.msra.mxu0 %v3110
        %3143 = vmatprep.subr.mxu0 0.0
        %3144 = vmatpush1.msra.mxu0 %v3109
        %3145 = vmatprep.subr.mxu0 0.0
        %3146 = vmatpush1.msra.mxu0 %v3108
        %3147 = vmatprep.subr.mxu0 0.0
        %3148 = vmatpush1.msra.mxu0 %v3107
        %3149 = vmatprep.subr.mxu0 0.0
        %3150 = vmatpush1.msra.mxu0 %v3106
        %3151 = vmatprep.subr.mxu0 0.0
        %3152 = vmatpush1.msra.mxu0 %v3105
        %3153 = vmatprep.subr.mxu0 0.0
        %3154 = vmatpush1.msra.mxu0 %v3104
        %3155 = vmatprep.subr.mxu0 0.0
        %3156 = vmatpush1.msra.mxu0 %v3103
        %3157 = vmatprep.subr.mxu0 0.0
        %3158 = vmatpush1.msra.mxu0 %v3102
        %3159 = vmatprep.subr.mxu0 0.0
        %3160 = vmatpush2.msra.mxu0 0.0
        %3161 = vmatprep.subr.mxu0 0.0
        %3162 = vmatpush2.msra.mxu0 0.0
        %3163 = vmatprep.subr.mxu0 0.0
        %3164 = vmatpush2.msra.mxu0 0.0
        %3165 = vmatprep.subr.mxu0 0.0
        %3166 = vmatpush2.msra.mxu0 0.0
        %3167 = vmatprep.subr.mxu0 0.0
        %3168 = vmatpush2.msra.mxu0 0.0
        %3169 = vmatprep.subr.mxu0 0.0
        %3170 = vmatpush2.msra.mxu0 0.0
        %3171 = vmatprep.subr.mxu0 0.0
        %3172 = vmatpush2.msra.mxu0 0.0
        %3173 = vmatprep.subr.mxu0 0.0
        %3174 = vmatpush2.msra.mxu0 0.0
        %3175 = vmatprep.subr.mxu0 0.0
        %3176 = vmatpush2.msra.mxu0 0.0
        %3177 = vmatprep.subr.mxu0 0.0
        %3178 = vmatpush2.msra.mxu0 0.0
        %3179 = vmatprep.subr.mxu0 0.0
        %3180 = vmatpush2.msra.mxu0 0.0
        %3181 = vmatprep.subr.mxu0 0.0
        %3182 = vmatpush2.msra.mxu0 0.0
        %3183 = vmatprep.subr.mxu0 0.0
        %3184 = vmatpush2.msra.mxu0 0.0
        %3185 = vmatprep.subr.mxu0 0.0
        %3186 = vmatpush2.msra.mxu0 0.0
        %3187 = vmatprep.subr.mxu0 0.0
        %3188 = vmatpush2.msra.mxu0 %v3119
        %3189 = vmatprep.subr.mxu0 0.0
        %3190 = vmatpush2.msra.mxu0 %v3118
        %3191 = vmatprep.mubr.f32.mxu0 %v3125
        %3192 = vmatmul.mubr.f32.gmra.mxu0 %v3101
        %v3193 = vpop.f32.mrf.mxu0
        %v3194 = vadd.f32 %v3124, %v3193
        %v3195 = vpop.f32.mrf.mxu0
        %3196 = vdwg.mxu0
        %v3197 = vadd.f32 %v3194, %v2975
        %v3198 = vmax.f32 %v3197, 0.0
        %3199 = vst.msk [vmem:[#allocation2] sm:$0x1] %vm2861, 0.0
        %3200 = vst.msk [vmem:[#allocation2 + $0x1] sm:$0x1f] %vm2863, %v3198
        %3201 = vst.msk [vmem:[#allocation2 + $0x6] sm:$0x1] %vm2861, 0.0
        %v3202 = vld [vmem:[#allocation2] sm:$0x1f]
        %v3203 = vld [vmem:[#allocation2 + $0x2] sm:$0x1f]
        %3205 = vrot.lane.b32.xlu0 %v3198, 48
        %v3206 = vpop.permute.xlu0 %3205
        %3209 = vrot.lane.b32.xlu0 %v3203, 96
        %v3210 = vpop.permute.xlu0 %3209
        %v3212 = vsel %vm1056, %v3202, %v3206
        %v3213 = vsel %vm2058, %v3212, %v3210
        %vm3214 = vcmask 39936
        %v3215 = vsel %vm3214, %v1814, 0
        %vm3217 = vcmask 1044480
        %v3219 = vsel %vm3217, %v3213, 0
        %v3221 = vsel %vm3217, %v3210, 0
        %3223 = vmatprep.subr.mxu0 0.0
        %3224 = vmatpush1.msra.mxu0 0.0
        %3225 = vmatprep.subr.mxu0 0.0
        %3226 = vmatpush1.msra.mxu0 0.0
        %3227 = vmatprep.subr.mxu0 0.0
        %3228 = vmatpush1.msra.mxu0 0.0
        %3229 = vmatprep.subr.mxu0 0.0
        %3230 = vmatpush1.msra.mxu0 0.0
        %3231 = vmatprep.subr.mxu0 0.0
        %3232 = vmatpush1.msra.mxu0 0.0
        %3233 = vmatprep.subr.mxu0 0.0
        %3234 = vmatpush1.msra.mxu0 0.0
        %3235 = vmatprep.subr.mxu0 0.0
        %3236 = vmatpush1.msra.mxu0 0.0
        %3237 = vmatprep.subr.mxu0 0.0
        %3238 = vmatpush1.msra.mxu0 0.0
        %3239 = vmatprep.subr.mxu0 0.0
        %3240 = vmatpush1.msra.mxu0 0.0
        %3241 = vmatprep.subr.mxu0 0.0
        %3242 = vmatpush1.msra.mxu0 0.0
        %3243 = vmatprep.subr.mxu0 0.0
        %3244 = vmatpush1.msra.mxu0 0.0
        %3245 = vmatprep.subr.mxu0 0.0
        %3246 = vmatpush1.msra.mxu0 0.0
        %3247 = vmatprep.subr.mxu0 0.0
        %3248 = vmatpush1.msra.mxu0 0.0
        %3249 = vmatprep.subr.mxu0 0.0
        %3250 = vmatpush1.msra.mxu0 0.0
        %3251 = vmatprep.subr.mxu0 0.0
        %3252 = vmatpush1.msra.mxu0 0.0
        %3253 = vmatprep.subr.mxu0 %v3221
        %3254 = vmatpush1.msra.mxu0 %v3219
        %3255 = vmatprep.subr.mxu0 0.0
        %3256 = vmatpush2.msra.mxu0 0.0
        %3257 = vmatprep.subr.mxu0 0.0
        %3258 = vmatpush2.msra.mxu0 0.0
        %3259 = vmatprep.subr.mxu0 0.0
        %3260 = vmatpush2.msra.mxu0 0.0
        %3261 = vmatprep.subr.mxu0 0.0
        %3262 = vmatpush2.msra.mxu0 0.0
        %3263 = vmatprep.subr.mxu0 0.0
        %3264 = vmatpush2.msra.mxu0 0.0
        %3265 = vmatprep.subr.mxu0 0.0
        %3266 = vmatpush2.msra.mxu0 0.0
        %3267 = vmatprep.subr.mxu0 0.0
        %3268 = vmatpush2.msra.mxu0 0.0
        %3269 = vmatprep.subr.mxu0 0.0
        %3270 = vmatpush2.msra.mxu0 0.0
        %3271 = vmatprep.subr.mxu0 0.0
        %3272 = vmatpush2.msra.mxu0 0.0
        %3273 = vmatprep.subr.mxu0 0.0
        %3274 = vmatpush2.msra.mxu0 0.0
        %3275 = vmatprep.subr.mxu0 0.0
        %3276 = vmatpush2.msra.mxu0 0.0
        %3277 = vmatprep.subr.mxu0 0.0
        %3278 = vmatpush2.msra.mxu0 0.0
        %3279 = vmatprep.subr.mxu0 0.0
        %3280 = vmatpush2.msra.mxu0 0.0
        %3281 = vmatprep.subr.mxu0 0.0
        %3282 = vmatpush2.msra.mxu0 0.0
        %3283 = vmatprep.subr.mxu0 0.0
        %3284 = vmatpush2.msra.mxu0 0.0
        %3285 = vmatprep.subr.mxu0 0.0
        %3286 = vmatpush2.msra.mxu0 0.0
        %3287 = vmatprep.mubr.f32.mxu0 0.0
        %3288 = vmatmul.mubr.f32.gmra.mxu0 %v3215
        %v3289 = vpop.f32.mrf.mxu0
        %v3290 = vadd.f32 0.0, %v3289
        %v3291 = vpop.f32.mrf.mxu0
        %v3292 = vadd.f32 0.0, %v3291
        %3293 = vdwg.mxu0
        %3295 = vrot.lane.b32.xlu0 %v3290, 86
        %v3296 = vpop.permute.xlu0 %3295
        %vm3298 = vcmask 48128
        %v3299 = vsel %vm3298, 0.0, %v3296
        %vm3300 = vcmask 441344
        %v3301 = vsel %vm3300, %v3299, 0.0
        %v3302 = vld [vmem:[%s1 + $0xb08] sm:$0xff]
        %v3303 = vld [vmem:[%s1 + $0xb10] sm:$0xff]
        %v3304 = vld [vmem:[%s1 + $0xb18] sm:$0xff]
        %v3305 = vld [vmem:[%s1 + $0xb20] sm:$0xff]
        %v3306 = vld [vmem:[%s1 + $0xb28] sm:$0xff]
        %v3307 = vld [vmem:[%s1 + $0xb30] sm:$0xff]
        %v3308 = vld [vmem:[%s1 + $0xb38] sm:$0xff]
        %v3309 = vld [vmem:[%s1 + $0xb40] sm:$0xff]
        %v3310 = vld [vmem:[%s1 + $0xb48] sm:$0xff]
        %v3311 = vld [vmem:[%s1 + $0xb50] sm:$0xff]
        %v3312 = vld [vmem:[%s1 + $0xb58] sm:$0xff]
        %v3313 = vld [vmem:[%s1 + $0xb60] sm:$0xff]
        %v3314 = vld [vmem:[%s1 + $0xb68] sm:$0xff]
        %v3315 = vld [vmem:[%s1 + $0xb70] sm:$0xff]
        %v3316 = vld [vmem:[%s1 + $0xb78] sm:$0xff]
        %v3317 = vld [vmem:[%s1 + $0xb80] sm:$0xff]
        %v3318 = vld [vmem:[%s1 + $0xb88] sm:$0xff]
        %v3319 = vld [vmem:[%s1 + $0xb90] sm:$0xff]
        %v3320 = vld [vmem:[%s1 + $0xb98] sm:$0x1]
        %v3321 = vlaneseq
        %v3322 = vshrl.u32 %v3321, 7
        %v3323 = vsub.s32 0, %v3322
        %v3324 = vrot.slane %v3320, %v3323
        %v3326 = vsel %vm2901, %v3292, 0
        %3328 = vmatprep.subr.mxu0 0.0
        %3329 = vmatpush1.msra.mxu0 %v3317
        %3330 = vmatprep.subr.mxu0 0.0
        %3331 = vmatpush1.msra.mxu0 %v3316
        %3332 = vmatprep.subr.mxu0 0.0
        %3333 = vmatpush1.msra.mxu0 %v3315
        %3334 = vmatprep.subr.mxu0 0.0
        %3335 = vmatpush1.msra.mxu0 %v3314
        %3336 = vmatprep.subr.mxu0 0.0
        %3337 = vmatpush1.msra.mxu0 %v3313
        %3338 = vmatprep.subr.mxu0 0.0
        %3339 = vmatpush1.msra.mxu0 %v3312
        %3340 = vmatprep.subr.mxu0 0.0
        %3341 = vmatpush1.msra.mxu0 %v3311
        %3342 = vmatprep.subr.mxu0 0.0
        %3343 = vmatpush1.msra.mxu0 %v3310
        %3344 = vmatprep.subr.mxu0 0.0
        %3345 = vmatpush1.msra.mxu0 %v3309
        %3346 = vmatprep.subr.mxu0 0.0
        %3347 = vmatpush1.msra.mxu0 %v3308
        %3348 = vmatprep.subr.mxu0 0.0
        %3349 = vmatpush1.msra.mxu0 %v3307
        %3350 = vmatprep.subr.mxu0 0.0
        %3351 = vmatpush1.msra.mxu0 %v3306
        %3352 = vmatprep.subr.mxu0 0.0
        %3353 = vmatpush1.msra.mxu0 %v3305
        %3354 = vmatprep.subr.mxu0 0.0
        %3355 = vmatpush1.msra.mxu0 %v3304
        %3356 = vmatprep.subr.mxu0 0.0
        %3357 = vmatpush1.msra.mxu0 %v3303
        %3358 = vmatprep.subr.mxu0 0.0
        %3359 = vmatpush1.msra.mxu0 %v3302
        %3360 = vmatprep.subr.mxu0 0.0
        %3361 = vmatpush2.msra.mxu0 0.0
        %3362 = vmatprep.subr.mxu0 0.0
        %3363 = vmatpush2.msra.mxu0 0.0
        %3364 = vmatprep.subr.mxu0 0.0
        %3365 = vmatpush2.msra.mxu0 0.0
        %3366 = vmatprep.subr.mxu0 0.0
        %3367 = vmatpush2.msra.mxu0 0.0
        %3368 = vmatprep.subr.mxu0 0.0
        %3369 = vmatpush2.msra.mxu0 0.0
        %3370 = vmatprep.subr.mxu0 0.0
        %3371 = vmatpush2.msra.mxu0 0.0
        %3372 = vmatprep.subr.mxu0 0.0
        %3373 = vmatpush2.msra.mxu0 0.0
        %3374 = vmatprep.subr.mxu0 0.0
        %3375 = vmatpush2.msra.mxu0 0.0
        %3376 = vmatprep.subr.mxu0 0.0
        %3377 = vmatpush2.msra.mxu0 0.0
        %3378 = vmatprep.subr.mxu0 0.0
        %3379 = vmatpush2.msra.mxu0 0.0
        %3380 = vmatprep.subr.mxu0 0.0
        %3381 = vmatpush2.msra.mxu0 0.0
        %3382 = vmatprep.subr.mxu0 0.0
        %3383 = vmatpush2.msra.mxu0 0.0
        %3384 = vmatprep.subr.mxu0 0.0
        %3385 = vmatpush2.msra.mxu0 0.0
        %3386 = vmatprep.subr.mxu0 0.0
        %3387 = vmatpush2.msra.mxu0 0.0
        %3388 = vmatprep.subr.mxu0 0.0
        %3389 = vmatpush2.msra.mxu0 %v3319
        %3390 = vmatprep.subr.mxu0 0.0
        %3391 = vmatpush2.msra.mxu0 %v3318
        %3392 = vmatprep.mubr.f32.mxu0 %v3326
        %3393 = vmatmul.mubr.f32.gmra.mxu0 %v3290
        %v3394 = vpop.f32.mrf.mxu0
        %v3395 = vadd.f32 %v3324, %v3394
        %v3396 = vpop.f32.mrf.mxu0
        %3397 = vdwg.mxu0
        %v3398 = vmax.f32 %v3395, 0.0
        %vm3399 = vcmask 483328
        %3400 = vst.msk [vmem:[#allocation2] sm:$0x1] %vm3399, 0.0
        %vm3401 = vcmask 485376
        %3402 = vst.msk [vmem:[#allocation2 + $0x1] sm:$0x7] %vm3401, %v3398
        %3403 = vst.msk [vmem:[#allocation2 + $0x4] sm:$0x1] %vm3399, 0.0
        %v3404 = vld [vmem:[#allocation2] sm:$0x7]
        %v3405 = vld [vmem:[#allocation2 + $0x2] sm:$0x7]
        %3407 = vrot.lane.b32.xlu0 %v3398, 60
        %v3408 = vpop.permute.xlu0 %3407
        %3411 = vrot.lane.b32.xlu0 %v3405, 120
        %v3412 = vpop.permute.xlu0 %3411
        %v3414 = vsel %vm919, %v3404, %v3408
        %vm3415 = vcmask 982016
        %v3416 = vsel %vm3415, %v3414, %v3412
        %v3417 = vld [vmem:[%s1 + $0xba0] sm:$0xff]
        %v3418 = vld [vmem:[%s1 + $0xba8] sm:$0xff]
        %v3419 = vld [vmem:[%s1 + $0xbb0] sm:$0xff]
        %v3420 = vld [vmem:[%s1 + $0xbb8] sm:$0xff]
        %v3421 = vld [vmem:[%s1 + $0xbc0] sm:$0xff]
        %v3422 = vld [vmem:[%s1 + $0xbc8] sm:$0xff]
        %v3423 = vld [vmem:[%s1 + $0xbd0] sm:$0xff]
        %v3424 = vld [vmem:[%s1 + $0xbd8] sm:$0xff]
        %v3425 = vld [vmem:[%s1 + $0xbe0] sm:$0xff]
        %v3426 = vld [vmem:[%s1 + $0xbe8] sm:$0xff]
        %v3427 = vld [vmem:[%s1 + $0xbf0] sm:$0xff]
        %v3428 = vld [vmem:[%s1 + $0xbf8] sm:$0xff]
        %v3429 = vld [vmem:[%s1 + $0xc00] sm:$0xff]
        %v3430 = vld [vmem:[%s1 + $0xc08] sm:$0xff]
        %v3431 = vld [vmem:[%s1 + $0xc10] sm:$0xff]
        %v3432 = vld [vmem:[%s1 + $0xc18] sm:$0xff]
        %v3433 = vld [vmem:[%s1 + $0xc20] sm:$0xff]
        %v3434 = vld [vmem:[%s1 + $0xc28] sm:$0xff]
        %v3435 = vld [vmem:[%s1 + $0xc30] sm:$0xff]
        %v3436 = vld [vmem:[%s1 + $0xc38] sm:$0xff]
        %v3437 = vld [vmem:[%s1 + $0xc40] sm:$0xff]
        %v3438 = vld [vmem:[%s1 + $0xc48] sm:$0xff]
        %v3439 = vld [vmem:[%s1 + $0xc50] sm:$0xf]
        %v3440 = vld [vmem:[%s1 + $0xc58] sm:$0x1]
        %v3441 = vlaneseq
        %v3442 = vshrl.u32 %v3441, 7
        %v3443 = vsub.s32 0, %v3442
        %v3444 = vrot.slane %v3440, %v3443
        %vm3445 = vcmask 424960
        %v3446 = vsel %vm3445, %v3412, 0
        %v3449 = vsel %vm929, %v3439, 0
        %3451 = vmatprep.subr.mxu0 0.0
        %3452 = vmatpush1.msra.mxu0 %v3432
        %3453 = vmatprep.subr.mxu0 0.0
        %3454 = vmatpush1.msra.mxu0 %v3431
        %3455 = vmatprep.subr.mxu0 0.0
        %3456 = vmatpush1.msra.mxu0 %v3430
        %3457 = vmatprep.subr.mxu0 0.0
        %3458 = vmatpush1.msra.mxu0 %v3429
        %3459 = vmatprep.subr.mxu0 0.0
        %3460 = vmatpush1.msra.mxu0 %v3428
        %3461 = vmatprep.subr.mxu0 0.0
        %3462 = vmatpush1.msra.mxu0 %v3427
        %3463 = vmatprep.subr.mxu0 0.0
        %3464 = vmatpush1.msra.mxu0 %v3426
        %3465 = vmatprep.subr.mxu0 0.0
        %3466 = vmatpush1.msra.mxu0 %v3425
        %3467 = vmatprep.subr.mxu0 0.0
        %3468 = vmatpush1.msra.mxu0 %v3424
        %3469 = vmatprep.subr.mxu0 0.0
        %3470 = vmatpush1.msra.mxu0 %v3423
        %3471 = vmatprep.subr.mxu0 0.0
        %3472 = vmatpush1.msra.mxu0 %v3422
        %3473 = vmatprep.subr.mxu0 0.0
        %3474 = vmatpush1.msra.mxu0 %v3421
        %3475 = vmatprep.subr.mxu0 0.0
        %3476 = vmatpush1.msra.mxu0 %v3420
        %3477 = vmatprep.subr.mxu0 0.0
        %3478 = vmatpush1.msra.mxu0 %v3419
        %3479 = vmatprep.subr.mxu0 0.0
        %3480 = vmatpush1.msra.mxu0 %v3418
        %3481 = vmatprep.subr.mxu0 0.0
        %3482 = vmatpush1.msra.mxu0 %v3417
        %3483 = vmatprep.subr.mxu0 0.0
        %3484 = vmatpush2.msra.mxu0 0.0
        %3485 = vmatprep.subr.mxu0 0.0
        %3486 = vmatpush2.msra.mxu0 0.0
        %3487 = vmatprep.subr.mxu0 0.0
        %3488 = vmatpush2.msra.mxu0 0.0
        %3489 = vmatprep.subr.mxu0 0.0
        %3490 = vmatpush2.msra.mxu0 0.0
        %3491 = vmatprep.subr.mxu0 0.0
        %3492 = vmatpush2.msra.mxu0 0.0
        %3493 = vmatprep.subr.mxu0 0.0
        %3494 = vmatpush2.msra.mxu0 0.0
        %3495 = vmatprep.subr.mxu0 0.0
        %3496 = vmatpush2.msra.mxu0 0.0
        %3497 = vmatprep.subr.mxu0 0.0
        %3498 = vmatpush2.msra.mxu0 0.0
        %3499 = vmatprep.subr.mxu0 0.0
        %3500 = vmatpush2.msra.mxu0 0.0
        %3501 = vmatprep.subr.mxu0 0.0
        %3502 = vmatpush2.msra.mxu0 %v3449
        %3503 = vmatprep.subr.mxu0 0.0
        %3504 = vmatpush2.msra.mxu0 %v3438
        %3505 = vmatprep.subr.mxu0 0.0
        %3506 = vmatpush2.msra.mxu0 %v3437
        %3507 = vmatprep.subr.mxu0 0.0
        %3508 = vmatpush2.msra.mxu0 %v3436
        %3509 = vmatprep.subr.mxu0 0.0
        %3510 = vmatpush2.msra.mxu0 %v3435
        %3511 = vmatprep.subr.mxu0 0.0
        %3512 = vmatpush2.msra.mxu0 %v3434
        %3513 = vmatprep.subr.mxu0 0.0
        %3514 = vmatpush2.msra.mxu0 %v3433
        %3515 = vmatprep.mubr.f32.mxu0 %v3446
        %3516 = vmatmul.mubr.f32.gmra.mxu0 %v3416
        %v3517 = vpop.f32.mrf.mxu0
        %v3518 = vadd.f32 %v3444, %v3517
        %v3519 = vpop.f32.mrf.mxu0
        %3520 = vdwg.mxu0
        %v3521 = vadd.f32 %v3518, %v3301
        %v3522 = vmax.f32 %v3521, 0.0
        %3523 = vst.msk [vmem:[#allocation2] sm:$0x1] %vm3399, 0.0
        %3524 = vst.msk [vmem:[#allocation2 + $0x1] sm:$0x7] %vm3401, %v3522
        %3525 = vst.msk [vmem:[#allocation2 + $0x4] sm:$0x1] %vm3399, 0.0
        %v3526 = vld [vmem:[#allocation2] sm:$0x7]
        %v3527 = vld [vmem:[#allocation2 + $0x2] sm:$0x7]
        %3529 = vrot.lane.b32.xlu0 %v3522, 60
        %v3530 = vpop.permute.xlu0 %3529
        %3533 = vrot.lane.b32.xlu0 %v3527, 120
        %v3534 = vpop.permute.xlu0 %3533
        %v3536 = vsel %vm919, %v3526, %v3530
        %v3537 = vsel %vm3415, %v3536, %v3534
        %v3538 = vld [vmem:[%s1 + $0xc60] sm:$0xff]
        %v3539 = vld [vmem:[%s1 + $0xc68] sm:$0xff]
        %v3540 = vld [vmem:[%s1 + $0xc70] sm:$0xff]
        %v3541 = vld [vmem:[%s1 + $0xc78] sm:$0xff]
        %v3542 = vld [vmem:[%s1 + $0xc80] sm:$0xff]
        %v3543 = vld [vmem:[%s1 + $0xc88] sm:$0xff]
        %v3544 = vld [vmem:[%s1 + $0xc90] sm:$0xff]
        %v3545 = vld [vmem:[%s1 + $0xc98] sm:$0xff]
        %v3546 = vld [vmem:[%s1 + $0xca0] sm:$0xff]
        %v3547 = vld [vmem:[%s1 + $0xca8] sm:$0xff]
        %v3548 = vld [vmem:[%s1 + $0xcb0] sm:$0xff]
        %v3549 = vld [vmem:[%s1 + $0xcb8] sm:$0xff]
        %v3550 = vld [vmem:[%s1 + $0xcc0] sm:$0xff]
        %v3551 = vld [vmem:[%s1 + $0xcc8] sm:$0xff]
        %v3552 = vld [vmem:[%s1 + $0xcd0] sm:$0xff]
        %v3553 = vld [vmem:[%s1 + $0xcd8] sm:$0xff]
        %v3554 = vld [vmem:[%s1 + $0xce0] sm:$0xff]
        %v3555 = vld [vmem:[%s1 + $0xce8] sm:$0xff]
        %v3556 = vld [vmem:[%s1 + $0xcf0] sm:$0xff]
        %v3557 = vld [vmem:[%s1 + $0xcf8] sm:$0xff]
        %v3558 = vld [vmem:[%s1 + $0xd00] sm:$0xff]
        %v3559 = vld [vmem:[%s1 + $0xd08] sm:$0xff]
        %v3560 = vld [vmem:[%s1 + $0xd10] sm:$0xf]
        %v3561 = vld [vmem:[%s1 + $0xd18] sm:$0x1]
        %v3562 = vlaneseq
        %v3563 = vshrl.u32 %v3562, 7
        %v3564 = vsub.s32 0, %v3563
        %v3565 = vrot.slane %v3561, %v3564
        %v3566 = vsel %vm3445, %v3534, 0
        %v3569 = vsel %vm929, %v3560, 0
        %3571 = vmatprep.subr.mxu0 0.0
        %3572 = vmatpush1.msra.mxu0 %v3553
        %3573 = vmatprep.subr.mxu0 0.0
        %3574 = vmatpush1.msra.mxu0 %v3552
        %3575 = vmatprep.subr.mxu0 0.0
        %3576 = vmatpush1.msra.mxu0 %v3551
        %3577 = vmatprep.subr.mxu0 0.0
        %3578 = vmatpush1.msra.mxu0 %v3550
        %3579 = vmatprep.subr.mxu0 0.0
        %3580 = vmatpush1.msra.mxu0 %v3549
        %3581 = vmatprep.subr.mxu0 0.0
        %3582 = vmatpush1.msra.mxu0 %v3548
        %3583 = vmatprep.subr.mxu0 0.0
        %3584 = vmatpush1.msra.mxu0 %v3547
        %3585 = vmatprep.subr.mxu0 0.0
        %3586 = vmatpush1.msra.mxu0 %v3546
        %3587 = vmatprep.subr.mxu0 0.0
        %3588 = vmatpush1.msra.mxu0 %v3545
        %3589 = vmatprep.subr.mxu0 0.0
        %3590 = vmatpush1.msra.mxu0 %v3544
        %3591 = vmatprep.subr.mxu0 0.0
        %3592 = vmatpush1.msra.mxu0 %v3543
        %3593 = vmatprep.subr.mxu0 0.0
        %3594 = vmatpush1.msra.mxu0 %v3542
        %3595 = vmatprep.subr.mxu0 0.0
        %3596 = vmatpush1.msra.mxu0 %v3541
        %3597 = vmatprep.subr.mxu0 0.0
        %3598 = vmatpush1.msra.mxu0 %v3540
        %3599 = vmatprep.subr.mxu0 0.0
        %3600 = vmatpush1.msra.mxu0 %v3539
        %3601 = vmatprep.subr.mxu0 0.0
        %3602 = vmatpush1.msra.mxu0 %v3538
        %3603 = vmatprep.subr.mxu0 0.0
        %3604 = vmatpush2.msra.mxu0 0.0
        %3605 = vmatprep.subr.mxu0 0.0
        %3606 = vmatpush2.msra.mxu0 0.0
        %3607 = vmatprep.subr.mxu0 0.0
        %3608 = vmatpush2.msra.mxu0 0.0
        %3609 = vmatprep.subr.mxu0 0.0
        %3610 = vmatpush2.msra.mxu0 0.0
        %3611 = vmatprep.subr.mxu0 0.0
        %3612 = vmatpush2.msra.mxu0 0.0
        %3613 = vmatprep.subr.mxu0 0.0
        %3614 = vmatpush2.msra.mxu0 0.0
        %3615 = vmatprep.subr.mxu0 0.0
        %3616 = vmatpush2.msra.mxu0 0.0
        %3617 = vmatprep.subr.mxu0 0.0
        %3618 = vmatpush2.msra.mxu0 0.0
        %3619 = vmatprep.subr.mxu0 0.0
        %3620 = vmatpush2.msra.mxu0 0.0
        %3621 = vmatprep.subr.mxu0 0.0
        %3622 = vmatpush2.msra.mxu0 %v3569
        %3623 = vmatprep.subr.mxu0 0.0
        %3624 = vmatpush2.msra.mxu0 %v3559
        %3625 = vmatprep.subr.mxu0 0.0
        %3626 = vmatpush2.msra.mxu0 %v3558
        %3627 = vmatprep.subr.mxu0 0.0
        %3628 = vmatpush2.msra.mxu0 %v3557
        %3629 = vmatprep.subr.mxu0 0.0
        %3630 = vmatpush2.msra.mxu0 %v3556
        %3631 = vmatprep.subr.mxu0 0.0
        %3632 = vmatpush2.msra.mxu0 %v3555
        %3633 = vmatprep.subr.mxu0 0.0
        %3634 = vmatpush2.msra.mxu0 %v3554
        %3635 = vmatprep.mubr.f32.mxu0 %v3566
        %3636 = vmatmul.mubr.f32.gmra.mxu0 %v3537
        %v3637 = vpop.f32.mrf.mxu0
        %v3638 = vadd.f32 %v3565, %v3637
        %v3639 = vpop.f32.mrf.mxu0
        %3640 = vdwg.mxu0
        %v3641 = vmax.f32 %v3638, 0.0
        %3642 = vst.msk [vmem:[#allocation2] sm:$0x1] %vm3399, 0.0
        %3643 = vst.msk [vmem:[#allocation2 + $0x1] sm:$0x7] %vm3401, %v3641
        %3644 = vst.msk [vmem:[#allocation2 + $0x4] sm:$0x1] %vm3399, 0.0
        %v3645 = vld [vmem:[#allocation2] sm:$0x7]
        %v3646 = vld [vmem:[#allocation2 + $0x2] sm:$0x7]
        %3648 = vrot.lane.b32.xlu0 %v3641, 60
        %v3649 = vpop.permute.xlu0 %3648
        %3652 = vrot.lane.b32.xlu0 %v3646, 120
        %v3653 = vpop.permute.xlu0 %3652
        %v3655 = vsel %vm919, %v3645, %v3649
        %v3656 = vsel %vm3415, %v3655, %v3653
        %v3657 = vld [vmem:[%s1 + $0xd20] sm:$0xff]
        %v3658 = vld [vmem:[%s1 + $0xd28] sm:$0xff]
        %v3659 = vld [vmem:[%s1 + $0xd30] sm:$0xff]
        %v3660 = vld [vmem:[%s1 + $0xd38] sm:$0xff]
        %v3661 = vld [vmem:[%s1 + $0xd40] sm:$0xff]
        %v3662 = vld [vmem:[%s1 + $0xd48] sm:$0xff]
        %v3663 = vld [vmem:[%s1 + $0xd50] sm:$0xff]
        %v3664 = vld [vmem:[%s1 + $0xd58] sm:$0xff]
        %v3665 = vld [vmem:[%s1 + $0xd60] sm:$0xff]
        %v3666 = vld [vmem:[%s1 + $0xd68] sm:$0xff]
        %v3667 = vld [vmem:[%s1 + $0xd70] sm:$0xff]
        %v3668 = vld [vmem:[%s1 + $0xd78] sm:$0xff]
        %v3669 = vld [vmem:[%s1 + $0xd80] sm:$0xff]
        %v3670 = vld [vmem:[%s1 + $0xd88] sm:$0xff]
        %v3671 = vld [vmem:[%s1 + $0xd90] sm:$0xff]
        %v3672 = vld [vmem:[%s1 + $0xd98] sm:$0xff]
        %v3673 = vld [vmem:[%s1 + $0xda0] sm:$0xff]
        %v3674 = vld [vmem:[%s1 + $0xda8] sm:$0xff]
        %v3675 = vld [vmem:[%s1 + $0xdb0] sm:$0xff]
        %v3676 = vld [vmem:[%s1 + $0xdb8] sm:$0xff]
        %v3677 = vld [vmem:[%s1 + $0xdc0] sm:$0xff]
        %v3678 = vld [vmem:[%s1 + $0xdc8] sm:$0xff]
        %v3679 = vld [vmem:[%s1 + $0xdd0] sm:$0xf]
        %v3680 = vld [vmem:[%s1 + $0xdd8] sm:$0x1]
        %v3681 = vlaneseq
        %v3682 = vshrl.u32 %v3681, 7
        %v3683 = vsub.s32 0, %v3682
        %v3684 = vrot.slane %v3680, %v3683
        %v3685 = vsel %vm3445, %v3653, 0
        %v3688 = vsel %vm929, %v3679, 0
        %3690 = vmatprep.subr.mxu0 0.0
        %3691 = vmatpush1.msra.mxu0 %v3672
        %3692 = vmatprep.subr.mxu0 0.0
        %3693 = vmatpush1.msra.mxu0 %v3671
        %3694 = vmatprep.subr.mxu0 0.0
        %3695 = vmatpush1.msra.mxu0 %v3670
        %3696 = vmatprep.subr.mxu0 0.0
        %3697 = vmatpush1.msra.mxu0 %v3669
        %3698 = vmatprep.subr.mxu0 0.0
        %3699 = vmatpush1.msra.mxu0 %v3668
        %3700 = vmatprep.subr.mxu0 0.0
        %3701 = vmatpush1.msra.mxu0 %v3667
        %3702 = vmatprep.subr.mxu0 0.0
        %3703 = vmatpush1.msra.mxu0 %v3666
        %3704 = vmatprep.subr.mxu0 0.0
        %3705 = vmatpush1.msra.mxu0 %v3665
        %3706 = vmatprep.subr.mxu0 0.0
        %3707 = vmatpush1.msra.mxu0 %v3664
        %3708 = vmatprep.subr.mxu0 0.0
        %3709 = vmatpush1.msra.mxu0 %v3663
        %3710 = vmatprep.subr.mxu0 0.0
        %3711 = vmatpush1.msra.mxu0 %v3662
        %3712 = vmatprep.subr.mxu0 0.0
        %3713 = vmatpush1.msra.mxu0 %v3661
        %3714 = vmatprep.subr.mxu0 0.0
        %3715 = vmatpush1.msra.mxu0 %v3660
        %3716 = vmatprep.subr.mxu0 0.0
        %3717 = vmatpush1.msra.mxu0 %v3659
        %3718 = vmatprep.subr.mxu0 0.0
        %3719 = vmatpush1.msra.mxu0 %v3658
        %3720 = vmatprep.subr.mxu0 0.0
        %3721 = vmatpush1.msra.mxu0 %v3657
        %3722 = vmatprep.subr.mxu0 0.0
        %3723 = vmatpush2.msra.mxu0 0.0
        %3724 = vmatprep.subr.mxu0 0.0
        %3725 = vmatpush2.msra.mxu0 0.0
        %3726 = vmatprep.subr.mxu0 0.0
        %3727 = vmatpush2.msra.mxu0 0.0
        %3728 = vmatprep.subr.mxu0 0.0
        %3729 = vmatpush2.msra.mxu0 0.0
        %3730 = vmatprep.subr.mxu0 0.0
        %3731 = vmatpush2.msra.mxu0 0.0
        %3732 = vmatprep.subr.mxu0 0.0
        %3733 = vmatpush2.msra.mxu0 0.0
        %3734 = vmatprep.subr.mxu0 0.0
        %3735 = vmatpush2.msra.mxu0 0.0
        %3736 = vmatprep.subr.mxu0 0.0
        %3737 = vmatpush2.msra.mxu0 0.0
        %3738 = vmatprep.subr.mxu0 0.0
        %3739 = vmatpush2.msra.mxu0 0.0
        %3740 = vmatprep.subr.mxu0 0.0
        %3741 = vmatpush2.msra.mxu0 %v3688
        %3742 = vmatprep.subr.mxu0 0.0
        %3743 = vmatpush2.msra.mxu0 %v3678
        %3744 = vmatprep.subr.mxu0 0.0
        %3745 = vmatpush2.msra.mxu0 %v3677
        %3746 = vmatprep.subr.mxu0 0.0
        %3747 = vmatpush2.msra.mxu0 %v3676
        %3748 = vmatprep.subr.mxu0 0.0
        %3749 = vmatpush2.msra.mxu0 %v3675
        %3750 = vmatprep.subr.mxu0 0.0
        %3751 = vmatpush2.msra.mxu0 %v3674
        %3752 = vmatprep.subr.mxu0 0.0
        %3753 = vmatpush2.msra.mxu0 %v3673
        %3754 = vmatprep.mubr.f32.mxu0 %v3685
        %3755 = vmatmul.mubr.f32.gmra.mxu0 %v3656
        %v3756 = vpop.f32.mrf.mxu0
        %v3757 = vadd.f32 %v3684, %v3756
        %v3758 = vpop.f32.mrf.mxu0
        %3759 = vdwg.mxu0
        %v3760 = vadd.f32 %v3757, %v3522
        %v3761 = vmax.f32 %v3760, 0.0
        %v3762 = vsel %vm3401, %v3761, 0.0
        %v3763 = vrot.slane %v3762, 4
        %v3764 = vadd.f32 %v3762, %v3763
        %v3765 = vrot.slane %v3764, 2
        %v3766 = vadd.f32 %v3764, %v3765
        %v3767 = vrot.slane %v3766, 1
        %v3768 = vadd.f32 %v3766, %v3767
        %v3769 = vrcp.pop 3.0
        %v3770 = vmul.f32 %v3768, %v3769
        %v3771 = vld [vmem:[%s1 + $0xde0] sm:$0xff]
        %v3772 = vld [vmem:[%s1 + $0xde8] sm:$0xff]
        %v3773 = vld [vmem:[%s1 + $0xdf0] sm:$0xff]
        %v3774 = vld [vmem:[%s1 + $0xdf8] sm:$0xff]
        %v3775 = vld [vmem:[%s1 + $0xe00] sm:$0xff]
        %v3776 = vld [vmem:[%s1 + $0xe08] sm:$0xff]
        %v3777 = vld [vmem:[%s1 + $0xe10] sm:$0xff]
        %v3778 = vld [vmem:[%s1 + $0xe18] sm:$0xf]
        %v3779 = vld [vmem:[%s1 + $0xe20] sm:$0x1]
        %v3781 = vsel %vm919, %v3770, 0
        %v3784 = vsel %vm929, %v3778, 0
        %3786 = vmatprep.subr.mxu0 0.0
        %3787 = vmatpush1.msra.mxu0 0.0
        %3788 = vmatprep.subr.mxu0 0.0
        %3789 = vmatpush1.msra.mxu0 0.0
        %3790 = vmatprep.subr.mxu0 0.0
        %3791 = vmatpush1.msra.mxu0 0.0
        %3792 = vmatprep.subr.mxu0 0.0
        %3793 = vmatpush1.msra.mxu0 0.0
        %3794 = vmatprep.subr.mxu0 0.0
        %3795 = vmatpush1.msra.mxu0 0.0
        %3796 = vmatprep.subr.mxu0 0.0
        %3797 = vmatpush1.msra.mxu0 0.0
        %3798 = vmatprep.subr.mxu0 0.0
        %3799 = vmatpush1.msra.mxu0 0.0
        %3800 = vmatprep.subr.mxu0 0.0
        %3801 = vmatpush1.msra.mxu0 0.0
        %3802 = vmatprep.subr.mxu0 0.0
        %3803 = vmatpush1.msra.mxu0 %v3784
        %3804 = vmatprep.subr.mxu0 0.0
        %3805 = vmatpush1.msra.mxu0 %v3777
        %3806 = vmatprep.subr.mxu0 0.0
        %3807 = vmatpush1.msra.mxu0 %v3776
        %3808 = vmatprep.subr.mxu0 0.0
        %3809 = vmatpush1.msra.mxu0 %v3775
        %3810 = vmatprep.subr.mxu0 0.0
        %3811 = vmatpush1.msra.mxu0 %v3774
        %3812 = vmatprep.subr.mxu0 0.0
        %3813 = vmatpush1.msra.mxu0 %v3773
        %3814 = vmatprep.subr.mxu0 0.0
        %3815 = vmatpush1.msra.mxu0 %v3772
        %3816 = vmatprep.subr.mxu0 0.0
        %3817 = vmatpush1.msra.mxu0 %v3771
        %3818 = vmatprep.subr.mxu0 0.0
        %3819 = vmatpush2.msra.mxu0 0.0
        %3820 = vmatprep.subr.mxu0 0.0
        %3821 = vmatpush2.msra.mxu0 0.0
        %3822 = vmatprep.subr.mxu0 0.0
        %3823 = vmatpush2.msra.mxu0 0.0
        %3824 = vmatprep.subr.mxu0 0.0
        %3825 = vmatpush2.msra.mxu0 0.0
        %3826 = vmatprep.subr.mxu0 0.0
        %3827 = vmatpush2.msra.mxu0 0.0
        %3828 = vmatprep.subr.mxu0 0.0
        %3829 = vmatpush2.msra.mxu0 0.0
        %3830 = vmatprep.subr.mxu0 0.0
        %3831 = vmatpush2.msra.mxu0 0.0
        %3832 = vmatprep.subr.mxu0 0.0
        %3833 = vmatpush2.msra.mxu0 0.0
        %3834 = vmatprep.subr.mxu0 0.0
        %3835 = vmatpush2.msra.mxu0 0.0
        %3836 = vmatprep.subr.mxu0 0.0
        %3837 = vmatpush2.msra.mxu0 0.0
        %3838 = vmatprep.subr.mxu0 0.0
        %3839 = vmatpush2.msra.mxu0 0.0
        %3840 = vmatprep.subr.mxu0 0.0
        %3841 = vmatpush2.msra.mxu0 0.0
        %3842 = vmatprep.subr.mxu0 0.0
        %3843 = vmatpush2.msra.mxu0 0.0
        %3844 = vmatprep.subr.mxu0 0.0
        %3845 = vmatpush2.msra.mxu0 0.0
        %3846 = vmatprep.subr.mxu0 0.0
        %3847 = vmatpush2.msra.mxu0 0.0
        %3848 = vmatprep.subr.mxu0 0.0
        %3849 = vmatpush2.msra.mxu0 0.0
        %3850 = vmatprep.mubr.f32.mxu0 0.0
        %3851 = vmatmul.mubr.f32.gmra.mxu0 %v3781
        %v3852 = vpop.f32.mrf.mxu0
        %v3853 = vadd.f32 %v3779, %v3852
        %v3854 = vpop.f32.mrf.mxu0
        %3855 = vdwg.mxu0
        %v3856 = vmax.f32 %v3853, 0.0
        %v3857 = vld [vmem:[%s1 + $0xe28] sm:$0xff]
        %v3858 = vld [vmem:[%s1 + $0xe30] sm:$0xff]
        %v3859 = vld [vmem:[%s1 + $0xe38] sm:$0xff]
        %v3860 = vld [vmem:[%s1 + $0xe40] sm:$0xff]
        %v3861 = vld [vmem:[%s1 + $0xe48] sm:$0xff]
        %v3862 = vld [vmem:[%s1 + $0xe50] sm:$0xff]
        %v3863 = vld [vmem:[%s1 + $0xe58] sm:$0xff]
        %v3864 = vld [vmem:[%s1 + $0xe60] sm:$0xf]
        %v3865 = vld [vmem:[%s1 + $0xe68] sm:$0x1]
        %v3867 = vsel %vm919, %v3856, 0
        %v3870 = vsel %vm929, %v3864, 0
        %3872 = vmatprep.subr.mxu0 0.0
        %3873 = vmatpush1.msra.mxu0 0.0
        %3874 = vmatprep.subr.mxu0 0.0
        %3875 = vmatpush1.msra.mxu0 0.0
        %3876 = vmatprep.subr.mxu0 0.0
        %3877 = vmatpush1.msra.mxu0 0.0
        %3878 = vmatprep.subr.mxu0 0.0
        %3879 = vmatpush1.msra.mxu0 0.0
        %3880 = vmatprep.subr.mxu0 0.0
        %3881 = vmatpush1.msra.mxu0 0.0
        %3882 = vmatprep.subr.mxu0 0.0
        %3883 = vmatpush1.msra.mxu0 0.0
        %3884 = vmatprep.subr.mxu0 0.0
        %3885 = vmatpush1.msra.mxu0 0.0
        %3886 = vmatprep.subr.mxu0 0.0
        %3887 = vmatpush1.msra.mxu0 0.0
        %3888 = vmatprep.subr.mxu0 0.0
        %3889 = vmatpush1.msra.mxu0 %v3870
        %3890 = vmatprep.subr.mxu0 0.0
        %3891 = vmatpush1.msra.mxu0 %v3863
        %3892 = vmatprep.subr.mxu0 0.0
        %3893 = vmatpush1.msra.mxu0 %v3862
        %3894 = vmatprep.subr.mxu0 0.0
        %3895 = vmatpush1.msra.mxu0 %v3861
        %3896 = vmatprep.subr.mxu0 0.0
        %3897 = vmatpush1.msra.mxu0 %v3860
        %3898 = vmatprep.subr.mxu0 0.0
        %3899 = vmatpush1.msra.mxu0 %v3859
        %3900 = vmatprep.subr.mxu0 0.0
        %3901 = vmatpush1.msra.mxu0 %v3858
        %3902 = vmatprep.subr.mxu0 0.0
        %3903 = vmatpush1.msra.mxu0 %v3857
        %3904 = vmatprep.subr.mxu0 0.0
        %3905 = vmatpush2.msra.mxu0 0.0
        %3906 = vmatprep.subr.mxu0 0.0
        %3907 = vmatpush2.msra.mxu0 0.0
        %3908 = vmatprep.subr.mxu0 0.0
        %3909 = vmatpush2.msra.mxu0 0.0
        %3910 = vmatprep.subr.mxu0 0.0
        %3911 = vmatpush2.msra.mxu0 0.0
        %3912 = vmatprep.subr.mxu0 0.0
        %3913 = vmatpush2.msra.mxu0 0.0
        %3914 = vmatprep.subr.mxu0 0.0
        %3915 = vmatpush2.msra.mxu0 0.0
        %3916 = vmatprep.subr.mxu0 0.0
        %3917 = vmatpush2.msra.mxu0 0.0
        %3918 = vmatprep.subr.mxu0 0.0
        %3919 = vmatpush2.msra.mxu0 0.0
        %3920 = vmatprep.subr.mxu0 0.0
        %3921 = vmatpush2.msra.mxu0 0.0
        %3922 = vmatprep.subr.mxu0 0.0
        %3923 = vmatpush2.msra.mxu0 0.0
        %3924 = vmatprep.subr.mxu0 0.0
        %3925 = vmatpush2.msra.mxu0 0.0
        %3926 = vmatprep.subr.mxu0 0.0
        %3927 = vmatpush2.msra.mxu0 0.0
        %3928 = vmatprep.subr.mxu0 0.0
        %3929 = vmatpush2.msra.mxu0 0.0
        %3930 = vmatprep.subr.mxu0 0.0
        %3931 = vmatpush2.msra.mxu0 0.0
        %3932 = vmatprep.subr.mxu0 0.0
        %3933 = vmatpush2.msra.mxu0 0.0
        %3934 = vmatprep.subr.mxu0 0.0
        %3935 = vmatpush2.msra.mxu0 0.0
        %3936 = vmatprep.mubr.f32.mxu0 0.0
        %3937 = vmatmul.mubr.f32.gmra.mxu0 %v3867
        %v3938 = vpop.f32.mrf.mxu0
        %v3939 = vadd.f32 %v3865, %v3938
        %v3940 = vpop.f32.mrf.mxu0
        %3941 = vdwg.mxu0
        %vm3942 = vcmask 8192
        %v3943 = vsel %vm3942, %v3939, -inf
        %3944 = vmax.xlane.f32.xlu0 %v3943
        %v3945 = vpop.xlane.xlu0 %3944
        %v3946 = vsub.f32 %v3939, %v3945
        %v3947 = vmul.f32 %v3946, 1.442695
        %v3948 = vpow.pop %v3947
        %v3949 = vsel %vm3942, %v3948, 0.0
        %3950 = vadd.xlane.f32.xlu0 %v3949
        %v3951 = vpop.xlane.xlu0 %3950
        %v3952 = vrcp.pop %v3951
        %v3953 = vmul.f32 %v3948, %v3952
        %3954 = vst.msk [vmem:[%s135] sm:$0x1] %vm3942, %v3953
        %s3955 = sand.u32 %s71, 1
        %s3956 = scalar_lea.sflag [#allocation4], %s3955
        %s3957 = sand.u32 %s71, 1
        %s3958 = scalar_lea.vmem [#allocation3], %s3957
        // Predicated region
        $region29: #{forward.1} parent=27 // pred_check
          %p3959 = pneg %p81
        $region30: #{forward.1} parent=27 // pred_check_branch
          %3961 = sbr.rel (%p3959) target = $region32
        $region31: #{forward.1} parent=27 // pred_region
          %s3963 = ssub.s32 16, 16
          %3964 = vsyncadd %s3956, %s3963
          %s3965 = smul.addr %s16, 16
          %s3966 = scalar_lea.hbm %s2, %s3965
          %s3968 = sshll.u32 %s3958, 4
          %s3969 = int_to_ptr.vmem [resolvable:$true] %s3968
          %3971 = dma.vmem_to_hbm [thread:$0]  %s3969, 16, %s3966, %s3956
        $region32: #{forward.1} parent=27 // pred_fallthru
          _
      $region28: #{forward.1} parent=5 // pred_fallthru
        _
      %p3972 = scmp.le.s32.totalorder 2, %s11
      // Predicated region
      $region33: #{forward.1} parent=5 // pred_check
        %p3973 = pneg %p3972
      $region34: #{forward.1} parent=5 // pred_check_branch
        %3975 = sbr.rel (%p3973) target = $region36
      $region35: #{forward.1} parent=5 // pred_region
        %s3976 = ssub.s32 %s11, 2
        // Predicated region
        $region37: #{forward.1} parent=35 // pred_check
          %p3977 = pneg %p87
        $region38: #{forward.1} parent=35 // pred_check_branch
          %3979 = sbr.rel (%p3977) target = $region40
        $region39: #{forward.1} parent=35 // pred_region
          %s3980 = sand.u32 %s72, 1
          %s3981 = scalar_lea.sflag [#allocation4], %s3980
          %s3982 = sand.u32 %s72, 1
          %s3983 = scalar_lea.vmem [#allocation3], %s3982
          %3984 = dma.done %s3981, 16
        $region40: #{forward.1} parent=35 // pred_fallthru
          _
      $region36: #{forward.1} parent=5 // pred_fallthru
        _
    $region6: #{forward.1} parent=1 // loop_footer
      %s15 = sadd.s32 1, %s11
    $region7: #{forward.1} parent=1 // loop_footer_branch
      %10 = sbr.rel target = $region3
    $region8: #{forward.1} parent=1 // loop_exit
      _
    %3985 = vsyncpa [#allocation4], 1
    %s3986 = scalar_lea.sflag [#allocation4], 1
    %3987 = vsyncpa %s3986, 1

</llo_original>
